<compile_context>
chip_gen: v7x
topology: tpu7x:2x2x1
jax: 0.10.0
libtpu: 0.0.40
codegen_flags: <defaults>
</compile_context>

<pallas_src>
import jax
import jax.numpy as jnp
from jax.experimental import pallas as pl
from jax.experimental.pallas import tpu as pltpu


def _conv1x1_kernel(w_ref, x_ref, o_ref):
    # Single-shot full-K matmul: Out[Cout, HW] = W[Cout, Cin] @ X[Cin, HW].
    o_ref[...] = jnp.dot(
        w_ref[...], x_ref[...], preferred_element_type=jnp.float32
    ).astype(o_ref.dtype)


def conv1x1_pallas(x_nchw: jax.Array, weight_oi11: jax.Array) -> jax.Array:
    """1x1 conv, stride 1, no bias.

    x_nchw:      (N, Cin, H, W)
    weight_oi11: (Cout, Cin, 1, 1)   (PyTorch Conv2d weight layout)
    returns:     (N, Cout, H, W)
    """
    n, cin, h, w = x_nchw.shape
    cout = weight_oi11.shape[0]
    assert weight_oi11.shape == (cout, cin, 1, 1)
    hw = h * w

    # Free reshapes only (no transpose, no pad): channels stay the contraction
    # dim, spatial positions stay the output lane dim.
    x_cm = x_nchw.reshape(n, cin, hw)        # (N, Cin, H*W)
    w_mat = weight_oi11.reshape(cout, cin)   # (Cout, Cin)

    itemsize = jnp.dtype(x_nchw.dtype).itemsize
    flops = 2 * n * hw * cin * cout
    bytes_accessed = (x_cm.size + w_mat.size + n * cout * hw) * itemsize

    out = pl.pallas_call(
        _conv1x1_kernel,
        out_shape=jax.ShapeDtypeStruct((n, cout, hw), x_nchw.dtype),
        grid_spec=pltpu.PrefetchScalarGridSpec(
            num_scalar_prefetch=0,
            grid=(n,),  # one step per image; N=1 here -> single invocation
            in_specs=[
                # Weight: whole matrix resident, same block every step.
                pl.BlockSpec((cout, cin), lambda b: (0, 0)),
                # Activations: one image (Cin, HW) per step; batch dim squeezed.
                pl.BlockSpec((None, cin, hw), lambda b: (b, 0, 0)),
            ],
            out_specs=pl.BlockSpec((None, cout, hw), lambda b: (b, 0, 0)),
        ),
        compiler_params=pltpu.CompilerParams(
            dimension_semantics=("parallel",),
        ),
        cost_estimate=pl.CostEstimate(
            flops=flops, transcendentals=0, bytes_accessed=bytes_accessed
        ),
    )(w_mat, x_cm)

    # (N, Cout, H*W) -> (N, Cout, H, W): free reshape, no transpose.
    return out.reshape(n, cout, h, w)


if __name__ == "__main__":
    key = jax.random.PRNGKey(0)
    kx, kw = jax.random.split(key)

    # Shapes implied by the module's forward: x827 = randn([1, 2304, 7, 7]),
    # weight = Conv2d(2304, 384, 1, bias=False).weight of shape (384, 2304, 1, 1).
    x = jax.random.normal(kx, (1, 2304, 7, 7), dtype=jnp.float32)
    fan_in = 2304 * 1 * 1
    bound = 1.0 / (fan_in ** 0.5)
    weight = jax.random.uniform(
        kw, (384, 2304, 1, 1), dtype=jnp.float32, minval=-bound, maxval=bound
    )

    out = conv1x1_pallas(x, weight)
    out = jax.block_until_ready(out)

    # Reference check against plain JAX (same math as Conv2d 1x1, no bias).
    ref = jnp.einsum(
        "nchw,oc->nohw",
        x,
        weight.reshape(384, 2304),
        precision=jax.lax.Precision.HIGHEST,
    )
    assert out.shape == (1, 384, 7, 7)
    assert jnp.allclose(out, ref, atol=1e-4, rtol=1e-4)

    print("KERNEL_OK")
</pallas_src>

<mosaic_0001>
module attributes {stable_mosaic.version = 11 : i64} {
  func.func @_conv1x1_kernel(%arg0: i32, %arg1: memref<384x2304xf32, #tpu.memory_space<vmem>>, %arg2: memref<1x2304x49xf32, #tpu.memory_space<vmem>>, %arg3: memref<1x384x49xf32, #tpu.memory_space<vmem>>) attributes {dimension_semantics = [#tpu.dimension_semantics<parallel>], iteration_bounds = array<i64: 1>, scalar_prefetch = 0 : i64, scratch_operands = 0 : i64, tpu.core_type = #tpu.core_type<tc>, window_params = [{pipeline_mode = #tpu.pipeline_mode<synchronous>, transform_indices = @transform_0, window_bounds = array<i64: 384, 2304>}, {transform_indices = @transform_1, window_bounds = array<i64: 1, 2304, 49>}, {transform_indices = @transform_2, window_bounds = array<i64: 1, 384, 49>}]} {
    %c0 = arith.constant 0 : index
    %c0_0 = arith.constant 0 : index
    %0 = vector.load %arg1[%c0, %c0_0] : memref<384x2304xf32, #tpu.memory_space<vmem>>, vector<384x2304xf32>
    %c0_1 = arith.constant 0 : index
    %c0_2 = arith.constant 0 : index
    %c0_3 = arith.constant 0 : index
    %1 = vector.load %arg2[%c0_1, %c0_2, %c0_3] : memref<1x2304x49xf32, #tpu.memory_space<vmem>>, vector<1x2304x49xf32>
    %2 = vector.shape_cast %1 : vector<1x2304x49xf32> to vector<2304x49xf32>
    %cst = arith.constant dense<0.000000e+00> : vector<384x49xf32>
    %3 = tpu.matmul %0, %2, %cst {dimension_numbers = #tpu.dot_dimension_numbers<[1], [0], [0], [1], [0, 0, 1, 1], [], []>} : vector<384x2304xf32>, vector<2304x49xf32>, vector<384x49xf32> -> vector<384x49xf32>
    %c0_4 = arith.constant 0 : index
    %c0_5 = arith.constant 0 : index
    %c0_6 = arith.constant 0 : index
    %4 = vector.load %arg3[%c0_4, %c0_5, %c0_6] : memref<1x384x49xf32, #tpu.memory_space<vmem>>, vector<1x384x49xf32>
    %5 = vector.shape_cast %4 : vector<1x384x49xf32> to vector<384x49xf32>
    %6 = vector.shape_cast %3 : vector<384x49xf32> to vector<1x384x49xf32>
    tpu.vector_store %arg3[%c0_4, %c0_5, %c0_6], %6 {strides = array<i32>} : memref<1x384x49xf32, #tpu.memory_space<vmem>>, vector<1x384x49xf32>,
    return
  }
  func.func @transform_0(%arg0: i32) -> (i32, i32) {
    %c0_i32 = arith.constant 0 : i32
    %c0_i32_0 = arith.constant 0 : i32
    %c0_i32_1 = arith.constant 0 : i32
    return %c0_i32, %c0_i32_0 : i32, i32
  }
  func.func @transform_1(%arg0: i32) -> (i32, i32, i32) {
    %c0_i32 = arith.constant 0 : i32
    %c0_i32_0 = arith.constant 0 : i32
    %c0_i32_1 = arith.constant 0 : i32
    return %arg0, %c0_i32, %c0_i32_0 : i32, i32, i32
  }
  func.func @transform_2(%arg0: i32) -> (i32, i32, i32) {
    %c0_i32 = arith.constant 0 : i32
    %c0_i32_0 = arith.constant 0 : i32
    %c0_i32_1 = arith.constant 0 : i32
    return %arg0, %c0_i32, %c0_i32_0 : i32, i32, i32
  }
}

</mosaic_0001>

<llo_original>
// kernel: tpu_custom_call.1
$region0: #{tpu_custom_call.1}
  #allocation0 [shape = 'u32[]', space=smem, size = 0x4, offset = 0x4, fixed_abs, tag = 'smem constant byte address 0x4 - core index']
  #allocation1 [shape = 'u32[144,128]{1,0:T(1,128)}', space=vmem, size = 0x12000, scoped, tag = 'internal scratch']
  %s0 = inlined_call_operand.hbm [shape: f32[384,2304], index: 0, kind: input, shape index: {}]
  %s1 = inlined_call_operand.vmem [shape: f32[1,2304,49], index: 1, kind: input, shape index: {}]
  %s2 = inlined_call_operand.vmem [shape: f32[1,384,49], index: 2, kind: output, shape index: {}]
  %s3 = sld [smem:[#allocation0]]
  $region22: #{tpu_custom_call.1} parent=0
    _
  %s5 = ssub.s32 1, %s3
  %s6 = scalar_select 0, %s5, %s3
  $region1: #{tpu_custom_call.1} parent=0
    #allocation2 [shape = 'u8[3538944]{0}', space=vmem, size = 0x360000, scoped, tag = 'input window, operand 0, single buffered']
    #allocation3 [shape = 's32[1]{0}', space=sflag, size = 0x4, scoped, tag = 'scoped memory for tpu_custom_call.1']
    %7 = vsyncpa [#allocation3], 0
    // Predicated region
    $region2: #{tpu_custom_call.1} parent=1 // pred_check
      _
    $region3: #{tpu_custom_call.1} parent=1 // pred_check_branch
      %9 = sbr.rel (0) target = $region5
    $region4: #{tpu_custom_call.1} parent=1 // pred_region
      %s11 = ssub.s32 110592, 110592
      %12 = vsyncadd [#allocation3], %s11
      %s13 = sshll.u32 [#allocation2], 4
      %s14 = int_to_ptr.vmem [resolvable:$true] %s13
      %19 = dma.hbm_to_vmem [thread:$0]  %s0, 110592, %s14, [#allocation3], 2304, 2304, 144
    $region5: #{tpu_custom_call.1} parent=1 // pred_fallthru
      _
    // Predicated region
    $region6: #{tpu_custom_call.1} parent=1 // pred_check
      _
    $region7: #{tpu_custom_call.1} parent=1 // pred_check_branch
      %21 = sbr.rel (0) target = $region9
    $region8: #{tpu_custom_call.1} parent=1 // pred_region
      _
    $region9: #{tpu_custom_call.1} parent=1 // pred_fallthru
      _
    // Predicated region
    $region10: #{tpu_custom_call.1} parent=1 // pred_check
      _
    $region11: #{tpu_custom_call.1} parent=1 // pred_check_branch
      %23 = sbr.rel (0) target = $region13
    $region12: #{tpu_custom_call.1} parent=1 // pred_region
      %24 = dma.done [#allocation3], 110592
    $region13: #{tpu_custom_call.1} parent=1 // pred_fallthru
      _
    %v25 = vld [vmem:[#allocation2] sm:$0xff]
    %v26 = vld [vmem:[#allocation2 + $0x8] sm:$0xff]
    %v27 = vld [vmem:[#allocation2 + $0x10] sm:$0xff]
    %v28 = vld [vmem:[#allocation2 + $0x18] sm:$0xff]
    %v29 = vld [vmem:[#allocation2 + $0x20] sm:$0xff]
    %v30 = vld [vmem:[#allocation2 + $0x28] sm:$0xff]
    %v31 = vld [vmem:[#allocation2 + $0x30] sm:$0xff]
    %v32 = vld [vmem:[#allocation2 + $0x38] sm:$0xff]
    %v33 = vld [vmem:[#allocation2 + $0x40] sm:$0xff]
    %v34 = vld [vmem:[#allocation2 + $0x48] sm:$0xff]
    %v35 = vld [vmem:[#allocation2 + $0x50] sm:$0xff]
    %v36 = vld [vmem:[#allocation2 + $0x58] sm:$0xff]
    %v37 = vld [vmem:[#allocation2 + $0x60] sm:$0xff]
    %v38 = vld [vmem:[#allocation2 + $0x68] sm:$0xff]
    %v39 = vld [vmem:[#allocation2 + $0x70] sm:$0xff]
    %v40 = vld [vmem:[#allocation2 + $0x78] sm:$0xff]
    %v41 = vld [vmem:[#allocation2 + $0x80] sm:$0xff]
    %v42 = vld [vmem:[#allocation2 + $0x88] sm:$0xff]
    %v43 = vld [vmem:[#allocation2 + $0x90] sm:$0xff]
    %v44 = vld [vmem:[#allocation2 + $0x98] sm:$0xff]
    %v45 = vld [vmem:[#allocation2 + $0xa0] sm:$0xff]
    %v46 = vld [vmem:[#allocation2 + $0xa8] sm:$0xff]
    %v47 = vld [vmem:[#allocation2 + $0xb0] sm:$0xff]
    %v48 = vld [vmem:[#allocation2 + $0xb8] sm:$0xff]
    %v49 = vld [vmem:[#allocation2 + $0xc0] sm:$0xff]
    %v50 = vld [vmem:[#allocation2 + $0xc8] sm:$0xff]
    %v51 = vld [vmem:[#allocation2 + $0xd0] sm:$0xff]
    %v52 = vld [vmem:[#allocation2 + $0xd8] sm:$0xff]
    %v53 = vld [vmem:[#allocation2 + $0xe0] sm:$0xff]
    %v54 = vld [vmem:[#allocation2 + $0xe8] sm:$0xff]
    %v55 = vld [vmem:[#allocation2 + $0xf0] sm:$0xff]
    %v56 = vld [vmem:[#allocation2 + $0xf8] sm:$0xff]
    %v57 = vld [vmem:[#allocation2 + $0x100] sm:$0xff]
    %v58 = vld [vmem:[#allocation2 + $0x108] sm:$0xff]
    %v59 = vld [vmem:[#allocation2 + $0x110] sm:$0xff]
    %v60 = vld [vmem:[#allocation2 + $0x118] sm:$0xff]
    %v61 = vld [vmem:[#allocation2 + $0x120] sm:$0xff]
    %v62 = vld [vmem:[#allocation2 + $0x128] sm:$0xff]
    %v63 = vld [vmem:[#allocation2 + $0x130] sm:$0xff]
    %v64 = vld [vmem:[#allocation2 + $0x138] sm:$0xff]
    %v65 = vld [vmem:[#allocation2 + $0x140] sm:$0xff]
    %v66 = vld [vmem:[#allocation2 + $0x148] sm:$0xff]
    %v67 = vld [vmem:[#allocation2 + $0x150] sm:$0xff]
    %v68 = vld [vmem:[#allocation2 + $0x158] sm:$0xff]
    %v69 = vld [vmem:[#allocation2 + $0x160] sm:$0xff]
    %v70 = vld [vmem:[#allocation2 + $0x168] sm:$0xff]
    %v71 = vld [vmem:[#allocation2 + $0x170] sm:$0xff]
    %v72 = vld [vmem:[#allocation2 + $0x178] sm:$0xff]
    %v73 = vld [vmem:[#allocation2 + $0x180] sm:$0xff]
    %v74 = vld [vmem:[#allocation2 + $0x188] sm:$0xff]
    %v75 = vld [vmem:[#allocation2 + $0x190] sm:$0xff]
    %v76 = vld [vmem:[#allocation2 + $0x198] sm:$0xff]
    %v77 = vld [vmem:[#allocation2 + $0x1a0] sm:$0xff]
    %v78 = vld [vmem:[#allocation2 + $0x1a8] sm:$0xff]
    %v79 = vld [vmem:[#allocation2 + $0x1b0] sm:$0xff]
    %v80 = vld [vmem:[#allocation2 + $0x1b8] sm:$0xff]
    %v81 = vld [vmem:[#allocation2 + $0x1c0] sm:$0xff]
    %v82 = vld [vmem:[#allocation2 + $0x1c8] sm:$0xff]
    %v83 = vld [vmem:[#allocation2 + $0x1d0] sm:$0xff]
    %v84 = vld [vmem:[#allocation2 + $0x1d8] sm:$0xff]
    %v85 = vld [vmem:[#allocation2 + $0x1e0] sm:$0xff]
    %v86 = vld [vmem:[#allocation2 + $0x1e8] sm:$0xff]
    %v87 = vld [vmem:[#allocation2 + $0x1f0] sm:$0xff]
    %v88 = vld [vmem:[#allocation2 + $0x1f8] sm:$0xff]
    %v89 = vld [vmem:[#allocation2 + $0x200] sm:$0xff]
    %v90 = vld [vmem:[#allocation2 + $0x208] sm:$0xff]
    %v91 = vld [vmem:[#allocation2 + $0x210] sm:$0xff]
    %v92 = vld [vmem:[#allocation2 + $0x218] sm:$0xff]
    %v93 = vld [vmem:[#allocation2 + $0x220] sm:$0xff]
    %v94 = vld [vmem:[#allocation2 + $0x228] sm:$0xff]
    %v95 = vld [vmem:[#allocation2 + $0x230] sm:$0xff]
    %v96 = vld [vmem:[#allocation2 + $0x238] sm:$0xff]
    %v97 = vld [vmem:[#allocation2 + $0x240] sm:$0xff]
    %v98 = vld [vmem:[#allocation2 + $0x248] sm:$0xff]
    %v99 = vld [vmem:[#allocation2 + $0x250] sm:$0xff]
    %v100 = vld [vmem:[#allocation2 + $0x258] sm:$0xff]
    %v101 = vld [vmem:[#allocation2 + $0x260] sm:$0xff]
    %v102 = vld [vmem:[#allocation2 + $0x268] sm:$0xff]
    %v103 = vld [vmem:[#allocation2 + $0x270] sm:$0xff]
    %v104 = vld [vmem:[#allocation2 + $0x278] sm:$0xff]
    %v105 = vld [vmem:[#allocation2 + $0x280] sm:$0xff]
    %v106 = vld [vmem:[#allocation2 + $0x288] sm:$0xff]
    %v107 = vld [vmem:[#allocation2 + $0x290] sm:$0xff]
    %v108 = vld [vmem:[#allocation2 + $0x298] sm:$0xff]
    %v109 = vld [vmem:[#allocation2 + $0x2a0] sm:$0xff]
    %v110 = vld [vmem:[#allocation2 + $0x2a8] sm:$0xff]
    %v111 = vld [vmem:[#allocation2 + $0x2b0] sm:$0xff]
    %v112 = vld [vmem:[#allocation2 + $0x2b8] sm:$0xff]
    %v113 = vld [vmem:[#allocation2 + $0x2c0] sm:$0xff]
    %v114 = vld [vmem:[#allocation2 + $0x2c8] sm:$0xff]
    %v115 = vld [vmem:[#allocation2 + $0x2d0] sm:$0xff]
    %v116 = vld [vmem:[#allocation2 + $0x2d8] sm:$0xff]
    %v117 = vld [vmem:[#allocation2 + $0x2e0] sm:$0xff]
    %v118 = vld [vmem:[#allocation2 + $0x2e8] sm:$0xff]
    %v119 = vld [vmem:[#allocation2 + $0x2f0] sm:$0xff]
    %v120 = vld [vmem:[#allocation2 + $0x2f8] sm:$0xff]
    %v121 = vld [vmem:[#allocation2 + $0x300] sm:$0xff]
    %v122 = vld [vmem:[#allocation2 + $0x308] sm:$0xff]
    %v123 = vld [vmem:[#allocation2 + $0x310] sm:$0xff]
    %v124 = vld [vmem:[#allocation2 + $0x318] sm:$0xff]
    %v125 = vld [vmem:[#allocation2 + $0x320] sm:$0xff]
    %v126 = vld [vmem:[#allocation2 + $0x328] sm:$0xff]
    %v127 = vld [vmem:[#allocation2 + $0x330] sm:$0xff]
    %v128 = vld [vmem:[#allocation2 + $0x338] sm:$0xff]
    %v129 = vld [vmem:[#allocation2 + $0x340] sm:$0xff]
    %v130 = vld [vmem:[#allocation2 + $0x348] sm:$0xff]
    %v131 = vld [vmem:[#allocation2 + $0x350] sm:$0xff]
    %v132 = vld [vmem:[#allocation2 + $0x358] sm:$0xff]
    %v133 = vld [vmem:[#allocation2 + $0x360] sm:$0xff]
    %v134 = vld [vmem:[#allocation2 + $0x368] sm:$0xff]
    %v135 = vld [vmem:[#allocation2 + $0x370] sm:$0xff]
    %v136 = vld [vmem:[#allocation2 + $0x378] sm:$0xff]
    %v137 = vld [vmem:[#allocation2 + $0x380] sm:$0xff]
    %v138 = vld [vmem:[#allocation2 + $0x388] sm:$0xff]
    %v139 = vld [vmem:[#allocation2 + $0x390] sm:$0xff]
    %v140 = vld [vmem:[#allocation2 + $0x398] sm:$0xff]
    %v141 = vld [vmem:[#allocation2 + $0x3a0] sm:$0xff]
    %v142 = vld [vmem:[#allocation2 + $0x3a8] sm:$0xff]
    %v143 = vld [vmem:[#allocation2 + $0x3b0] sm:$0xff]
    %v144 = vld [vmem:[#allocation2 + $0x3b8] sm:$0xff]
    %v145 = vld [vmem:[#allocation2 + $0x3c0] sm:$0xff]
    %v146 = vld [vmem:[#allocation2 + $0x3c8] sm:$0xff]
    %v147 = vld [vmem:[#allocation2 + $0x3d0] sm:$0xff]
    %v148 = vld [vmem:[#allocation2 + $0x3d8] sm:$0xff]
    %v149 = vld [vmem:[#allocation2 + $0x3e0] sm:$0xff]
    %v150 = vld [vmem:[#allocation2 + $0x3e8] sm:$0xff]
    %v151 = vld [vmem:[#allocation2 + $0x3f0] sm:$0xff]
    %v152 = vld [vmem:[#allocation2 + $0x3f8] sm:$0xff]
    %v153 = vld [vmem:[#allocation2 + $0x400] sm:$0xff]
    %v154 = vld [vmem:[#allocation2 + $0x408] sm:$0xff]
    %v155 = vld [vmem:[#allocation2 + $0x410] sm:$0xff]
    %v156 = vld [vmem:[#allocation2 + $0x418] sm:$0xff]
    %v157 = vld [vmem:[#allocation2 + $0x420] sm:$0xff]
    %v158 = vld [vmem:[#allocation2 + $0x428] sm:$0xff]
    %v159 = vld [vmem:[#allocation2 + $0x430] sm:$0xff]
    %v160 = vld [vmem:[#allocation2 + $0x438] sm:$0xff]
    %v161 = vld [vmem:[#allocation2 + $0x440] sm:$0xff]
    %v162 = vld [vmem:[#allocation2 + $0x448] sm:$0xff]
    %v163 = vld [vmem:[#allocation2 + $0x450] sm:$0xff]
    %v164 = vld [vmem:[#allocation2 + $0x458] sm:$0xff]
    %v165 = vld [vmem:[#allocation2 + $0x460] sm:$0xff]
    %v166 = vld [vmem:[#allocation2 + $0x468] sm:$0xff]
    %v167 = vld [vmem:[#allocation2 + $0x470] sm:$0xff]
    %v168 = vld [vmem:[#allocation2 + $0x478] sm:$0xff]
    %v169 = vld [vmem:[#allocation2 + $0x480] sm:$0xff]
    %v170 = vld [vmem:[#allocation2 + $0x488] sm:$0xff]
    %v171 = vld [vmem:[#allocation2 + $0x490] sm:$0xff]
    %v172 = vld [vmem:[#allocation2 + $0x498] sm:$0xff]
    %v173 = vld [vmem:[#allocation2 + $0x4a0] sm:$0xff]
    %v174 = vld [vmem:[#allocation2 + $0x4a8] sm:$0xff]
    %v175 = vld [vmem:[#allocation2 + $0x4b0] sm:$0xff]
    %v176 = vld [vmem:[#allocation2 + $0x4b8] sm:$0xff]
    %v177 = vld [vmem:[#allocation2 + $0x4c0] sm:$0xff]
    %v178 = vld [vmem:[#allocation2 + $0x4c8] sm:$0xff]
    %v179 = vld [vmem:[#allocation2 + $0x4d0] sm:$0xff]
    %v180 = vld [vmem:[#allocation2 + $0x4d8] sm:$0xff]
    %v181 = vld [vmem:[#allocation2 + $0x4e0] sm:$0xff]
    %v182 = vld [vmem:[#allocation2 + $0x4e8] sm:$0xff]
    %v183 = vld [vmem:[#allocation2 + $0x4f0] sm:$0xff]
    %v184 = vld [vmem:[#allocation2 + $0x4f8] sm:$0xff]
    %v185 = vld [vmem:[#allocation2 + $0x500] sm:$0xff]
    %v186 = vld [vmem:[#allocation2 + $0x508] sm:$0xff]
    %v187 = vld [vmem:[#allocation2 + $0x510] sm:$0xff]
    %v188 = vld [vmem:[#allocation2 + $0x518] sm:$0xff]
    %v189 = vld [vmem:[#allocation2 + $0x520] sm:$0xff]
    %v190 = vld [vmem:[#allocation2 + $0x528] sm:$0xff]
    %v191 = vld [vmem:[#allocation2 + $0x530] sm:$0xff]
    %v192 = vld [vmem:[#allocation2 + $0x538] sm:$0xff]
    %v193 = vld [vmem:[#allocation2 + $0x540] sm:$0xff]
    %v194 = vld [vmem:[#allocation2 + $0x548] sm:$0xff]
    %v195 = vld [vmem:[#allocation2 + $0x550] sm:$0xff]
    %v196 = vld [vmem:[#allocation2 + $0x558] sm:$0xff]
    %v197 = vld [vmem:[#allocation2 + $0x560] sm:$0xff]
    %v198 = vld [vmem:[#allocation2 + $0x568] sm:$0xff]
    %v199 = vld [vmem:[#allocation2 + $0x570] sm:$0xff]
    %v200 = vld [vmem:[#allocation2 + $0x578] sm:$0xff]
    %v201 = vld [vmem:[#allocation2 + $0x580] sm:$0xff]
    %v202 = vld [vmem:[#allocation2 + $0x588] sm:$0xff]
    %v203 = vld [vmem:[#allocation2 + $0x590] sm:$0xff]
    %v204 = vld [vmem:[#allocation2 + $0x598] sm:$0xff]
    %v205 = vld [vmem:[#allocation2 + $0x5a0] sm:$0xff]
    %v206 = vld [vmem:[#allocation2 + $0x5a8] sm:$0xff]
    %v207 = vld [vmem:[#allocation2 + $0x5b0] sm:$0xff]
    %v208 = vld [vmem:[#allocation2 + $0x5b8] sm:$0xff]
    %v209 = vld [vmem:[#allocation2 + $0x5c0] sm:$0xff]
    %v210 = vld [vmem:[#allocation2 + $0x5c8] sm:$0xff]
    %v211 = vld [vmem:[#allocation2 + $0x5d0] sm:$0xff]
    %v212 = vld [vmem:[#allocation2 + $0x5d8] sm:$0xff]
    %v213 = vld [vmem:[#allocation2 + $0x5e0] sm:$0xff]
    %v214 = vld [vmem:[#allocation2 + $0x5e8] sm:$0xff]
    %v215 = vld [vmem:[#allocation2 + $0x5f0] sm:$0xff]
    %v216 = vld [vmem:[#allocation2 + $0x5f8] sm:$0xff]
    %v217 = vld [vmem:[#allocation2 + $0x600] sm:$0xff]
    %v218 = vld [vmem:[#allocation2 + $0x608] sm:$0xff]
    %v219 = vld [vmem:[#allocation2 + $0x610] sm:$0xff]
    %v220 = vld [vmem:[#allocation2 + $0x618] sm:$0xff]
    %v221 = vld [vmem:[#allocation2 + $0x620] sm:$0xff]
    %v222 = vld [vmem:[#allocation2 + $0x628] sm:$0xff]
    %v223 = vld [vmem:[#allocation2 + $0x630] sm:$0xff]
    %v224 = vld [vmem:[#allocation2 + $0x638] sm:$0xff]
    %v225 = vld [vmem:[#allocation2 + $0x640] sm:$0xff]
    %v226 = vld [vmem:[#allocation2 + $0x648] sm:$0xff]
    %v227 = vld [vmem:[#allocation2 + $0x650] sm:$0xff]
    %v228 = vld [vmem:[#allocation2 + $0x658] sm:$0xff]
    %v229 = vld [vmem:[#allocation2 + $0x660] sm:$0xff]
    %v230 = vld [vmem:[#allocation2 + $0x668] sm:$0xff]
    %v231 = vld [vmem:[#allocation2 + $0x670] sm:$0xff]
    %v232 = vld [vmem:[#allocation2 + $0x678] sm:$0xff]
    %v233 = vld [vmem:[#allocation2 + $0x680] sm:$0xff]
    %v234 = vld [vmem:[#allocation2 + $0x688] sm:$0xff]
    %v235 = vld [vmem:[#allocation2 + $0x690] sm:$0xff]
    %v236 = vld [vmem:[#allocation2 + $0x698] sm:$0xff]
    %v237 = vld [vmem:[#allocation2 + $0x6a0] sm:$0xff]
    %v238 = vld [vmem:[#allocation2 + $0x6a8] sm:$0xff]
    %v239 = vld [vmem:[#allocation2 + $0x6b0] sm:$0xff]
    %v240 = vld [vmem:[#allocation2 + $0x6b8] sm:$0xff]
    %v241 = vld [vmem:[#allocation2 + $0x6c0] sm:$0xff]
    %v242 = vld [vmem:[#allocation2 + $0x6c8] sm:$0xff]
    %v243 = vld [vmem:[#allocation2 + $0x6d0] sm:$0xff]
    %v244 = vld [vmem:[#allocation2 + $0x6d8] sm:$0xff]
    %v245 = vld [vmem:[#allocation2 + $0x6e0] sm:$0xff]
    %v246 = vld [vmem:[#allocation2 + $0x6e8] sm:$0xff]
    %v247 = vld [vmem:[#allocation2 + $0x6f0] sm:$0xff]
    %v248 = vld [vmem:[#allocation2 + $0x6f8] sm:$0xff]
    %v249 = vld [vmem:[#allocation2 + $0x700] sm:$0xff]
    %v250 = vld [vmem:[#allocation2 + $0x708] sm:$0xff]
    %v251 = vld [vmem:[#allocation2 + $0x710] sm:$0xff]
    %v252 = vld [vmem:[#allocation2 + $0x718] sm:$0xff]
    %v253 = vld [vmem:[#allocation2 + $0x720] sm:$0xff]
    %v254 = vld [vmem:[#allocation2 + $0x728] sm:$0xff]
    %v255 = vld [vmem:[#allocation2 + $0x730] sm:$0xff]
    %v256 = vld [vmem:[#allocation2 + $0x738] sm:$0xff]
    %v257 = vld [vmem:[#allocation2 + $0x740] sm:$0xff]
    %v258 = vld [vmem:[#allocation2 + $0x748] sm:$0xff]
    %v259 = vld [vmem:[#allocation2 + $0x750] sm:$0xff]
    %v260 = vld [vmem:[#allocation2 + $0x758] sm:$0xff]
    %v261 = vld [vmem:[#allocation2 + $0x760] sm:$0xff]
    %v262 = vld [vmem:[#allocation2 + $0x768] sm:$0xff]
    %v263 = vld [vmem:[#allocation2 + $0x770] sm:$0xff]
    %v264 = vld [vmem:[#allocation2 + $0x778] sm:$0xff]
    %v265 = vld [vmem:[#allocation2 + $0x780] sm:$0xff]
    %v266 = vld [vmem:[#allocation2 + $0x788] sm:$0xff]
    %v267 = vld [vmem:[#allocation2 + $0x790] sm:$0xff]
    %v268 = vld [vmem:[#allocation2 + $0x798] sm:$0xff]
    %v269 = vld [vmem:[#allocation2 + $0x7a0] sm:$0xff]
    %v270 = vld [vmem:[#allocation2 + $0x7a8] sm:$0xff]
    %v271 = vld [vmem:[#allocation2 + $0x7b0] sm:$0xff]
    %v272 = vld [vmem:[#allocation2 + $0x7b8] sm:$0xff]
    %v273 = vld [vmem:[#allocation2 + $0x7c0] sm:$0xff]
    %v274 = vld [vmem:[#allocation2 + $0x7c8] sm:$0xff]
    %v275 = vld [vmem:[#allocation2 + $0x7d0] sm:$0xff]
    %v276 = vld [vmem:[#allocation2 + $0x7d8] sm:$0xff]
    %v277 = vld [vmem:[#allocation2 + $0x7e0] sm:$0xff]
    %v278 = vld [vmem:[#allocation2 + $0x7e8] sm:$0xff]
    %v279 = vld [vmem:[#allocation2 + $0x7f0] sm:$0xff]
    %v280 = vld [vmem:[#allocation2 + $0x7f8] sm:$0xff]
    %v281 = vld [vmem:[#allocation2 + $0x800] sm:$0xff]
    %v282 = vld [vmem:[#allocation2 + $0x808] sm:$0xff]
    %v283 = vld [vmem:[#allocation2 + $0x810] sm:$0xff]
    %v284 = vld [vmem:[#allocation2 + $0x818] sm:$0xff]
    %v285 = vld [vmem:[#allocation2 + $0x820] sm:$0xff]
    %v286 = vld [vmem:[#allocation2 + $0x828] sm:$0xff]
    %v287 = vld [vmem:[#allocation2 + $0x830] sm:$0xff]
    %v288 = vld [vmem:[#allocation2 + $0x838] sm:$0xff]
    %v289 = vld [vmem:[#allocation2 + $0x840] sm:$0xff]
    %v290 = vld [vmem:[#allocation2 + $0x848] sm:$0xff]
    %v291 = vld [vmem:[#allocation2 + $0x850] sm:$0xff]
    %v292 = vld [vmem:[#allocation2 + $0x858] sm:$0xff]
    %v293 = vld [vmem:[#allocation2 + $0x860] sm:$0xff]
    %v294 = vld [vmem:[#allocation2 + $0x868] sm:$0xff]
    %v295 = vld [vmem:[#allocation2 + $0x870] sm:$0xff]
    %v296 = vld [vmem:[#allocation2 + $0x878] sm:$0xff]
    %v297 = vld [vmem:[#allocation2 + $0x880] sm:$0xff]
    %v298 = vld [vmem:[#allocation2 + $0x888] sm:$0xff]
    %v299 = vld [vmem:[#allocation2 + $0x890] sm:$0xff]
    %v300 = vld [vmem:[#allocation2 + $0x898] sm:$0xff]
    %v301 = vld [vmem:[#allocation2 + $0x8a0] sm:$0xff]
    %v302 = vld [vmem:[#allocation2 + $0x8a8] sm:$0xff]
    %v303 = vld [vmem:[#allocation2 + $0x8b0] sm:$0xff]
    %v304 = vld [vmem:[#allocation2 + $0x8b8] sm:$0xff]
    %v305 = vld [vmem:[#allocation2 + $0x8c0] sm:$0xff]
    %v306 = vld [vmem:[#allocation2 + $0x8c8] sm:$0xff]
    %v307 = vld [vmem:[#allocation2 + $0x8d0] sm:$0xff]
    %v308 = vld [vmem:[#allocation2 + $0x8d8] sm:$0xff]
    %v309 = vld [vmem:[#allocation2 + $0x8e0] sm:$0xff]
    %v310 = vld [vmem:[#allocation2 + $0x8e8] sm:$0xff]
    %v311 = vld [vmem:[#allocation2 + $0x8f0] sm:$0xff]
    %v312 = vld [vmem:[#allocation2 + $0x8f8] sm:$0xff]
    %v313 = vld [vmem:[#allocation2 + $0x900] sm:$0xff]
    %v314 = vld [vmem:[#allocation2 + $0x908] sm:$0xff]
    %v315 = vld [vmem:[#allocation2 + $0x910] sm:$0xff]
    %v316 = vld [vmem:[#allocation2 + $0x918] sm:$0xff]
    %v317 = vld [vmem:[#allocation2 + $0x920] sm:$0xff]
    %v318 = vld [vmem:[#allocation2 + $0x928] sm:$0xff]
    %v319 = vld [vmem:[#allocation2 + $0x930] sm:$0xff]
    %v320 = vld [vmem:[#allocation2 + $0x938] sm:$0xff]
    %v321 = vld [vmem:[#allocation2 + $0x940] sm:$0xff]
    %v322 = vld [vmem:[#allocation2 + $0x948] sm:$0xff]
    %v323 = vld [vmem:[#allocation2 + $0x950] sm:$0xff]
    %v324 = vld [vmem:[#allocation2 + $0x958] sm:$0xff]
    %v325 = vld [vmem:[#allocation2 + $0x960] sm:$0xff]
    %v326 = vld [vmem:[#allocation2 + $0x968] sm:$0xff]
    %v327 = vld [vmem:[#allocation2 + $0x970] sm:$0xff]
    %v328 = vld [vmem:[#allocation2 + $0x978] sm:$0xff]
    %v329 = vld [vmem:[#allocation2 + $0x980] sm:$0xff]
    %v330 = vld [vmem:[#allocation2 + $0x988] sm:$0xff]
    %v331 = vld [vmem:[#allocation2 + $0x990] sm:$0xff]
    %v332 = vld [vmem:[#allocation2 + $0x998] sm:$0xff]
    %v333 = vld [vmem:[#allocation2 + $0x9a0] sm:$0xff]
    %v334 = vld [vmem:[#allocation2 + $0x9a8] sm:$0xff]
    %v335 = vld [vmem:[#allocation2 + $0x9b0] sm:$0xff]
    %v336 = vld [vmem:[#allocation2 + $0x9b8] sm:$0xff]
    %v337 = vld [vmem:[#allocation2 + $0x9c0] sm:$0xff]
    %v338 = vld [vmem:[#allocation2 + $0x9c8] sm:$0xff]
    %v339 = vld [vmem:[#allocation2 + $0x9d0] sm:$0xff]
    %v340 = vld [vmem:[#allocation2 + $0x9d8] sm:$0xff]
    %v341 = vld [vmem:[#allocation2 + $0x9e0] sm:$0xff]
    %v342 = vld [vmem:[#allocation2 + $0x9e8] sm:$0xff]
    %v343 = vld [vmem:[#allocation2 + $0x9f0] sm:$0xff]
    %v344 = vld [vmem:[#allocation2 + $0x9f8] sm:$0xff]
    %v345 = vld [vmem:[#allocation2 + $0xa00] sm:$0xff]
    %v346 = vld [vmem:[#allocation2 + $0xa08] sm:$0xff]
    %v347 = vld [vmem:[#allocation2 + $0xa10] sm:$0xff]
    %v348 = vld [vmem:[#allocation2 + $0xa18] sm:$0xff]
    %v349 = vld [vmem:[#allocation2 + $0xa20] sm:$0xff]
    %v350 = vld [vmem:[#allocation2 + $0xa28] sm:$0xff]
    %v351 = vld [vmem:[#allocation2 + $0xa30] sm:$0xff]
    %v352 = vld [vmem:[#allocation2 + $0xa38] sm:$0xff]
    %v353 = vld [vmem:[#allocation2 + $0xa40] sm:$0xff]
    %v354 = vld [vmem:[#allocation2 + $0xa48] sm:$0xff]
    %v355 = vld [vmem:[#allocation2 + $0xa50] sm:$0xff]
    %v356 = vld [vmem:[#allocation2 + $0xa58] sm:$0xff]
    %v357 = vld [vmem:[#allocation2 + $0xa60] sm:$0xff]
    %v358 = vld [vmem:[#allocation2 + $0xa68] sm:$0xff]
    %v359 = vld [vmem:[#allocation2 + $0xa70] sm:$0xff]
    %v360 = vld [vmem:[#allocation2 + $0xa78] sm:$0xff]
    %v361 = vld [vmem:[#allocation2 + $0xa80] sm:$0xff]
    %v362 = vld [vmem:[#allocation2 + $0xa88] sm:$0xff]
    %v363 = vld [vmem:[#allocation2 + $0xa90] sm:$0xff]
    %v364 = vld [vmem:[#allocation2 + $0xa98] sm:$0xff]
    %v365 = vld [vmem:[#allocation2 + $0xaa0] sm:$0xff]
    %v366 = vld [vmem:[#allocation2 + $0xaa8] sm:$0xff]
    %v367 = vld [vmem:[#allocation2 + $0xab0] sm:$0xff]
    %v368 = vld [vmem:[#allocation2 + $0xab8] sm:$0xff]
    %v369 = vld [vmem:[#allocation2 + $0xac0] sm:$0xff]
    %v370 = vld [vmem:[#allocation2 + $0xac8] sm:$0xff]
    %v371 = vld [vmem:[#allocation2 + $0xad0] sm:$0xff]
    %v372 = vld [vmem:[#allocation2 + $0xad8] sm:$0xff]
    %v373 = vld [vmem:[#allocation2 + $0xae0] sm:$0xff]
    %v374 = vld [vmem:[#allocation2 + $0xae8] sm:$0xff]
    %v375 = vld [vmem:[#allocation2 + $0xaf0] sm:$0xff]
    %v376 = vld [vmem:[#allocation2 + $0xaf8] sm:$0xff]
    %v377 = vld [vmem:[#allocation2 + $0xb00] sm:$0xff]
    %v378 = vld [vmem:[#allocation2 + $0xb08] sm:$0xff]
    %v379 = vld [vmem:[#allocation2 + $0xb10] sm:$0xff]
    %v380 = vld [vmem:[#allocation2 + $0xb18] sm:$0xff]
    %v381 = vld [vmem:[#allocation2 + $0xb20] sm:$0xff]
    %v382 = vld [vmem:[#allocation2 + $0xb28] sm:$0xff]
    %v383 = vld [vmem:[#allocation2 + $0xb30] sm:$0xff]
    %v384 = vld [vmem:[#allocation2 + $0xb38] sm:$0xff]
    %v385 = vld [vmem:[#allocation2 + $0xb40] sm:$0xff]
    %v386 = vld [vmem:[#allocation2 + $0xb48] sm:$0xff]
    %v387 = vld [vmem:[#allocation2 + $0xb50] sm:$0xff]
    %v388 = vld [vmem:[#allocation2 + $0xb58] sm:$0xff]
    %v389 = vld [vmem:[#allocation2 + $0xb60] sm:$0xff]
    %v390 = vld [vmem:[#allocation2 + $0xb68] sm:$0xff]
    %v391 = vld [vmem:[#allocation2 + $0xb70] sm:$0xff]
    %v392 = vld [vmem:[#allocation2 + $0xb78] sm:$0xff]
    %v393 = vld [vmem:[#allocation2 + $0xb80] sm:$0xff]
    %v394 = vld [vmem:[#allocation2 + $0xb88] sm:$0xff]
    %v395 = vld [vmem:[#allocation2 + $0xb90] sm:$0xff]
    %v396 = vld [vmem:[#allocation2 + $0xb98] sm:$0xff]
    %v397 = vld [vmem:[#allocation2 + $0xba0] sm:$0xff]
    %v398 = vld [vmem:[#allocation2 + $0xba8] sm:$0xff]
    %v399 = vld [vmem:[#allocation2 + $0xbb0] sm:$0xff]
    %v400 = vld [vmem:[#allocation2 + $0xbb8] sm:$0xff]
    %v401 = vld [vmem:[#allocation2 + $0xbc0] sm:$0xff]
    %v402 = vld [vmem:[#allocation2 + $0xbc8] sm:$0xff]
    %v403 = vld [vmem:[#allocation2 + $0xbd0] sm:$0xff]
    %v404 = vld [vmem:[#allocation2 + $0xbd8] sm:$0xff]
    %v405 = vld [vmem:[#allocation2 + $0xbe0] sm:$0xff]
    %v406 = vld [vmem:[#allocation2 + $0xbe8] sm:$0xff]
    %v407 = vld [vmem:[#allocation2 + $0xbf0] sm:$0xff]
    %v408 = vld [vmem:[#allocation2 + $0xbf8] sm:$0xff]
    %v409 = vld [vmem:[#allocation2 + $0xc00] sm:$0xff]
    %v410 = vld [vmem:[#allocation2 + $0xc08] sm:$0xff]
    %v411 = vld [vmem:[#allocation2 + $0xc10] sm:$0xff]
    %v412 = vld [vmem:[#allocation2 + $0xc18] sm:$0xff]
    %v413 = vld [vmem:[#allocation2 + $0xc20] sm:$0xff]
    %v414 = vld [vmem:[#allocation2 + $0xc28] sm:$0xff]
    %v415 = vld [vmem:[#allocation2 + $0xc30] sm:$0xff]
    %v416 = vld [vmem:[#allocation2 + $0xc38] sm:$0xff]
    %v417 = vld [vmem:[#allocation2 + $0xc40] sm:$0xff]
    %v418 = vld [vmem:[#allocation2 + $0xc48] sm:$0xff]
    %v419 = vld [vmem:[#allocation2 + $0xc50] sm:$0xff]
    %v420 = vld [vmem:[#allocation2 + $0xc58] sm:$0xff]
    %v421 = vld [vmem:[#allocation2 + $0xc60] sm:$0xff]
    %v422 = vld [vmem:[#allocation2 + $0xc68] sm:$0xff]
    %v423 = vld [vmem:[#allocation2 + $0xc70] sm:$0xff]
    %v424 = vld [vmem:[#allocation2 + $0xc78] sm:$0xff]
    %v425 = vld [vmem:[#allocation2 + $0xc80] sm:$0xff]
    %v426 = vld [vmem:[#allocation2 + $0xc88] sm:$0xff]
    %v427 = vld [vmem:[#allocation2 + $0xc90] sm:$0xff]
    %v428 = vld [vmem:[#allocation2 + $0xc98] sm:$0xff]
    %v429 = vld [vmem:[#allocation2 + $0xca0] sm:$0xff]
    %v430 = vld [vmem:[#allocation2 + $0xca8] sm:$0xff]
    %v431 = vld [vmem:[#allocation2 + $0xcb0] sm:$0xff]
    %v432 = vld [vmem:[#allocation2 + $0xcb8] sm:$0xff]
    %v433 = vld [vmem:[#allocation2 + $0xcc0] sm:$0xff]
    %v434 = vld [vmem:[#allocation2 + $0xcc8] sm:$0xff]
    %v435 = vld [vmem:[#allocation2 + $0xcd0] sm:$0xff]
    %v436 = vld [vmem:[#allocation2 + $0xcd8] sm:$0xff]
    %v437 = vld [vmem:[#allocation2 + $0xce0] sm:$0xff]
    %v438 = vld [vmem:[#allocation2 + $0xce8] sm:$0xff]
    %v439 = vld [vmem:[#allocation2 + $0xcf0] sm:$0xff]
    %v440 = vld [vmem:[#allocation2 + $0xcf8] sm:$0xff]
    %v441 = vld [vmem:[#allocation2 + $0xd00] sm:$0xff]
    %v442 = vld [vmem:[#allocation2 + $0xd08] sm:$0xff]
    %v443 = vld [vmem:[#allocation2 + $0xd10] sm:$0xff]
    %v444 = vld [vmem:[#allocation2 + $0xd18] sm:$0xff]
    %v445 = vld [vmem:[#allocation2 + $0xd20] sm:$0xff]
    %v446 = vld [vmem:[#allocation2 + $0xd28] sm:$0xff]
    %v447 = vld [vmem:[#allocation2 + $0xd30] sm:$0xff]
    %v448 = vld [vmem:[#allocation2 + $0xd38] sm:$0xff]
    %v449 = vld [vmem:[#allocation2 + $0xd40] sm:$0xff]
    %v450 = vld [vmem:[#allocation2 + $0xd48] sm:$0xff]
    %v451 = vld [vmem:[#allocation2 + $0xd50] sm:$0xff]
    %v452 = vld [vmem:[#allocation2 + $0xd58] sm:$0xff]
    %v453 = vld [vmem:[#allocation2 + $0xd60] sm:$0xff]
    %v454 = vld [vmem:[#allocation2 + $0xd68] sm:$0xff]
    %v455 = vld [vmem:[#allocation2 + $0xd70] sm:$0xff]
    %v456 = vld [vmem:[#allocation2 + $0xd78] sm:$0xff]
    %v457 = vld [vmem:[#allocation2 + $0xd80] sm:$0xff]
    %v458 = vld [vmem:[#allocation2 + $0xd88] sm:$0xff]
    %v459 = vld [vmem:[#allocation2 + $0xd90] sm:$0xff]
    %v460 = vld [vmem:[#allocation2 + $0xd98] sm:$0xff]
    %v461 = vld [vmem:[#allocation2 + $0xda0] sm:$0xff]
    %v462 = vld [vmem:[#allocation2 + $0xda8] sm:$0xff]
    %v463 = vld [vmem:[#allocation2 + $0xdb0] sm:$0xff]
    %v464 = vld [vmem:[#allocation2 + $0xdb8] sm:$0xff]
    %v465 = vld [vmem:[#allocation2 + $0xdc0] sm:$0xff]
    %v466 = vld [vmem:[#allocation2 + $0xdc8] sm:$0xff]
    %v467 = vld [vmem:[#allocation2 + $0xdd0] sm:$0xff]
    %v468 = vld [vmem:[#allocation2 + $0xdd8] sm:$0xff]
    %v469 = vld [vmem:[#allocation2 + $0xde0] sm:$0xff]
    %v470 = vld [vmem:[#allocation2 + $0xde8] sm:$0xff]
    %v471 = vld [vmem:[#allocation2 + $0xdf0] sm:$0xff]
    %v472 = vld [vmem:[#allocation2 + $0xdf8] sm:$0xff]
    %v473 = vld [vmem:[#allocation2 + $0xe00] sm:$0xff]
    %v474 = vld [vmem:[#allocation2 + $0xe08] sm:$0xff]
    %v475 = vld [vmem:[#allocation2 + $0xe10] sm:$0xff]
    %v476 = vld [vmem:[#allocation2 + $0xe18] sm:$0xff]
    %v477 = vld [vmem:[#allocation2 + $0xe20] sm:$0xff]
    %v478 = vld [vmem:[#allocation2 + $0xe28] sm:$0xff]
    %v479 = vld [vmem:[#allocation2 + $0xe30] sm:$0xff]
    %v480 = vld [vmem:[#allocation2 + $0xe38] sm:$0xff]
    %v481 = vld [vmem:[#allocation2 + $0xe40] sm:$0xff]
    %v482 = vld [vmem:[#allocation2 + $0xe48] sm:$0xff]
    %v483 = vld [vmem:[#allocation2 + $0xe50] sm:$0xff]
    %v484 = vld [vmem:[#allocation2 + $0xe58] sm:$0xff]
    %v485 = vld [vmem:[#allocation2 + $0xe60] sm:$0xff]
    %v486 = vld [vmem:[#allocation2 + $0xe68] sm:$0xff]
    %v487 = vld [vmem:[#allocation2 + $0xe70] sm:$0xff]
    %v488 = vld [vmem:[#allocation2 + $0xe78] sm:$0xff]
    %v489 = vld [vmem:[#allocation2 + $0xe80] sm:$0xff]
    %v490 = vld [vmem:[#allocation2 + $0xe88] sm:$0xff]
    %v491 = vld [vmem:[#allocation2 + $0xe90] sm:$0xff]
    %v492 = vld [vmem:[#allocation2 + $0xe98] sm:$0xff]
    %v493 = vld [vmem:[#allocation2 + $0xea0] sm:$0xff]
    %v494 = vld [vmem:[#allocation2 + $0xea8] sm:$0xff]
    %v495 = vld [vmem:[#allocation2 + $0xeb0] sm:$0xff]
    %v496 = vld [vmem:[#allocation2 + $0xeb8] sm:$0xff]
    %v497 = vld [vmem:[#allocation2 + $0xec0] sm:$0xff]
    %v498 = vld [vmem:[#allocation2 + $0xec8] sm:$0xff]
    %v499 = vld [vmem:[#allocation2 + $0xed0] sm:$0xff]
    %v500 = vld [vmem:[#allocation2 + $0xed8] sm:$0xff]
    %v501 = vld [vmem:[#allocation2 + $0xee0] sm:$0xff]
    %v502 = vld [vmem:[#allocation2 + $0xee8] sm:$0xff]
    %v503 = vld [vmem:[#allocation2 + $0xef0] sm:$0xff]
    %v504 = vld [vmem:[#allocation2 + $0xef8] sm:$0xff]
    %v505 = vld [vmem:[#allocation2 + $0xf00] sm:$0xff]
    %v506 = vld [vmem:[#allocation2 + $0xf08] sm:$0xff]
    %v507 = vld [vmem:[#allocation2 + $0xf10] sm:$0xff]
    %v508 = vld [vmem:[#allocation2 + $0xf18] sm:$0xff]
    %v509 = vld [vmem:[#allocation2 + $0xf20] sm:$0xff]
    %v510 = vld [vmem:[#allocation2 + $0xf28] sm:$0xff]
    %v511 = vld [vmem:[#allocation2 + $0xf30] sm:$0xff]
    %v512 = vld [vmem:[#allocation2 + $0xf38] sm:$0xff]
    %v513 = vld [vmem:[#allocation2 + $0xf40] sm:$0xff]
    %v514 = vld [vmem:[#allocation2 + $0xf48] sm:$0xff]
    %v515 = vld [vmem:[#allocation2 + $0xf50] sm:$0xff]
    %v516 = vld [vmem:[#allocation2 + $0xf58] sm:$0xff]
    %v517 = vld [vmem:[#allocation2 + $0xf60] sm:$0xff]
    %v518 = vld [vmem:[#allocation2 + $0xf68] sm:$0xff]
    %v519 = vld [vmem:[#allocation2 + $0xf70] sm:$0xff]
    %v520 = vld [vmem:[#allocation2 + $0xf78] sm:$0xff]
    %v521 = vld [vmem:[#allocation2 + $0xf80] sm:$0xff]
    %v522 = vld [vmem:[#allocation2 + $0xf88] sm:$0xff]
    %v523 = vld [vmem:[#allocation2 + $0xf90] sm:$0xff]
    %v524 = vld [vmem:[#allocation2 + $0xf98] sm:$0xff]
    %v525 = vld [vmem:[#allocation2 + $0xfa0] sm:$0xff]
    %v526 = vld [vmem:[#allocation2 + $0xfa8] sm:$0xff]
    %v527 = vld [vmem:[#allocation2 + $0xfb0] sm:$0xff]
    %v528 = vld [vmem:[#allocation2 + $0xfb8] sm:$0xff]
    %v529 = vld [vmem:[#allocation2 + $0xfc0] sm:$0xff]
    %v530 = vld [vmem:[#allocation2 + $0xfc8] sm:$0xff]
    %v531 = vld [vmem:[#allocation2 + $0xfd0] sm:$0xff]
    %v532 = vld [vmem:[#allocation2 + $0xfd8] sm:$0xff]
    %v533 = vld [vmem:[#allocation2 + $0xfe0] sm:$0xff]
    %v534 = vld [vmem:[#allocation2 + $0xfe8] sm:$0xff]
    %v535 = vld [vmem:[#allocation2 + $0xff0] sm:$0xff]
    %v536 = vld [vmem:[#allocation2 + $0xff8] sm:$0xff]
    %v537 = vld [vmem:[#allocation2 + $0x1000] sm:$0xff]
    %v538 = vld [vmem:[#allocation2 + $0x1008] sm:$0xff]
    %v539 = vld [vmem:[#allocation2 + $0x1010] sm:$0xff]
    %v540 = vld [vmem:[#allocation2 + $0x1018] sm:$0xff]
    %v541 = vld [vmem:[#allocation2 + $0x1020] sm:$0xff]
    %v542 = vld [vmem:[#allocation2 + $0x1028] sm:$0xff]
    %v543 = vld [vmem:[#allocation2 + $0x1030] sm:$0xff]
    %v544 = vld [vmem:[#allocation2 + $0x1038] sm:$0xff]
    %v545 = vld [vmem:[#allocation2 + $0x1040] sm:$0xff]
    %v546 = vld [vmem:[#allocation2 + $0x1048] sm:$0xff]
    %v547 = vld [vmem:[#allocation2 + $0x1050] sm:$0xff]
    %v548 = vld [vmem:[#allocation2 + $0x1058] sm:$0xff]
    %v549 = vld [vmem:[#allocation2 + $0x1060] sm:$0xff]
    %v550 = vld [vmem:[#allocation2 + $0x1068] sm:$0xff]
    %v551 = vld [vmem:[#allocation2 + $0x1070] sm:$0xff]
    %v552 = vld [vmem:[#allocation2 + $0x1078] sm:$0xff]
    %v553 = vld [vmem:[#allocation2 + $0x1080] sm:$0xff]
    %v554 = vld [vmem:[#allocation2 + $0x1088] sm:$0xff]
    %v555 = vld [vmem:[#allocation2 + $0x1090] sm:$0xff]
    %v556 = vld [vmem:[#allocation2 + $0x1098] sm:$0xff]
    %v557 = vld [vmem:[#allocation2 + $0x10a0] sm:$0xff]
    %v558 = vld [vmem:[#allocation2 + $0x10a8] sm:$0xff]
    %v559 = vld [vmem:[#allocation2 + $0x10b0] sm:$0xff]
    %v560 = vld [vmem:[#allocation2 + $0x10b8] sm:$0xff]
    %v561 = vld [vmem:[#allocation2 + $0x10c0] sm:$0xff]
    %v562 = vld [vmem:[#allocation2 + $0x10c8] sm:$0xff]
    %v563 = vld [vmem:[#allocation2 + $0x10d0] sm:$0xff]
    %v564 = vld [vmem:[#allocation2 + $0x10d8] sm:$0xff]
    %v565 = vld [vmem:[#allocation2 + $0x10e0] sm:$0xff]
    %v566 = vld [vmem:[#allocation2 + $0x10e8] sm:$0xff]
    %v567 = vld [vmem:[#allocation2 + $0x10f0] sm:$0xff]
    %v568 = vld [vmem:[#allocation2 + $0x10f8] sm:$0xff]
    %v569 = vld [vmem:[#allocation2 + $0x1100] sm:$0xff]
    %v570 = vld [vmem:[#allocation2 + $0x1108] sm:$0xff]
    %v571 = vld [vmem:[#allocation2 + $0x1110] sm:$0xff]
    %v572 = vld [vmem:[#allocation2 + $0x1118] sm:$0xff]
    %v573 = vld [vmem:[#allocation2 + $0x1120] sm:$0xff]
    %v574 = vld [vmem:[#allocation2 + $0x1128] sm:$0xff]
    %v575 = vld [vmem:[#allocation2 + $0x1130] sm:$0xff]
    %v576 = vld [vmem:[#allocation2 + $0x1138] sm:$0xff]
    %v577 = vld [vmem:[#allocation2 + $0x1140] sm:$0xff]
    %v578 = vld [vmem:[#allocation2 + $0x1148] sm:$0xff]
    %v579 = vld [vmem:[#allocation2 + $0x1150] sm:$0xff]
    %v580 = vld [vmem:[#allocation2 + $0x1158] sm:$0xff]
    %v581 = vld [vmem:[#allocation2 + $0x1160] sm:$0xff]
    %v582 = vld [vmem:[#allocation2 + $0x1168] sm:$0xff]
    %v583 = vld [vmem:[#allocation2 + $0x1170] sm:$0xff]
    %v584 = vld [vmem:[#allocation2 + $0x1178] sm:$0xff]
    %v585 = vld [vmem:[#allocation2 + $0x1180] sm:$0xff]
    %v586 = vld [vmem:[#allocation2 + $0x1188] sm:$0xff]
    %v587 = vld [vmem:[#allocation2 + $0x1190] sm:$0xff]
    %v588 = vld [vmem:[#allocation2 + $0x1198] sm:$0xff]
    %v589 = vld [vmem:[#allocation2 + $0x11a0] sm:$0xff]
    %v590 = vld [vmem:[#allocation2 + $0x11a8] sm:$0xff]
    %v591 = vld [vmem:[#allocation2 + $0x11b0] sm:$0xff]
    %v592 = vld [vmem:[#allocation2 + $0x11b8] sm:$0xff]
    %v593 = vld [vmem:[#allocation2 + $0x11c0] sm:$0xff]
    %v594 = vld [vmem:[#allocation2 + $0x11c8] sm:$0xff]
    %v595 = vld [vmem:[#allocation2 + $0x11d0] sm:$0xff]
    %v596 = vld [vmem:[#allocation2 + $0x11d8] sm:$0xff]
    %v597 = vld [vmem:[#allocation2 + $0x11e0] sm:$0xff]
    %v598 = vld [vmem:[#allocation2 + $0x11e8] sm:$0xff]
    %v599 = vld [vmem:[#allocation2 + $0x11f0] sm:$0xff]
    %v600 = vld [vmem:[#allocation2 + $0x11f8] sm:$0xff]
    %v601 = vld [vmem:[#allocation2 + $0x1200] sm:$0xff]
    %v602 = vld [vmem:[#allocation2 + $0x1208] sm:$0xff]
    %v603 = vld [vmem:[#allocation2 + $0x1210] sm:$0xff]
    %v604 = vld [vmem:[#allocation2 + $0x1218] sm:$0xff]
    %v605 = vld [vmem:[#allocation2 + $0x1220] sm:$0xff]
    %v606 = vld [vmem:[#allocation2 + $0x1228] sm:$0xff]
    %v607 = vld [vmem:[#allocation2 + $0x1230] sm:$0xff]
    %v608 = vld [vmem:[#allocation2 + $0x1238] sm:$0xff]
    %v609 = vld [vmem:[#allocation2 + $0x1240] sm:$0xff]
    %v610 = vld [vmem:[#allocation2 + $0x1248] sm:$0xff]
    %v611 = vld [vmem:[#allocation2 + $0x1250] sm:$0xff]
    %v612 = vld [vmem:[#allocation2 + $0x1258] sm:$0xff]
    %v613 = vld [vmem:[#allocation2 + $0x1260] sm:$0xff]
    %v614 = vld [vmem:[#allocation2 + $0x1268] sm:$0xff]
    %v615 = vld [vmem:[#allocation2 + $0x1270] sm:$0xff]
    %v616 = vld [vmem:[#allocation2 + $0x1278] sm:$0xff]
    %v617 = vld [vmem:[#allocation2 + $0x1280] sm:$0xff]
    %v618 = vld [vmem:[#allocation2 + $0x1288] sm:$0xff]
    %v619 = vld [vmem:[#allocation2 + $0x1290] sm:$0xff]
    %v620 = vld [vmem:[#allocation2 + $0x1298] sm:$0xff]
    %v621 = vld [vmem:[#allocation2 + $0x12a0] sm:$0xff]
    %v622 = vld [vmem:[#allocation2 + $0x12a8] sm:$0xff]
    %v623 = vld [vmem:[#allocation2 + $0x12b0] sm:$0xff]
    %v624 = vld [vmem:[#allocation2 + $0x12b8] sm:$0xff]
    %v625 = vld [vmem:[#allocation2 + $0x12c0] sm:$0xff]
    %v626 = vld [vmem:[#allocation2 + $0x12c8] sm:$0xff]
    %v627 = vld [vmem:[#allocation2 + $0x12d0] sm:$0xff]
    %v628 = vld [vmem:[#allocation2 + $0x12d8] sm:$0xff]
    %v629 = vld [vmem:[#allocation2 + $0x12e0] sm:$0xff]
    %v630 = vld [vmem:[#allocation2 + $0x12e8] sm:$0xff]
    %v631 = vld [vmem:[#allocation2 + $0x12f0] sm:$0xff]
    %v632 = vld [vmem:[#allocation2 + $0x12f8] sm:$0xff]
    %v633 = vld [vmem:[#allocation2 + $0x1300] sm:$0xff]
    %v634 = vld [vmem:[#allocation2 + $0x1308] sm:$0xff]
    %v635 = vld [vmem:[#allocation2 + $0x1310] sm:$0xff]
    %v636 = vld [vmem:[#allocation2 + $0x1318] sm:$0xff]
    %v637 = vld [vmem:[#allocation2 + $0x1320] sm:$0xff]
    %v638 = vld [vmem:[#allocation2 + $0x1328] sm:$0xff]
    %v639 = vld [vmem:[#allocation2 + $0x1330] sm:$0xff]
    %v640 = vld [vmem:[#allocation2 + $0x1338] sm:$0xff]
    %v641 = vld [vmem:[#allocation2 + $0x1340] sm:$0xff]
    %v642 = vld [vmem:[#allocation2 + $0x1348] sm:$0xff]
    %v643 = vld [vmem:[#allocation2 + $0x1350] sm:$0xff]
    %v644 = vld [vmem:[#allocation2 + $0x1358] sm:$0xff]
    %v645 = vld [vmem:[#allocation2 + $0x1360] sm:$0xff]
    %v646 = vld [vmem:[#allocation2 + $0x1368] sm:$0xff]
    %v647 = vld [vmem:[#allocation2 + $0x1370] sm:$0xff]
    %v648 = vld [vmem:[#allocation2 + $0x1378] sm:$0xff]
    %v649 = vld [vmem:[#allocation2 + $0x1380] sm:$0xff]
    %v650 = vld [vmem:[#allocation2 + $0x1388] sm:$0xff]
    %v651 = vld [vmem:[#allocation2 + $0x1390] sm:$0xff]
    %v652 = vld [vmem:[#allocation2 + $0x1398] sm:$0xff]
    %v653 = vld [vmem:[#allocation2 + $0x13a0] sm:$0xff]
    %v654 = vld [vmem:[#allocation2 + $0x13a8] sm:$0xff]
    %v655 = vld [vmem:[#allocation2 + $0x13b0] sm:$0xff]
    %v656 = vld [vmem:[#allocation2 + $0x13b8] sm:$0xff]
    %v657 = vld [vmem:[#allocation2 + $0x13c0] sm:$0xff]
    %v658 = vld [vmem:[#allocation2 + $0x13c8] sm:$0xff]
    %v659 = vld [vmem:[#allocation2 + $0x13d0] sm:$0xff]
    %v660 = vld [vmem:[#allocation2 + $0x13d8] sm:$0xff]
    %v661 = vld [vmem:[#allocation2 + $0x13e0] sm:$0xff]
    %v662 = vld [vmem:[#allocation2 + $0x13e8] sm:$0xff]
    %v663 = vld [vmem:[#allocation2 + $0x13f0] sm:$0xff]
    %v664 = vld [vmem:[#allocation2 + $0x13f8] sm:$0xff]
    %v665 = vld [vmem:[#allocation2 + $0x1400] sm:$0xff]
    %v666 = vld [vmem:[#allocation2 + $0x1408] sm:$0xff]
    %v667 = vld [vmem:[#allocation2 + $0x1410] sm:$0xff]
    %v668 = vld [vmem:[#allocation2 + $0x1418] sm:$0xff]
    %v669 = vld [vmem:[#allocation2 + $0x1420] sm:$0xff]
    %v670 = vld [vmem:[#allocation2 + $0x1428] sm:$0xff]
    %v671 = vld [vmem:[#allocation2 + $0x1430] sm:$0xff]
    %v672 = vld [vmem:[#allocation2 + $0x1438] sm:$0xff]
    %v673 = vld [vmem:[#allocation2 + $0x1440] sm:$0xff]
    %v674 = vld [vmem:[#allocation2 + $0x1448] sm:$0xff]
    %v675 = vld [vmem:[#allocation2 + $0x1450] sm:$0xff]
    %v676 = vld [vmem:[#allocation2 + $0x1458] sm:$0xff]
    %v677 = vld [vmem:[#allocation2 + $0x1460] sm:$0xff]
    %v678 = vld [vmem:[#allocation2 + $0x1468] sm:$0xff]
    %v679 = vld [vmem:[#allocation2 + $0x1470] sm:$0xff]
    %v680 = vld [vmem:[#allocation2 + $0x1478] sm:$0xff]
    %v681 = vld [vmem:[#allocation2 + $0x1480] sm:$0xff]
    %v682 = vld [vmem:[#allocation2 + $0x1488] sm:$0xff]
    %v683 = vld [vmem:[#allocation2 + $0x1490] sm:$0xff]
    %v684 = vld [vmem:[#allocation2 + $0x1498] sm:$0xff]
    %v685 = vld [vmem:[#allocation2 + $0x14a0] sm:$0xff]
    %v686 = vld [vmem:[#allocation2 + $0x14a8] sm:$0xff]
    %v687 = vld [vmem:[#allocation2 + $0x14b0] sm:$0xff]
    %v688 = vld [vmem:[#allocation2 + $0x14b8] sm:$0xff]
    %v689 = vld [vmem:[#allocation2 + $0x14c0] sm:$0xff]
    %v690 = vld [vmem:[#allocation2 + $0x14c8] sm:$0xff]
    %v691 = vld [vmem:[#allocation2 + $0x14d0] sm:$0xff]
    %v692 = vld [vmem:[#allocation2 + $0x14d8] sm:$0xff]
    %v693 = vld [vmem:[#allocation2 + $0x14e0] sm:$0xff]
    %v694 = vld [vmem:[#allocation2 + $0x14e8] sm:$0xff]
    %v695 = vld [vmem:[#allocation2 + $0x14f0] sm:$0xff]
    %v696 = vld [vmem:[#allocation2 + $0x14f8] sm:$0xff]
    %v697 = vld [vmem:[#allocation2 + $0x1500] sm:$0xff]
    %v698 = vld [vmem:[#allocation2 + $0x1508] sm:$0xff]
    %v699 = vld [vmem:[#allocation2 + $0x1510] sm:$0xff]
    %v700 = vld [vmem:[#allocation2 + $0x1518] sm:$0xff]
    %v701 = vld [vmem:[#allocation2 + $0x1520] sm:$0xff]
    %v702 = vld [vmem:[#allocation2 + $0x1528] sm:$0xff]
    %v703 = vld [vmem:[#allocation2 + $0x1530] sm:$0xff]
    %v704 = vld [vmem:[#allocation2 + $0x1538] sm:$0xff]
    %v705 = vld [vmem:[#allocation2 + $0x1540] sm:$0xff]
    %v706 = vld [vmem:[#allocation2 + $0x1548] sm:$0xff]
    %v707 = vld [vmem:[#allocation2 + $0x1550] sm:$0xff]
    %v708 = vld [vmem:[#allocation2 + $0x1558] sm:$0xff]
    %v709 = vld [vmem:[#allocation2 + $0x1560] sm:$0xff]
    %v710 = vld [vmem:[#allocation2 + $0x1568] sm:$0xff]
    %v711 = vld [vmem:[#allocation2 + $0x1570] sm:$0xff]
    %v712 = vld [vmem:[#allocation2 + $0x1578] sm:$0xff]
    %v713 = vld [vmem:[#allocation2 + $0x1580] sm:$0xff]
    %v714 = vld [vmem:[#allocation2 + $0x1588] sm:$0xff]
    %v715 = vld [vmem:[#allocation2 + $0x1590] sm:$0xff]
    %v716 = vld [vmem:[#allocation2 + $0x1598] sm:$0xff]
    %v717 = vld [vmem:[#allocation2 + $0x15a0] sm:$0xff]
    %v718 = vld [vmem:[#allocation2 + $0x15a8] sm:$0xff]
    %v719 = vld [vmem:[#allocation2 + $0x15b0] sm:$0xff]
    %v720 = vld [vmem:[#allocation2 + $0x15b8] sm:$0xff]
    %v721 = vld [vmem:[#allocation2 + $0x15c0] sm:$0xff]
    %v722 = vld [vmem:[#allocation2 + $0x15c8] sm:$0xff]
    %v723 = vld [vmem:[#allocation2 + $0x15d0] sm:$0xff]
    %v724 = vld [vmem:[#allocation2 + $0x15d8] sm:$0xff]
    %v725 = vld [vmem:[#allocation2 + $0x15e0] sm:$0xff]
    %v726 = vld [vmem:[#allocation2 + $0x15e8] sm:$0xff]
    %v727 = vld [vmem:[#allocation2 + $0x15f0] sm:$0xff]
    %v728 = vld [vmem:[#allocation2 + $0x15f8] sm:$0xff]
    %v729 = vld [vmem:[#allocation2 + $0x1600] sm:$0xff]
    %v730 = vld [vmem:[#allocation2 + $0x1608] sm:$0xff]
    %v731 = vld [vmem:[#allocation2 + $0x1610] sm:$0xff]
    %v732 = vld [vmem:[#allocation2 + $0x1618] sm:$0xff]
    %v733 = vld [vmem:[#allocation2 + $0x1620] sm:$0xff]
    %v734 = vld [vmem:[#allocation2 + $0x1628] sm:$0xff]
    %v735 = vld [vmem:[#allocation2 + $0x1630] sm:$0xff]
    %v736 = vld [vmem:[#allocation2 + $0x1638] sm:$0xff]
    %v737 = vld [vmem:[#allocation2 + $0x1640] sm:$0xff]
    %v738 = vld [vmem:[#allocation2 + $0x1648] sm:$0xff]
    %v739 = vld [vmem:[#allocation2 + $0x1650] sm:$0xff]
    %v740 = vld [vmem:[#allocation2 + $0x1658] sm:$0xff]
    %v741 = vld [vmem:[#allocation2 + $0x1660] sm:$0xff]
    %v742 = vld [vmem:[#allocation2 + $0x1668] sm:$0xff]
    %v743 = vld [vmem:[#allocation2 + $0x1670] sm:$0xff]
    %v744 = vld [vmem:[#allocation2 + $0x1678] sm:$0xff]
    %v745 = vld [vmem:[#allocation2 + $0x1680] sm:$0xff]
    %v746 = vld [vmem:[#allocation2 + $0x1688] sm:$0xff]
    %v747 = vld [vmem:[#allocation2 + $0x1690] sm:$0xff]
    %v748 = vld [vmem:[#allocation2 + $0x1698] sm:$0xff]
    %v749 = vld [vmem:[#allocation2 + $0x16a0] sm:$0xff]
    %v750 = vld [vmem:[#allocation2 + $0x16a8] sm:$0xff]
    %v751 = vld [vmem:[#allocation2 + $0x16b0] sm:$0xff]
    %v752 = vld [vmem:[#allocation2 + $0x16b8] sm:$0xff]
    %v753 = vld [vmem:[#allocation2 + $0x16c0] sm:$0xff]
    %v754 = vld [vmem:[#allocation2 + $0x16c8] sm:$0xff]
    %v755 = vld [vmem:[#allocation2 + $0x16d0] sm:$0xff]
    %v756 = vld [vmem:[#allocation2 + $0x16d8] sm:$0xff]
    %v757 = vld [vmem:[#allocation2 + $0x16e0] sm:$0xff]
    %v758 = vld [vmem:[#allocation2 + $0x16e8] sm:$0xff]
    %v759 = vld [vmem:[#allocation2 + $0x16f0] sm:$0xff]
    %v760 = vld [vmem:[#allocation2 + $0x16f8] sm:$0xff]
    %v761 = vld [vmem:[#allocation2 + $0x1700] sm:$0xff]
    %v762 = vld [vmem:[#allocation2 + $0x1708] sm:$0xff]
    %v763 = vld [vmem:[#allocation2 + $0x1710] sm:$0xff]
    %v764 = vld [vmem:[#allocation2 + $0x1718] sm:$0xff]
    %v765 = vld [vmem:[#allocation2 + $0x1720] sm:$0xff]
    %v766 = vld [vmem:[#allocation2 + $0x1728] sm:$0xff]
    %v767 = vld [vmem:[#allocation2 + $0x1730] sm:$0xff]
    %v768 = vld [vmem:[#allocation2 + $0x1738] sm:$0xff]
    %v769 = vld [vmem:[#allocation2 + $0x1740] sm:$0xff]
    %v770 = vld [vmem:[#allocation2 + $0x1748] sm:$0xff]
    %v771 = vld [vmem:[#allocation2 + $0x1750] sm:$0xff]
    %v772 = vld [vmem:[#allocation2 + $0x1758] sm:$0xff]
    %v773 = vld [vmem:[#allocation2 + $0x1760] sm:$0xff]
    %v774 = vld [vmem:[#allocation2 + $0x1768] sm:$0xff]
    %v775 = vld [vmem:[#allocation2 + $0x1770] sm:$0xff]
    %v776 = vld [vmem:[#allocation2 + $0x1778] sm:$0xff]
    %v777 = vld [vmem:[#allocation2 + $0x1780] sm:$0xff]
    %v778 = vld [vmem:[#allocation2 + $0x1788] sm:$0xff]
    %v779 = vld [vmem:[#allocation2 + $0x1790] sm:$0xff]
    %v780 = vld [vmem:[#allocation2 + $0x1798] sm:$0xff]
    %v781 = vld [vmem:[#allocation2 + $0x17a0] sm:$0xff]
    %v782 = vld [vmem:[#allocation2 + $0x17a8] sm:$0xff]
    %v783 = vld [vmem:[#allocation2 + $0x17b0] sm:$0xff]
    %v784 = vld [vmem:[#allocation2 + $0x17b8] sm:$0xff]
    %v785 = vld [vmem:[#allocation2 + $0x17c0] sm:$0xff]
    %v786 = vld [vmem:[#allocation2 + $0x17c8] sm:$0xff]
    %v787 = vld [vmem:[#allocation2 + $0x17d0] sm:$0xff]
    %v788 = vld [vmem:[#allocation2 + $0x17d8] sm:$0xff]
    %v789 = vld [vmem:[#allocation2 + $0x17e0] sm:$0xff]
    %v790 = vld [vmem:[#allocation2 + $0x17e8] sm:$0xff]
    %v791 = vld [vmem:[#allocation2 + $0x17f0] sm:$0xff]
    %v792 = vld [vmem:[#allocation2 + $0x17f8] sm:$0xff]
    %v793 = vld [vmem:[#allocation2 + $0x1800] sm:$0xff]
    %v794 = vld [vmem:[#allocation2 + $0x1808] sm:$0xff]
    %v795 = vld [vmem:[#allocation2 + $0x1810] sm:$0xff]
    %v796 = vld [vmem:[#allocation2 + $0x1818] sm:$0xff]
    %v797 = vld [vmem:[#allocation2 + $0x1820] sm:$0xff]
    %v798 = vld [vmem:[#allocation2 + $0x1828] sm:$0xff]
    %v799 = vld [vmem:[#allocation2 + $0x1830] sm:$0xff]
    %v800 = vld [vmem:[#allocation2 + $0x1838] sm:$0xff]
    %v801 = vld [vmem:[#allocation2 + $0x1840] sm:$0xff]
    %v802 = vld [vmem:[#allocation2 + $0x1848] sm:$0xff]
    %v803 = vld [vmem:[#allocation2 + $0x1850] sm:$0xff]
    %v804 = vld [vmem:[#allocation2 + $0x1858] sm:$0xff]
    %v805 = vld [vmem:[#allocation2 + $0x1860] sm:$0xff]
    %v806 = vld [vmem:[#allocation2 + $0x1868] sm:$0xff]
    %v807 = vld [vmem:[#allocation2 + $0x1870] sm:$0xff]
    %v808 = vld [vmem:[#allocation2 + $0x1878] sm:$0xff]
    %v809 = vld [vmem:[#allocation2 + $0x1880] sm:$0xff]
    %v810 = vld [vmem:[#allocation2 + $0x1888] sm:$0xff]
    %v811 = vld [vmem:[#allocation2 + $0x1890] sm:$0xff]
    %v812 = vld [vmem:[#allocation2 + $0x1898] sm:$0xff]
    %v813 = vld [vmem:[#allocation2 + $0x18a0] sm:$0xff]
    %v814 = vld [vmem:[#allocation2 + $0x18a8] sm:$0xff]
    %v815 = vld [vmem:[#allocation2 + $0x18b0] sm:$0xff]
    %v816 = vld [vmem:[#allocation2 + $0x18b8] sm:$0xff]
    %v817 = vld [vmem:[#allocation2 + $0x18c0] sm:$0xff]
    %v818 = vld [vmem:[#allocation2 + $0x18c8] sm:$0xff]
    %v819 = vld [vmem:[#allocation2 + $0x18d0] sm:$0xff]
    %v820 = vld [vmem:[#allocation2 + $0x18d8] sm:$0xff]
    %v821 = vld [vmem:[#allocation2 + $0x18e0] sm:$0xff]
    %v822 = vld [vmem:[#allocation2 + $0x18e8] sm:$0xff]
    %v823 = vld [vmem:[#allocation2 + $0x18f0] sm:$0xff]
    %v824 = vld [vmem:[#allocation2 + $0x18f8] sm:$0xff]
    %v825 = vld [vmem:[#allocation2 + $0x1900] sm:$0xff]
    %v826 = vld [vmem:[#allocation2 + $0x1908] sm:$0xff]
    %v827 = vld [vmem:[#allocation2 + $0x1910] sm:$0xff]
    %v828 = vld [vmem:[#allocation2 + $0x1918] sm:$0xff]
    %v829 = vld [vmem:[#allocation2 + $0x1920] sm:$0xff]
    %v830 = vld [vmem:[#allocation2 + $0x1928] sm:$0xff]
    %v831 = vld [vmem:[#allocation2 + $0x1930] sm:$0xff]
    %v832 = vld [vmem:[#allocation2 + $0x1938] sm:$0xff]
    %v833 = vld [vmem:[#allocation2 + $0x1940] sm:$0xff]
    %v834 = vld [vmem:[#allocation2 + $0x1948] sm:$0xff]
    %v835 = vld [vmem:[#allocation2 + $0x1950] sm:$0xff]
    %v836 = vld [vmem:[#allocation2 + $0x1958] sm:$0xff]
    %v837 = vld [vmem:[#allocation2 + $0x1960] sm:$0xff]
    %v838 = vld [vmem:[#allocation2 + $0x1968] sm:$0xff]
    %v839 = vld [vmem:[#allocation2 + $0x1970] sm:$0xff]
    %v840 = vld [vmem:[#allocation2 + $0x1978] sm:$0xff]
    %v841 = vld [vmem:[#allocation2 + $0x1980] sm:$0xff]
    %v842 = vld [vmem:[#allocation2 + $0x1988] sm:$0xff]
    %v843 = vld [vmem:[#allocation2 + $0x1990] sm:$0xff]
    %v844 = vld [vmem:[#allocation2 + $0x1998] sm:$0xff]
    %v845 = vld [vmem:[#allocation2 + $0x19a0] sm:$0xff]
    %v846 = vld [vmem:[#allocation2 + $0x19a8] sm:$0xff]
    %v847 = vld [vmem:[#allocation2 + $0x19b0] sm:$0xff]
    %v848 = vld [vmem:[#allocation2 + $0x19b8] sm:$0xff]
    %v849 = vld [vmem:[#allocation2 + $0x19c0] sm:$0xff]
    %v850 = vld [vmem:[#allocation2 + $0x19c8] sm:$0xff]
    %v851 = vld [vmem:[#allocation2 + $0x19d0] sm:$0xff]
    %v852 = vld [vmem:[#allocation2 + $0x19d8] sm:$0xff]
    %v853 = vld [vmem:[#allocation2 + $0x19e0] sm:$0xff]
    %v854 = vld [vmem:[#allocation2 + $0x19e8] sm:$0xff]
    %v855 = vld [vmem:[#allocation2 + $0x19f0] sm:$0xff]
    %v856 = vld [vmem:[#allocation2 + $0x19f8] sm:$0xff]
    %v857 = vld [vmem:[#allocation2 + $0x1a00] sm:$0xff]
    %v858 = vld [vmem:[#allocation2 + $0x1a08] sm:$0xff]
    %v859 = vld [vmem:[#allocation2 + $0x1a10] sm:$0xff]
    %v860 = vld [vmem:[#allocation2 + $0x1a18] sm:$0xff]
    %v861 = vld [vmem:[#allocation2 + $0x1a20] sm:$0xff]
    %v862 = vld [vmem:[#allocation2 + $0x1a28] sm:$0xff]
    %v863 = vld [vmem:[#allocation2 + $0x1a30] sm:$0xff]
    %v864 = vld [vmem:[#allocation2 + $0x1a38] sm:$0xff]
    %v865 = vld [vmem:[#allocation2 + $0x1a40] sm:$0xff]
    %v866 = vld [vmem:[#allocation2 + $0x1a48] sm:$0xff]
    %v867 = vld [vmem:[#allocation2 + $0x1a50] sm:$0xff]
    %v868 = vld [vmem:[#allocation2 + $0x1a58] sm:$0xff]
    %v869 = vld [vmem:[#allocation2 + $0x1a60] sm:$0xff]
    %v870 = vld [vmem:[#allocation2 + $0x1a68] sm:$0xff]
    %v871 = vld [vmem:[#allocation2 + $0x1a70] sm:$0xff]
    %v872 = vld [vmem:[#allocation2 + $0x1a78] sm:$0xff]
    %v873 = vld [vmem:[#allocation2 + $0x1a80] sm:$0xff]
    %v874 = vld [vmem:[#allocation2 + $0x1a88] sm:$0xff]
    %v875 = vld [vmem:[#allocation2 + $0x1a90] sm:$0xff]
    %v876 = vld [vmem:[#allocation2 + $0x1a98] sm:$0xff]
    %v877 = vld [vmem:[#allocation2 + $0x1aa0] sm:$0xff]
    %v878 = vld [vmem:[#allocation2 + $0x1aa8] sm:$0xff]
    %v879 = vld [vmem:[#allocation2 + $0x1ab0] sm:$0xff]
    %v880 = vld [vmem:[#allocation2 + $0x1ab8] sm:$0xff]
    %v881 = vld [vmem:[#allocation2 + $0x1ac0] sm:$0xff]
    %v882 = vld [vmem:[#allocation2 + $0x1ac8] sm:$0xff]
    %v883 = vld [vmem:[#allocation2 + $0x1ad0] sm:$0xff]
    %v884 = vld [vmem:[#allocation2 + $0x1ad8] sm:$0xff]
    %v885 = vld [vmem:[#allocation2 + $0x1ae0] sm:$0xff]
    %v886 = vld [vmem:[#allocation2 + $0x1ae8] sm:$0xff]
    %v887 = vld [vmem:[#allocation2 + $0x1af0] sm:$0xff]
    %v888 = vld [vmem:[#allocation2 + $0x1af8] sm:$0xff]
    %v889 = vld [vmem:[%s1] sm:$0xff]
    %v890 = vld [vmem:[%s1 + $0x8] sm:$0xff]
    %v891 = vld [vmem:[%s1 + $0x10] sm:$0xff]
    %v892 = vld [vmem:[%s1 + $0x18] sm:$0xff]
    %v893 = vld [vmem:[%s1 + $0x20] sm:$0xff]
    %v894 = vld [vmem:[%s1 + $0x28] sm:$0xff]
    %v895 = vld [vmem:[%s1 + $0x30] sm:$0xff]
    %v896 = vld [vmem:[%s1 + $0x38] sm:$0xff]
    %v897 = vld [vmem:[%s1 + $0x40] sm:$0xff]
    %v898 = vld [vmem:[%s1 + $0x48] sm:$0xff]
    %v899 = vld [vmem:[%s1 + $0x50] sm:$0xff]
    %v900 = vld [vmem:[%s1 + $0x58] sm:$0xff]
    %v901 = vld [vmem:[%s1 + $0x60] sm:$0xff]
    %v902 = vld [vmem:[%s1 + $0x68] sm:$0xff]
    %v903 = vld [vmem:[%s1 + $0x70] sm:$0xff]
    %v904 = vld [vmem:[%s1 + $0x78] sm:$0xff]
    %v905 = vld [vmem:[%s1 + $0x80] sm:$0xff]
    %v906 = vld [vmem:[%s1 + $0x88] sm:$0xff]
    %v907 = vld [vmem:[%s1 + $0x90] sm:$0xff]
    %v908 = vld [vmem:[%s1 + $0x98] sm:$0xff]
    %v909 = vld [vmem:[%s1 + $0xa0] sm:$0xff]
    %v910 = vld [vmem:[%s1 + $0xa8] sm:$0xff]
    %v911 = vld [vmem:[%s1 + $0xb0] sm:$0xff]
    %v912 = vld [vmem:[%s1 + $0xb8] sm:$0xff]
    %v913 = vld [vmem:[%s1 + $0xc0] sm:$0xff]
    %v914 = vld [vmem:[%s1 + $0xc8] sm:$0xff]
    %v915 = vld [vmem:[%s1 + $0xd0] sm:$0xff]
    %v916 = vld [vmem:[%s1 + $0xd8] sm:$0xff]
    %v917 = vld [vmem:[%s1 + $0xe0] sm:$0xff]
    %v918 = vld [vmem:[%s1 + $0xe8] sm:$0xff]
    %v919 = vld [vmem:[%s1 + $0xf0] sm:$0xff]
    %v920 = vld [vmem:[%s1 + $0xf8] sm:$0xff]
    %v921 = vld [vmem:[%s1 + $0x100] sm:$0xff]
    %v922 = vld [vmem:[%s1 + $0x108] sm:$0xff]
    %v923 = vld [vmem:[%s1 + $0x110] sm:$0xff]
    %v924 = vld [vmem:[%s1 + $0x118] sm:$0xff]
    %v925 = vld [vmem:[%s1 + $0x120] sm:$0xff]
    %v926 = vld [vmem:[%s1 + $0x128] sm:$0xff]
    %v927 = vld [vmem:[%s1 + $0x130] sm:$0xff]
    %v928 = vld [vmem:[%s1 + $0x138] sm:$0xff]
    %v929 = vld [vmem:[%s1 + $0x140] sm:$0xff]
    %v930 = vld [vmem:[%s1 + $0x148] sm:$0xff]
    %v931 = vld [vmem:[%s1 + $0x150] sm:$0xff]
    %v932 = vld [vmem:[%s1 + $0x158] sm:$0xff]
    %v933 = vld [vmem:[%s1 + $0x160] sm:$0xff]
    %v934 = vld [vmem:[%s1 + $0x168] sm:$0xff]
    %v935 = vld [vmem:[%s1 + $0x170] sm:$0xff]
    %v936 = vld [vmem:[%s1 + $0x178] sm:$0xff]
    %v937 = vld [vmem:[%s1 + $0x180] sm:$0xff]
    %v938 = vld [vmem:[%s1 + $0x188] sm:$0xff]
    %v939 = vld [vmem:[%s1 + $0x190] sm:$0xff]
    %v940 = vld [vmem:[%s1 + $0x198] sm:$0xff]
    %v941 = vld [vmem:[%s1 + $0x1a0] sm:$0xff]
    %v942 = vld [vmem:[%s1 + $0x1a8] sm:$0xff]
    %v943 = vld [vmem:[%s1 + $0x1b0] sm:$0xff]
    %v944 = vld [vmem:[%s1 + $0x1b8] sm:$0xff]
    %v945 = vld [vmem:[%s1 + $0x1c0] sm:$0xff]
    %v946 = vld [vmem:[%s1 + $0x1c8] sm:$0xff]
    %v947 = vld [vmem:[%s1 + $0x1d0] sm:$0xff]
    %v948 = vld [vmem:[%s1 + $0x1d8] sm:$0xff]
    %v949 = vld [vmem:[%s1 + $0x1e0] sm:$0xff]
    %v950 = vld [vmem:[%s1 + $0x1e8] sm:$0xff]
    %v951 = vld [vmem:[%s1 + $0x1f0] sm:$0xff]
    %v952 = vld [vmem:[%s1 + $0x1f8] sm:$0xff]
    %v953 = vld [vmem:[%s1 + $0x200] sm:$0xff]
    %v954 = vld [vmem:[%s1 + $0x208] sm:$0xff]
    %v955 = vld [vmem:[%s1 + $0x210] sm:$0xff]
    %v956 = vld [vmem:[%s1 + $0x218] sm:$0xff]
    %v957 = vld [vmem:[%s1 + $0x220] sm:$0xff]
    %v958 = vld [vmem:[%s1 + $0x228] sm:$0xff]
    %v959 = vld [vmem:[%s1 + $0x230] sm:$0xff]
    %v960 = vld [vmem:[%s1 + $0x238] sm:$0xff]
    %v961 = vld [vmem:[%s1 + $0x240] sm:$0xff]
    %v962 = vld [vmem:[%s1 + $0x248] sm:$0xff]
    %v963 = vld [vmem:[%s1 + $0x250] sm:$0xff]
    %v964 = vld [vmem:[%s1 + $0x258] sm:$0xff]
    %v965 = vld [vmem:[%s1 + $0x260] sm:$0xff]
    %v966 = vld [vmem:[%s1 + $0x268] sm:$0xff]
    %v967 = vld [vmem:[%s1 + $0x270] sm:$0xff]
    %v968 = vld [vmem:[%s1 + $0x278] sm:$0xff]
    %v969 = vld [vmem:[%s1 + $0x280] sm:$0xff]
    %v970 = vld [vmem:[%s1 + $0x288] sm:$0xff]
    %v971 = vld [vmem:[%s1 + $0x290] sm:$0xff]
    %v972 = vld [vmem:[%s1 + $0x298] sm:$0xff]
    %v973 = vld [vmem:[%s1 + $0x2a0] sm:$0xff]
    %v974 = vld [vmem:[%s1 + $0x2a8] sm:$0xff]
    %v975 = vld [vmem:[%s1 + $0x2b0] sm:$0xff]
    %v976 = vld [vmem:[%s1 + $0x2b8] sm:$0xff]
    %v977 = vld [vmem:[%s1 + $0x2c0] sm:$0xff]
    %v978 = vld [vmem:[%s1 + $0x2c8] sm:$0xff]
    %v979 = vld [vmem:[%s1 + $0x2d0] sm:$0xff]
    %v980 = vld [vmem:[%s1 + $0x2d8] sm:$0xff]
    %v981 = vld [vmem:[%s1 + $0x2e0] sm:$0xff]
    %v982 = vld [vmem:[%s1 + $0x2e8] sm:$0xff]
    %v983 = vld [vmem:[%s1 + $0x2f0] sm:$0xff]
    %v984 = vld [vmem:[%s1 + $0x2f8] sm:$0xff]
    %v985 = vld [vmem:[%s1 + $0x300] sm:$0xff]
    %v986 = vld [vmem:[%s1 + $0x308] sm:$0xff]
    %v987 = vld [vmem:[%s1 + $0x310] sm:$0xff]
    %v988 = vld [vmem:[%s1 + $0x318] sm:$0xff]
    %v989 = vld [vmem:[%s1 + $0x320] sm:$0xff]
    %v990 = vld [vmem:[%s1 + $0x328] sm:$0xff]
    %v991 = vld [vmem:[%s1 + $0x330] sm:$0xff]
    %v992 = vld [vmem:[%s1 + $0x338] sm:$0xff]
    %v993 = vld [vmem:[%s1 + $0x340] sm:$0xff]
    %v994 = vld [vmem:[%s1 + $0x348] sm:$0xff]
    %v995 = vld [vmem:[%s1 + $0x350] sm:$0xff]
    %v996 = vld [vmem:[%s1 + $0x358] sm:$0xff]
    %v997 = vld [vmem:[%s1 + $0x360] sm:$0xff]
    %v998 = vld [vmem:[%s1 + $0x368] sm:$0xff]
    %v999 = vld [vmem:[%s1 + $0x370] sm:$0xff]
    %v1000 = vld [vmem:[%s1 + $0x378] sm:$0xff]
    %v1001 = vld [vmem:[%s1 + $0x380] sm:$0xff]
    %v1002 = vld [vmem:[%s1 + $0x388] sm:$0xff]
    %v1003 = vld [vmem:[%s1 + $0x390] sm:$0xff]
    %v1004 = vld [vmem:[%s1 + $0x398] sm:$0xff]
    %v1005 = vld [vmem:[%s1 + $0x3a0] sm:$0xff]
    %v1006 = vld [vmem:[%s1 + $0x3a8] sm:$0xff]
    %v1007 = vld [vmem:[%s1 + $0x3b0] sm:$0xff]
    %v1008 = vld [vmem:[%s1 + $0x3b8] sm:$0xff]
    %v1009 = vld [vmem:[%s1 + $0x3c0] sm:$0xff]
    %v1010 = vld [vmem:[%s1 + $0x3c8] sm:$0xff]
    %v1011 = vld [vmem:[%s1 + $0x3d0] sm:$0xff]
    %v1012 = vld [vmem:[%s1 + $0x3d8] sm:$0xff]
    %v1013 = vld [vmem:[%s1 + $0x3e0] sm:$0xff]
    %v1014 = vld [vmem:[%s1 + $0x3e8] sm:$0xff]
    %v1015 = vld [vmem:[%s1 + $0x3f0] sm:$0xff]
    %v1016 = vld [vmem:[%s1 + $0x3f8] sm:$0xff]
    %v1017 = vld [vmem:[%s1 + $0x400] sm:$0xff]
    %v1018 = vld [vmem:[%s1 + $0x408] sm:$0xff]
    %v1019 = vld [vmem:[%s1 + $0x410] sm:$0xff]
    %v1020 = vld [vmem:[%s1 + $0x418] sm:$0xff]
    %v1021 = vld [vmem:[%s1 + $0x420] sm:$0xff]
    %v1022 = vld [vmem:[%s1 + $0x428] sm:$0xff]
    %v1023 = vld [vmem:[%s1 + $0x430] sm:$0xff]
    %v1024 = vld [vmem:[%s1 + $0x438] sm:$0xff]
    %v1025 = vld [vmem:[%s1 + $0x440] sm:$0xff]
    %v1026 = vld [vmem:[%s1 + $0x448] sm:$0xff]
    %v1027 = vld [vmem:[%s1 + $0x450] sm:$0xff]
    %v1028 = vld [vmem:[%s1 + $0x458] sm:$0xff]
    %v1029 = vld [vmem:[%s1 + $0x460] sm:$0xff]
    %v1030 = vld [vmem:[%s1 + $0x468] sm:$0xff]
    %v1031 = vld [vmem:[%s1 + $0x470] sm:$0xff]
    %v1032 = vld [vmem:[%s1 + $0x478] sm:$0xff]
    %v1033 = vld [vmem:[%s1 + $0x480] sm:$0xff]
    %v1034 = vld [vmem:[%s1 + $0x488] sm:$0xff]
    %v1035 = vld [vmem:[%s1 + $0x490] sm:$0xff]
    %v1036 = vld [vmem:[%s1 + $0x498] sm:$0xff]
    %v1037 = vld [vmem:[%s1 + $0x4a0] sm:$0xff]
    %v1038 = vld [vmem:[%s1 + $0x4a8] sm:$0xff]
    %v1039 = vld [vmem:[%s1 + $0x4b0] sm:$0xff]
    %v1040 = vld [vmem:[%s1 + $0x4b8] sm:$0xff]
    %v1041 = vld [vmem:[%s1 + $0x4c0] sm:$0xff]
    %v1042 = vld [vmem:[%s1 + $0x4c8] sm:$0xff]
    %v1043 = vld [vmem:[%s1 + $0x4d0] sm:$0xff]
    %v1044 = vld [vmem:[%s1 + $0x4d8] sm:$0xff]
    %v1045 = vld [vmem:[%s1 + $0x4e0] sm:$0xff]
    %v1046 = vld [vmem:[%s1 + $0x4e8] sm:$0xff]
    %v1047 = vld [vmem:[%s1 + $0x4f0] sm:$0xff]
    %v1048 = vld [vmem:[%s1 + $0x4f8] sm:$0xff]
    %v1049 = vld [vmem:[%s1 + $0x500] sm:$0xff]
    %v1050 = vld [vmem:[%s1 + $0x508] sm:$0xff]
    %v1051 = vld [vmem:[%s1 + $0x510] sm:$0xff]
    %v1052 = vld [vmem:[%s1 + $0x518] sm:$0xff]
    %v1053 = vld [vmem:[%s1 + $0x520] sm:$0xff]
    %v1054 = vld [vmem:[%s1 + $0x528] sm:$0xff]
    %v1055 = vld [vmem:[%s1 + $0x530] sm:$0xff]
    %v1056 = vld [vmem:[%s1 + $0x538] sm:$0xff]
    %v1057 = vld [vmem:[%s1 + $0x540] sm:$0xff]
    %v1058 = vld [vmem:[%s1 + $0x548] sm:$0xff]
    %v1059 = vld [vmem:[%s1 + $0x550] sm:$0xff]
    %v1060 = vld [vmem:[%s1 + $0x558] sm:$0xff]
    %v1061 = vld [vmem:[%s1 + $0x560] sm:$0xff]
    %v1062 = vld [vmem:[%s1 + $0x568] sm:$0xff]
    %v1063 = vld [vmem:[%s1 + $0x570] sm:$0xff]
    %v1064 = vld [vmem:[%s1 + $0x578] sm:$0xff]
    %v1065 = vld [vmem:[%s1 + $0x580] sm:$0xff]
    %v1066 = vld [vmem:[%s1 + $0x588] sm:$0xff]
    %v1067 = vld [vmem:[%s1 + $0x590] sm:$0xff]
    %v1068 = vld [vmem:[%s1 + $0x598] sm:$0xff]
    %v1069 = vld [vmem:[%s1 + $0x5a0] sm:$0xff]
    %v1070 = vld [vmem:[%s1 + $0x5a8] sm:$0xff]
    %v1071 = vld [vmem:[%s1 + $0x5b0] sm:$0xff]
    %v1072 = vld [vmem:[%s1 + $0x5b8] sm:$0xff]
    %v1073 = vld [vmem:[%s1 + $0x5c0] sm:$0xff]
    %v1074 = vld [vmem:[%s1 + $0x5c8] sm:$0xff]
    %v1075 = vld [vmem:[%s1 + $0x5d0] sm:$0xff]
    %v1076 = vld [vmem:[%s1 + $0x5d8] sm:$0xff]
    %v1077 = vld [vmem:[%s1 + $0x5e0] sm:$0xff]
    %v1078 = vld [vmem:[%s1 + $0x5e8] sm:$0xff]
    %v1079 = vld [vmem:[%s1 + $0x5f0] sm:$0xff]
    %v1080 = vld [vmem:[%s1 + $0x5f8] sm:$0xff]
    %v1081 = vld [vmem:[%s1 + $0x600] sm:$0xff]
    %v1082 = vld [vmem:[%s1 + $0x608] sm:$0xff]
    %v1083 = vld [vmem:[%s1 + $0x610] sm:$0xff]
    %v1084 = vld [vmem:[%s1 + $0x618] sm:$0xff]
    %v1085 = vld [vmem:[%s1 + $0x620] sm:$0xff]
    %v1086 = vld [vmem:[%s1 + $0x628] sm:$0xff]
    %v1087 = vld [vmem:[%s1 + $0x630] sm:$0xff]
    %v1088 = vld [vmem:[%s1 + $0x638] sm:$0xff]
    %v1089 = vld [vmem:[%s1 + $0x640] sm:$0xff]
    %v1090 = vld [vmem:[%s1 + $0x648] sm:$0xff]
    %v1091 = vld [vmem:[%s1 + $0x650] sm:$0xff]
    %v1092 = vld [vmem:[%s1 + $0x658] sm:$0xff]
    %v1093 = vld [vmem:[%s1 + $0x660] sm:$0xff]
    %v1094 = vld [vmem:[%s1 + $0x668] sm:$0xff]
    %v1095 = vld [vmem:[%s1 + $0x670] sm:$0xff]
    %v1096 = vld [vmem:[%s1 + $0x678] sm:$0xff]
    %v1097 = vld [vmem:[%s1 + $0x680] sm:$0xff]
    %v1098 = vld [vmem:[%s1 + $0x688] sm:$0xff]
    %v1099 = vld [vmem:[%s1 + $0x690] sm:$0xff]
    %v1100 = vld [vmem:[%s1 + $0x698] sm:$0xff]
    %v1101 = vld [vmem:[%s1 + $0x6a0] sm:$0xff]
    %v1102 = vld [vmem:[%s1 + $0x6a8] sm:$0xff]
    %v1103 = vld [vmem:[%s1 + $0x6b0] sm:$0xff]
    %v1104 = vld [vmem:[%s1 + $0x6b8] sm:$0xff]
    %v1105 = vld [vmem:[%s1 + $0x6c0] sm:$0xff]
    %v1106 = vld [vmem:[%s1 + $0x6c8] sm:$0xff]
    %v1107 = vld [vmem:[%s1 + $0x6d0] sm:$0xff]
    %v1108 = vld [vmem:[%s1 + $0x6d8] sm:$0xff]
    %v1109 = vld [vmem:[%s1 + $0x6e0] sm:$0xff]
    %v1110 = vld [vmem:[%s1 + $0x6e8] sm:$0xff]
    %v1111 = vld [vmem:[%s1 + $0x6f0] sm:$0xff]
    %v1112 = vld [vmem:[%s1 + $0x6f8] sm:$0xff]
    %v1113 = vld [vmem:[%s1 + $0x700] sm:$0xff]
    %v1114 = vld [vmem:[%s1 + $0x708] sm:$0xff]
    %v1115 = vld [vmem:[%s1 + $0x710] sm:$0xff]
    %v1116 = vld [vmem:[%s1 + $0x718] sm:$0xff]
    %v1117 = vld [vmem:[%s1 + $0x720] sm:$0xff]
    %v1118 = vld [vmem:[%s1 + $0x728] sm:$0xff]
    %v1119 = vld [vmem:[%s1 + $0x730] sm:$0xff]
    %v1120 = vld [vmem:[%s1 + $0x738] sm:$0xff]
    %v1121 = vld [vmem:[%s1 + $0x740] sm:$0xff]
    %v1122 = vld [vmem:[%s1 + $0x748] sm:$0xff]
    %v1123 = vld [vmem:[%s1 + $0x750] sm:$0xff]
    %v1124 = vld [vmem:[%s1 + $0x758] sm:$0xff]
    %v1125 = vld [vmem:[%s1 + $0x760] sm:$0xff]
    %v1126 = vld [vmem:[%s1 + $0x768] sm:$0xff]
    %v1127 = vld [vmem:[%s1 + $0x770] sm:$0xff]
    %v1128 = vld [vmem:[%s1 + $0x778] sm:$0xff]
    %v1129 = vld [vmem:[%s1 + $0x780] sm:$0xff]
    %v1130 = vld [vmem:[%s1 + $0x788] sm:$0xff]
    %v1131 = vld [vmem:[%s1 + $0x790] sm:$0xff]
    %v1132 = vld [vmem:[%s1 + $0x798] sm:$0xff]
    %v1133 = vld [vmem:[%s1 + $0x7a0] sm:$0xff]
    %v1134 = vld [vmem:[%s1 + $0x7a8] sm:$0xff]
    %v1135 = vld [vmem:[%s1 + $0x7b0] sm:$0xff]
    %v1136 = vld [vmem:[%s1 + $0x7b8] sm:$0xff]
    %v1137 = vld [vmem:[%s1 + $0x7c0] sm:$0xff]
    %v1138 = vld [vmem:[%s1 + $0x7c8] sm:$0xff]
    %v1139 = vld [vmem:[%s1 + $0x7d0] sm:$0xff]
    %v1140 = vld [vmem:[%s1 + $0x7d8] sm:$0xff]
    %v1141 = vld [vmem:[%s1 + $0x7e0] sm:$0xff]
    %v1142 = vld [vmem:[%s1 + $0x7e8] sm:$0xff]
    %v1143 = vld [vmem:[%s1 + $0x7f0] sm:$0xff]
    %v1144 = vld [vmem:[%s1 + $0x7f8] sm:$0xff]
    %v1145 = vld [vmem:[%s1 + $0x800] sm:$0xff]
    %v1146 = vld [vmem:[%s1 + $0x808] sm:$0xff]
    %v1147 = vld [vmem:[%s1 + $0x810] sm:$0xff]
    %v1148 = vld [vmem:[%s1 + $0x818] sm:$0xff]
    %v1149 = vld [vmem:[%s1 + $0x820] sm:$0xff]
    %v1150 = vld [vmem:[%s1 + $0x828] sm:$0xff]
    %v1151 = vld [vmem:[%s1 + $0x830] sm:$0xff]
    %v1152 = vld [vmem:[%s1 + $0x838] sm:$0xff]
    %v1153 = vld [vmem:[%s1 + $0x840] sm:$0xff]
    %v1154 = vld [vmem:[%s1 + $0x848] sm:$0xff]
    %v1155 = vld [vmem:[%s1 + $0x850] sm:$0xff]
    %v1156 = vld [vmem:[%s1 + $0x858] sm:$0xff]
    %v1157 = vld [vmem:[%s1 + $0x860] sm:$0xff]
    %v1158 = vld [vmem:[%s1 + $0x868] sm:$0xff]
    %v1159 = vld [vmem:[%s1 + $0x870] sm:$0xff]
    %v1160 = vld [vmem:[%s1 + $0x878] sm:$0xff]
    %v1161 = vld [vmem:[%s1 + $0x880] sm:$0xff]
    %v1162 = vld [vmem:[%s1 + $0x888] sm:$0xff]
    %v1163 = vld [vmem:[%s1 + $0x890] sm:$0xff]
    %v1164 = vld [vmem:[%s1 + $0x898] sm:$0xff]
    %v1165 = vld [vmem:[%s1 + $0x8a0] sm:$0xff]
    %v1166 = vld [vmem:[%s1 + $0x8a8] sm:$0xff]
    %v1167 = vld [vmem:[%s1 + $0x8b0] sm:$0xff]
    %v1168 = vld [vmem:[%s1 + $0x8b8] sm:$0xff]
    %v1169 = vld [vmem:[%s1 + $0x8c0] sm:$0xff]
    %v1170 = vld [vmem:[%s1 + $0x8c8] sm:$0xff]
    %v1171 = vld [vmem:[%s1 + $0x8d0] sm:$0xff]
    %v1172 = vld [vmem:[%s1 + $0x8d8] sm:$0xff]
    %v1173 = vld [vmem:[%s1 + $0x8e0] sm:$0xff]
    %v1174 = vld [vmem:[%s1 + $0x8e8] sm:$0xff]
    %v1175 = vld [vmem:[%s1 + $0x8f0] sm:$0xff]
    %v1176 = vld [vmem:[%s1 + $0x8f8] sm:$0xff]
    %1177 = vmatprep.subr.mxu0 0.0
    %1178 = vmatpush1.msra.mxu0 %v889
    %1179 = vmatprep.subr.mxu0 0.0
    %1180 = vmatpush1.msra.mxu0 %v890
    %1181 = vmatprep.subr.mxu0 0.0
    %1182 = vmatpush1.msra.mxu0 %v891
    %1183 = vmatprep.subr.mxu0 0.0
    %1184 = vmatpush1.msra.mxu0 %v892
    %1185 = vmatprep.subr.mxu0 0.0
    %1186 = vmatpush1.msra.mxu0 %v893
    %1187 = vmatprep.subr.mxu0 0.0
    %1188 = vmatpush1.msra.mxu0 %v894
    %1189 = vmatprep.subr.mxu0 0.0
    %1190 = vmatpush1.msra.mxu0 %v895
    %1191 = vmatprep.subr.mxu0 0.0
    %1192 = vmatpush1.msra.mxu0 %v896
    %1193 = vmatprep.subr.mxu0 0.0
    %1194 = vmatpush1.msra.mxu0 %v897
    %1195 = vmatprep.subr.mxu0 0.0
    %1196 = vmatpush1.msra.mxu0 %v898
    %1197 = vmatprep.subr.mxu0 0.0
    %1198 = vmatpush1.msra.mxu0 %v899
    %1199 = vmatprep.subr.mxu0 0.0
    %1200 = vmatpush1.msra.mxu0 %v900
    %1201 = vmatprep.subr.mxu0 0.0
    %1202 = vmatpush1.msra.mxu0 %v901
    %1203 = vmatprep.subr.mxu0 0.0
    %1204 = vmatpush1.msra.mxu0 %v902
    %1205 = vmatprep.subr.mxu0 0.0
    %1206 = vmatpush1.msra.mxu0 %v903
    %1207 = vmatprep.subr.mxu0 0.0
    %1208 = vmatpush1.msra.mxu0 %v904
    %1209 = vmatprep.subr.mxu0 0.0
    %1210 = vmatpush1.msra.mxu0 %v905
    %1211 = vmatprep.subr.mxu0 0.0
    %1212 = vmatpush1.msra.mxu0 %v906
    %1213 = vmatprep.subr.mxu0 0.0
    %1214 = vmatpush1.msra.mxu0 %v907
    %1215 = vmatprep.subr.mxu0 0.0
    %1216 = vmatpush1.msra.mxu0 %v908
    %1217 = vmatprep.subr.mxu0 0.0
    %1218 = vmatpush1.msra.mxu0 %v909
    %1219 = vmatprep.subr.mxu0 0.0
    %1220 = vmatpush1.msra.mxu0 %v910
    %1221 = vmatprep.subr.mxu0 0.0
    %1222 = vmatpush1.msra.mxu0 %v911
    %1223 = vmatprep.subr.mxu0 0.0
    %1224 = vmatpush1.msra.mxu0 %v912
    %1225 = vmatprep.subr.mxu0 0.0
    %1226 = vmatpush1.msra.mxu0 %v913
    %1227 = vmatprep.subr.mxu0 0.0
    %1228 = vmatpush1.msra.mxu0 %v914
    %1229 = vmatprep.subr.mxu0 0.0
    %1230 = vmatpush1.msra.mxu0 %v915
    %1231 = vmatprep.subr.mxu0 0.0
    %1232 = vmatpush1.msra.mxu0 %v916
    %1233 = vmatprep.subr.mxu0 0.0
    %1234 = vmatpush1.msra.mxu0 %v917
    %1235 = vmatprep.subr.mxu0 0.0
    %1236 = vmatpush1.msra.mxu0 %v918
    %1237 = vmatprep.subr.mxu0 0.0
    %1238 = vmatpush1.msra.mxu0 %v919
    %1239 = vmatprep.subr.mxu0 0.0
    %1240 = vmatpush1.msra.mxu0 %v920
    %1241 = vmatprep.mubr.f32.mxu0 %v26
    %1242 = vmatmul.mubr.f32.gmra.mrb[0].mxu0 %v25
    %v1243 = vpop.f32.mrb[0].mxu0
    %v1244 = vadd.f32 0.0, %v1243
    %v1245 = vpop.f32.mrb[0].mxu0
    %1246 = vmatprep.mubr.f32.mxu0 %v44
    %1247 = vmatmul.mubr.f32.gmra.mrb[0].mxu0 %v43
    %v1248 = vpop.f32.mrb[0].mxu0
    %v1249 = vadd.f32 0.0, %v1248
    %v1250 = vpop.f32.mrb[0].mxu0
    %1251 = vmatprep.mubr.f32.mxu0 %v62
    %1252 = vmatmul.mubr.f32.gmra.mrb[0].mxu0 %v61
    %v1253 = vpop.f32.mrb[0].mxu0
    %v1254 = vadd.f32 0.0, %v1253
    %v1255 = vpop.f32.mrb[0].mxu0
    %1256 = vmatprep.mubr.f32.mxu0 %v80
    %1257 = vmatmul.mubr.f32.gmra.mrb[0].mxu0 %v79
    %v1258 = vpop.f32.mrb[0].mxu0
    %v1259 = vadd.f32 0.0, %v1258
    %v1260 = vpop.f32.mrb[0].mxu0
    %1261 = vmatprep.mubr.f32.mxu0 %v98
    %1262 = vmatmul.mubr.f32.gmra.mrb[0].mxu0 %v97
    %v1263 = vpop.f32.mrb[0].mxu0
    %v1264 = vadd.f32 0.0, %v1263
    %v1265 = vpop.f32.mrb[0].mxu0
    %1266 = vmatprep.mubr.f32.mxu0 %v116
    %1267 = vmatmul.mubr.f32.gmra.mrb[0].mxu0 %v115
    %v1268 = vpop.f32.mrb[0].mxu0
    %v1269 = vadd.f32 0.0, %v1268
    %v1270 = vpop.f32.mrb[0].mxu0
    %1271 = vmatprep.mubr.f32.mxu0 %v134
    %1272 = vmatmul.mubr.f32.gmra.mrb[0].mxu0 %v133
    %v1273 = vpop.f32.mrb[0].mxu0
    %v1274 = vadd.f32 0.0, %v1273
    %v1275 = vpop.f32.mrb[0].mxu0
    %1276 = vmatprep.mubr.f32.mxu0 %v152
    %1277 = vmatmul.mubr.f32.gmra.mrb[0].mxu0 %v151
    %v1278 = vpop.f32.mrb[0].mxu0
    %v1279 = vadd.f32 0.0, %v1278
    %v1280 = vpop.f32.mrb[0].mxu0
    %1281 = vmatprep.mubr.f32.mxu0 %v170
    %1282 = vmatmul.mubr.f32.gmra.mrb[0].mxu0 %v169
    %v1283 = vpop.f32.mrb[0].mxu0
    %v1284 = vadd.f32 0.0, %v1283
    %v1285 = vpop.f32.mrb[0].mxu0
    %1286 = vmatprep.mubr.f32.mxu0 %v188
    %1287 = vmatmul.mubr.f32.gmra.mrb[0].mxu0 %v187
    %v1288 = vpop.f32.mrb[0].mxu0
    %v1289 = vadd.f32 0.0, %v1288
    %v1290 = vpop.f32.mrb[0].mxu0
    %1291 = vmatprep.mubr.f32.mxu0 %v206
    %1292 = vmatmul.mubr.f32.gmra.mrb[0].mxu0 %v205
    %v1293 = vpop.f32.mrb[0].mxu0
    %v1294 = vadd.f32 0.0, %v1293
    %v1295 = vpop.f32.mrb[0].mxu0
    %1296 = vmatprep.mubr.f32.mxu0 %v224
    %1297 = vmatmul.mubr.f32.gmra.mrb[0].mxu0 %v223
    %v1298 = vpop.f32.mrb[0].mxu0
    %v1299 = vadd.f32 0.0, %v1298
    %v1300 = vpop.f32.mrb[0].mxu0
    %1301 = vmatprep.mubr.f32.mxu0 %v242
    %1302 = vmatmul.mubr.f32.gmra.mrb[0].mxu0 %v241
    %v1303 = vpop.f32.mrb[0].mxu0
    %v1304 = vadd.f32 0.0, %v1303
    %v1305 = vpop.f32.mrb[0].mxu0
    %1306 = vmatprep.mubr.f32.mxu0 %v260
    %1307 = vmatmul.mubr.f32.gmra.mrb[0].mxu0 %v259
    %v1308 = vpop.f32.mrb[0].mxu0
    %v1309 = vadd.f32 0.0, %v1308
    %v1310 = vpop.f32.mrb[0].mxu0
    %1311 = vmatprep.mubr.f32.mxu0 %v278
    %1312 = vmatmul.mubr.f32.gmra.mrb[0].mxu0 %v277
    %v1313 = vpop.f32.mrb[0].mxu0
    %v1314 = vadd.f32 0.0, %v1313
    %v1315 = vpop.f32.mrb[0].mxu0
    %1316 = vmatprep.mubr.f32.mxu0 %v296
    %1317 = vmatmul.mubr.f32.gmra.mrb[0].mxu0 %v295
    %v1318 = vpop.f32.mrb[0].mxu0
    %v1319 = vadd.f32 0.0, %v1318
    %v1320 = vpop.f32.mrb[0].mxu0
    %1321 = vmatprep.mubr.f32.mxu0 %v314
    %1322 = vmatmul.mubr.f32.gmra.mrb[0].mxu0 %v313
    %v1323 = vpop.f32.mrb[0].mxu0
    %v1324 = vadd.f32 0.0, %v1323
    %v1325 = vpop.f32.mrb[0].mxu0
    %1326 = vmatprep.mubr.f32.mxu0 %v332
    %1327 = vmatmul.mubr.f32.gmra.mrb[0].mxu0 %v331
    %v1328 = vpop.f32.mrb[0].mxu0
    %v1329 = vadd.f32 0.0, %v1328
    %v1330 = vpop.f32.mrb[0].mxu0
    %1331 = vmatprep.mubr.f32.mxu0 %v350
    %1332 = vmatmul.mubr.f32.gmra.mrb[0].mxu0 %v349
    %v1333 = vpop.f32.mrb[0].mxu0
    %v1334 = vadd.f32 0.0, %v1333
    %v1335 = vpop.f32.mrb[0].mxu0
    %1336 = vmatprep.mubr.f32.mxu0 %v368
    %1337 = vmatmul.mubr.f32.gmra.mrb[0].mxu0 %v367
    %v1338 = vpop.f32.mrb[0].mxu0
    %v1339 = vadd.f32 0.0, %v1338
    %v1340 = vpop.f32.mrb[0].mxu0
    %1341 = vmatprep.mubr.f32.mxu0 %v386
    %1342 = vmatmul.mubr.f32.gmra.mrb[0].mxu0 %v385
    %v1343 = vpop.f32.mrb[0].mxu0
    %v1344 = vadd.f32 0.0, %v1343
    %v1345 = vpop.f32.mrb[0].mxu0
    %1346 = vmatprep.mubr.f32.mxu0 %v404
    %1347 = vmatmul.mubr.f32.gmra.mrb[0].mxu0 %v403
    %v1348 = vpop.f32.mrb[0].mxu0
    %v1349 = vadd.f32 0.0, %v1348
    %v1350 = vpop.f32.mrb[0].mxu0
    %1351 = vmatprep.mubr.f32.mxu0 %v422
    %1352 = vmatmul.mubr.f32.gmra.mrb[0].mxu0 %v421
    %v1353 = vpop.f32.mrb[0].mxu0
    %v1354 = vadd.f32 0.0, %v1353
    %v1355 = vpop.f32.mrb[0].mxu0
    %1356 = vmatprep.mubr.f32.mxu0 %v440
    %1357 = vmatmul.mubr.f32.gmra.mrb[0].mxu0 %v439
    %v1358 = vpop.f32.mrb[0].mxu0
    %v1359 = vadd.f32 0.0, %v1358
    %v1360 = vpop.f32.mrb[0].mxu0
    %1361 = vmatprep.mubr.f32.mxu0 %v458
    %1362 = vmatmul.mubr.f32.gmra.mrb[0].mxu0 %v457
    %v1363 = vpop.f32.mrb[0].mxu0
    %v1364 = vadd.f32 0.0, %v1363
    %v1365 = vpop.f32.mrb[0].mxu0
    %1366 = vmatprep.mubr.f32.mxu0 %v476
    %1367 = vmatmul.mubr.f32.gmra.mrb[0].mxu0 %v475
    %v1368 = vpop.f32.mrb[0].mxu0
    %v1369 = vadd.f32 0.0, %v1368
    %v1370 = vpop.f32.mrb[0].mxu0
    %1371 = vmatprep.mubr.f32.mxu0 %v494
    %1372 = vmatmul.mubr.f32.gmra.mrb[0].mxu0 %v493
    %v1373 = vpop.f32.mrb[0].mxu0
    %v1374 = vadd.f32 0.0, %v1373
    %v1375 = vpop.f32.mrb[0].mxu0
    %1376 = vmatprep.mubr.f32.mxu0 %v512
    %1377 = vmatmul.mubr.f32.gmra.mrb[0].mxu0 %v511
    %v1378 = vpop.f32.mrb[0].mxu0
    %v1379 = vadd.f32 0.0, %v1378
    %v1380 = vpop.f32.mrb[0].mxu0
    %1381 = vmatprep.mubr.f32.mxu0 %v530
    %1382 = vmatmul.mubr.f32.gmra.mrb[0].mxu0 %v529
    %v1383 = vpop.f32.mrb[0].mxu0
    %v1384 = vadd.f32 0.0, %v1383
    %v1385 = vpop.f32.mrb[0].mxu0
    %1386 = vmatprep.mubr.f32.mxu0 %v548
    %1387 = vmatmul.mubr.f32.gmra.mrb[0].mxu0 %v547
    %v1388 = vpop.f32.mrb[0].mxu0
    %v1389 = vadd.f32 0.0, %v1388
    %v1390 = vpop.f32.mrb[0].mxu0
    %1391 = vmatprep.mubr.f32.mxu0 %v566
    %1392 = vmatmul.mubr.f32.gmra.mrb[0].mxu0 %v565
    %v1393 = vpop.f32.mrb[0].mxu0
    %v1394 = vadd.f32 0.0, %v1393
    %v1395 = vpop.f32.mrb[0].mxu0
    %1396 = vmatprep.mubr.f32.mxu0 %v584
    %1397 = vmatmul.mubr.f32.gmra.mrb[0].mxu0 %v583
    %v1398 = vpop.f32.mrb[0].mxu0
    %v1399 = vadd.f32 0.0, %v1398
    %v1400 = vpop.f32.mrb[0].mxu0
    %1401 = vmatprep.mubr.f32.mxu0 %v602
    %1402 = vmatmul.mubr.f32.gmra.mrb[0].mxu0 %v601
    %v1403 = vpop.f32.mrb[0].mxu0
    %v1404 = vadd.f32 0.0, %v1403
    %v1405 = vpop.f32.mrb[0].mxu0
    %1406 = vmatprep.mubr.f32.mxu0 %v620
    %1407 = vmatmul.mubr.f32.gmra.mrb[0].mxu0 %v619
    %v1408 = vpop.f32.mrb[0].mxu0
    %v1409 = vadd.f32 0.0, %v1408
    %v1410 = vpop.f32.mrb[0].mxu0
    %1411 = vmatprep.mubr.f32.mxu0 %v638
    %1412 = vmatmul.mubr.f32.gmra.mrb[0].mxu0 %v637
    %v1413 = vpop.f32.mrb[0].mxu0
    %v1414 = vadd.f32 0.0, %v1413
    %v1415 = vpop.f32.mrb[0].mxu0
    %1416 = vmatprep.mubr.f32.mxu0 %v656
    %1417 = vmatmul.mubr.f32.gmra.mrb[0].mxu0 %v655
    %v1418 = vpop.f32.mrb[0].mxu0
    %v1419 = vadd.f32 0.0, %v1418
    %v1420 = vpop.f32.mrb[0].mxu0
    %1421 = vmatprep.mubr.f32.mxu0 %v674
    %1422 = vmatmul.mubr.f32.gmra.mrb[0].mxu0 %v673
    %v1423 = vpop.f32.mrb[0].mxu0
    %v1424 = vadd.f32 0.0, %v1423
    %v1425 = vpop.f32.mrb[0].mxu0
    %1426 = vmatprep.mubr.f32.mxu0 %v692
    %1427 = vmatmul.mubr.f32.gmra.mrb[0].mxu0 %v691
    %v1428 = vpop.f32.mrb[0].mxu0
    %v1429 = vadd.f32 0.0, %v1428
    %v1430 = vpop.f32.mrb[0].mxu0
    %1431 = vmatprep.mubr.f32.mxu0 %v710
    %1432 = vmatmul.mubr.f32.gmra.mrb[0].mxu0 %v709
    %v1433 = vpop.f32.mrb[0].mxu0
    %v1434 = vadd.f32 0.0, %v1433
    %v1435 = vpop.f32.mrb[0].mxu0
    %1436 = vmatprep.mubr.f32.mxu0 %v728
    %1437 = vmatmul.mubr.f32.gmra.mrb[0].mxu0 %v727
    %v1438 = vpop.f32.mrb[0].mxu0
    %v1439 = vadd.f32 0.0, %v1438
    %v1440 = vpop.f32.mrb[0].mxu0
    %1441 = vmatprep.mubr.f32.mxu0 %v746
    %1442 = vmatmul.mubr.f32.gmra.mrb[0].mxu0 %v745
    %v1443 = vpop.f32.mrb[0].mxu0
    %v1444 = vadd.f32 0.0, %v1443
    %v1445 = vpop.f32.mrb[0].mxu0
    %1446 = vmatprep.mubr.f32.mxu0 %v764
    %1447 = vmatmul.mubr.f32.gmra.mrb[0].mxu0 %v763
    %v1448 = vpop.f32.mrb[0].mxu0
    %v1449 = vadd.f32 0.0, %v1448
    %v1450 = vpop.f32.mrb[0].mxu0
    %1451 = vmatprep.mubr.f32.mxu0 %v782
    %1452 = vmatmul.mubr.f32.gmra.mrb[0].mxu0 %v781
    %v1453 = vpop.f32.mrb[0].mxu0
    %v1454 = vadd.f32 0.0, %v1453
    %v1455 = vpop.f32.mrb[0].mxu0
    %1456 = vmatprep.mubr.f32.mxu0 %v800
    %1457 = vmatmul.mubr.f32.gmra.mrb[0].mxu0 %v799
    %v1458 = vpop.f32.mrb[0].mxu0
    %v1459 = vadd.f32 0.0, %v1458
    %v1460 = vpop.f32.mrb[0].mxu0
    %1461 = vmatprep.mubr.f32.mxu0 %v818
    %1462 = vmatmul.mubr.f32.gmra.mrb[0].mxu0 %v817
    %v1463 = vpop.f32.mrb[0].mxu0
    %v1464 = vadd.f32 0.0, %v1463
    %v1465 = vpop.f32.mrb[0].mxu0
    %1466 = vmatprep.mubr.f32.mxu0 %v836
    %1467 = vmatmul.mubr.f32.gmra.mrb[0].mxu0 %v835
    %v1468 = vpop.f32.mrb[0].mxu0
    %v1469 = vadd.f32 0.0, %v1468
    %v1470 = vpop.f32.mrb[0].mxu0
    %1471 = vmatprep.mubr.f32.mxu0 %v854
    %1472 = vmatmul.mubr.f32.gmra.mrb[0].mxu0 %v853
    %v1473 = vpop.f32.mrb[0].mxu0
    %v1474 = vadd.f32 0.0, %v1473
    %v1475 = vpop.f32.mrb[0].mxu0
    %1476 = vmatprep.mubr.f32.mxu0 %v872
    %1477 = vmatmul.mubr.f32.gmra.mrb[0].mxu0 %v871
    %v1478 = vpop.f32.mrb[0].mxu0
    %v1479 = vadd.f32 0.0, %v1478
    %v1480 = vpop.f32.mrb[0].mxu0
    %1481 = vdwg.mxu0
    %1482 = vmatprep.subr.mxu0 0.0
    %1483 = vmatpush1.msra.mxu0 %v921
    %1484 = vmatprep.subr.mxu0 0.0
    %1485 = vmatpush1.msra.mxu0 %v922
    %1486 = vmatprep.subr.mxu0 0.0
    %1487 = vmatpush1.msra.mxu0 %v923
    %1488 = vmatprep.subr.mxu0 0.0
    %1489 = vmatpush1.msra.mxu0 %v924
    %1490 = vmatprep.subr.mxu0 0.0
    %1491 = vmatpush1.msra.mxu0 %v925
    %1492 = vmatprep.subr.mxu0 0.0
    %1493 = vmatpush1.msra.mxu0 %v926
    %1494 = vmatprep.subr.mxu0 0.0
    %1495 = vmatpush1.msra.mxu0 %v927
    %1496 = vmatprep.subr.mxu0 0.0
    %1497 = vmatpush1.msra.mxu0 %v928
    %1498 = vmatprep.subr.mxu0 0.0
    %1499 = vmatpush1.msra.mxu0 %v929
    %1500 = vmatprep.subr.mxu0 0.0
    %1501 = vmatpush1.msra.mxu0 %v930
    %1502 = vmatprep.subr.mxu0 0.0
    %1503 = vmatpush1.msra.mxu0 %v931
    %1504 = vmatprep.subr.mxu0 0.0
    %1505 = vmatpush1.msra.mxu0 %v932
    %1506 = vmatprep.subr.mxu0 0.0
    %1507 = vmatpush1.msra.mxu0 %v933
    %1508 = vmatprep.subr.mxu0 0.0
    %1509 = vmatpush1.msra.mxu0 %v934
    %1510 = vmatprep.subr.mxu0 0.0
    %1511 = vmatpush1.msra.mxu0 %v935
    %1512 = vmatprep.subr.mxu0 0.0
    %1513 = vmatpush1.msra.mxu0 %v936
    %1514 = vmatprep.subr.mxu0 0.0
    %1515 = vmatpush1.msra.mxu0 %v937
    %1516 = vmatprep.subr.mxu0 0.0
    %1517 = vmatpush1.msra.mxu0 %v938
    %1518 = vmatprep.subr.mxu0 0.0
    %1519 = vmatpush1.msra.mxu0 %v939
    %1520 = vmatprep.subr.mxu0 0.0
    %1521 = vmatpush1.msra.mxu0 %v940
    %1522 = vmatprep.subr.mxu0 0.0
    %1523 = vmatpush1.msra.mxu0 %v941
    %1524 = vmatprep.subr.mxu0 0.0
    %1525 = vmatpush1.msra.mxu0 %v942
    %1526 = vmatprep.subr.mxu0 0.0
    %1527 = vmatpush1.msra.mxu0 %v943
    %1528 = vmatprep.subr.mxu0 0.0
    %1529 = vmatpush1.msra.mxu0 %v944
    %1530 = vmatprep.subr.mxu0 0.0
    %1531 = vmatpush1.msra.mxu0 %v945
    %1532 = vmatprep.subr.mxu0 0.0
    %1533 = vmatpush1.msra.mxu0 %v946
    %1534 = vmatprep.subr.mxu0 0.0
    %1535 = vmatpush1.msra.mxu0 %v947
    %1536 = vmatprep.subr.mxu0 0.0
    %1537 = vmatpush1.msra.mxu0 %v948
    %1538 = vmatprep.subr.mxu0 0.0
    %1539 = vmatpush1.msra.mxu0 %v949
    %1540 = vmatprep.subr.mxu0 0.0
    %1541 = vmatpush1.msra.mxu0 %v950
    %1542 = vmatprep.subr.mxu0 0.0
    %1543 = vmatpush1.msra.mxu0 %v951
    %1544 = vmatprep.subr.mxu0 0.0
    %1545 = vmatpush1.msra.mxu0 %v952
    %1546 = vmatprep.mubr.f32.mxu0 %v28
    %1547 = vmatmul.mubr.f32.gmra.mrb[0].mxu0 %v27
    %v1548 = vpop.f32.mrb[0].mxu0
    %v1549 = vadd.f32 %v1244, %v1548
    %v1550 = vpop.f32.mrb[0].mxu0
    %1551 = vmatprep.mubr.f32.mxu0 %v46
    %1552 = vmatmul.mubr.f32.gmra.mrb[0].mxu0 %v45
    %v1553 = vpop.f32.mrb[0].mxu0
    %v1554 = vadd.f32 %v1249, %v1553
    %v1555 = vpop.f32.mrb[0].mxu0
    %1556 = vmatprep.mubr.f32.mxu0 %v64
    %1557 = vmatmul.mubr.f32.gmra.mrb[0].mxu0 %v63
    %v1558 = vpop.f32.mrb[0].mxu0
    %v1559 = vadd.f32 %v1254, %v1558
    %v1560 = vpop.f32.mrb[0].mxu0
    %1561 = vmatprep.mubr.f32.mxu0 %v82
    %1562 = vmatmul.mubr.f32.gmra.mrb[0].mxu0 %v81
    %v1563 = vpop.f32.mrb[0].mxu0
    %v1564 = vadd.f32 %v1259, %v1563
    %v1565 = vpop.f32.mrb[0].mxu0
    %1566 = vmatprep.mubr.f32.mxu0 %v100
    %1567 = vmatmul.mubr.f32.gmra.mrb[0].mxu0 %v99
    %v1568 = vpop.f32.mrb[0].mxu0
    %v1569 = vadd.f32 %v1264, %v1568
    %v1570 = vpop.f32.mrb[0].mxu0
    %1571 = vmatprep.mubr.f32.mxu0 %v118
    %1572 = vmatmul.mubr.f32.gmra.mrb[0].mxu0 %v117
    %v1573 = vpop.f32.mrb[0].mxu0
    %v1574 = vadd.f32 %v1269, %v1573
    %v1575 = vpop.f32.mrb[0].mxu0
    %1576 = vmatprep.mubr.f32.mxu0 %v136
    %1577 = vmatmul.mubr.f32.gmra.mrb[0].mxu0 %v135
    %v1578 = vpop.f32.mrb[0].mxu0
    %v1579 = vadd.f32 %v1274, %v1578
    %v1580 = vpop.f32.mrb[0].mxu0
    %1581 = vmatprep.mubr.f32.mxu0 %v154
    %1582 = vmatmul.mubr.f32.gmra.mrb[0].mxu0 %v153
    %v1583 = vpop.f32.mrb[0].mxu0
    %v1584 = vadd.f32 %v1279, %v1583
    %v1585 = vpop.f32.mrb[0].mxu0
    %1586 = vmatprep.mubr.f32.mxu0 %v172
    %1587 = vmatmul.mubr.f32.gmra.mrb[0].mxu0 %v171
    %v1588 = vpop.f32.mrb[0].mxu0
    %v1589 = vadd.f32 %v1284, %v1588
    %v1590 = vpop.f32.mrb[0].mxu0
    %1591 = vmatprep.mubr.f32.mxu0 %v190
    %1592 = vmatmul.mubr.f32.gmra.mrb[0].mxu0 %v189
    %v1593 = vpop.f32.mrb[0].mxu0
    %v1594 = vadd.f32 %v1289, %v1593
    %v1595 = vpop.f32.mrb[0].mxu0
    %1596 = vmatprep.mubr.f32.mxu0 %v208
    %1597 = vmatmul.mubr.f32.gmra.mrb[0].mxu0 %v207
    %v1598 = vpop.f32.mrb[0].mxu0
    %v1599 = vadd.f32 %v1294, %v1598
    %v1600 = vpop.f32.mrb[0].mxu0
    %1601 = vmatprep.mubr.f32.mxu0 %v226
    %1602 = vmatmul.mubr.f32.gmra.mrb[0].mxu0 %v225
    %v1603 = vpop.f32.mrb[0].mxu0
    %v1604 = vadd.f32 %v1299, %v1603
    %v1605 = vpop.f32.mrb[0].mxu0
    %1606 = vmatprep.mubr.f32.mxu0 %v244
    %1607 = vmatmul.mubr.f32.gmra.mrb[0].mxu0 %v243
    %v1608 = vpop.f32.mrb[0].mxu0
    %v1609 = vadd.f32 %v1304, %v1608
    %v1610 = vpop.f32.mrb[0].mxu0
    %1611 = vmatprep.mubr.f32.mxu0 %v262
    %1612 = vmatmul.mubr.f32.gmra.mrb[0].mxu0 %v261
    %v1613 = vpop.f32.mrb[0].mxu0
    %v1614 = vadd.f32 %v1309, %v1613
    %v1615 = vpop.f32.mrb[0].mxu0
    %1616 = vmatprep.mubr.f32.mxu0 %v280
    %1617 = vmatmul.mubr.f32.gmra.mrb[0].mxu0 %v279
    %v1618 = vpop.f32.mrb[0].mxu0
    %v1619 = vadd.f32 %v1314, %v1618
    %v1620 = vpop.f32.mrb[0].mxu0
    %1621 = vmatprep.mubr.f32.mxu0 %v298
    %1622 = vmatmul.mubr.f32.gmra.mrb[0].mxu0 %v297
    %v1623 = vpop.f32.mrb[0].mxu0
    %v1624 = vadd.f32 %v1319, %v1623
    %v1625 = vpop.f32.mrb[0].mxu0
    %1626 = vmatprep.mubr.f32.mxu0 %v316
    %1627 = vmatmul.mubr.f32.gmra.mrb[0].mxu0 %v315
    %v1628 = vpop.f32.mrb[0].mxu0
    %v1629 = vadd.f32 %v1324, %v1628
    %v1630 = vpop.f32.mrb[0].mxu0
    %1631 = vmatprep.mubr.f32.mxu0 %v334
    %1632 = vmatmul.mubr.f32.gmra.mrb[0].mxu0 %v333
    %v1633 = vpop.f32.mrb[0].mxu0
    %v1634 = vadd.f32 %v1329, %v1633
    %v1635 = vpop.f32.mrb[0].mxu0
    %1636 = vmatprep.mubr.f32.mxu0 %v352
    %1637 = vmatmul.mubr.f32.gmra.mrb[0].mxu0 %v351
    %v1638 = vpop.f32.mrb[0].mxu0
    %v1639 = vadd.f32 %v1334, %v1638
    %v1640 = vpop.f32.mrb[0].mxu0
    %1641 = vmatprep.mubr.f32.mxu0 %v370
    %1642 = vmatmul.mubr.f32.gmra.mrb[0].mxu0 %v369
    %v1643 = vpop.f32.mrb[0].mxu0
    %v1644 = vadd.f32 %v1339, %v1643
    %v1645 = vpop.f32.mrb[0].mxu0
    %1646 = vmatprep.mubr.f32.mxu0 %v388
    %1647 = vmatmul.mubr.f32.gmra.mrb[0].mxu0 %v387
    %v1648 = vpop.f32.mrb[0].mxu0
    %v1649 = vadd.f32 %v1344, %v1648
    %v1650 = vpop.f32.mrb[0].mxu0
    %1651 = vmatprep.mubr.f32.mxu0 %v406
    %1652 = vmatmul.mubr.f32.gmra.mrb[0].mxu0 %v405
    %v1653 = vpop.f32.mrb[0].mxu0
    %v1654 = vadd.f32 %v1349, %v1653
    %v1655 = vpop.f32.mrb[0].mxu0
    %1656 = vmatprep.mubr.f32.mxu0 %v424
    %1657 = vmatmul.mubr.f32.gmra.mrb[0].mxu0 %v423
    %v1658 = vpop.f32.mrb[0].mxu0
    %v1659 = vadd.f32 %v1354, %v1658
    %v1660 = vpop.f32.mrb[0].mxu0
    %1661 = vmatprep.mubr.f32.mxu0 %v442
    %1662 = vmatmul.mubr.f32.gmra.mrb[0].mxu0 %v441
    %v1663 = vpop.f32.mrb[0].mxu0
    %v1664 = vadd.f32 %v1359, %v1663
    %v1665 = vpop.f32.mrb[0].mxu0
    %1666 = vmatprep.mubr.f32.mxu0 %v460
    %1667 = vmatmul.mubr.f32.gmra.mrb[0].mxu0 %v459
    %v1668 = vpop.f32.mrb[0].mxu0
    %v1669 = vadd.f32 %v1364, %v1668
    %v1670 = vpop.f32.mrb[0].mxu0
    %1671 = vmatprep.mubr.f32.mxu0 %v478
    %1672 = vmatmul.mubr.f32.gmra.mrb[0].mxu0 %v477
    %v1673 = vpop.f32.mrb[0].mxu0
    %v1674 = vadd.f32 %v1369, %v1673
    %v1675 = vpop.f32.mrb[0].mxu0
    %1676 = vmatprep.mubr.f32.mxu0 %v496
    %1677 = vmatmul.mubr.f32.gmra.mrb[0].mxu0 %v495
    %v1678 = vpop.f32.mrb[0].mxu0
    %v1679 = vadd.f32 %v1374, %v1678
    %v1680 = vpop.f32.mrb[0].mxu0
    %1681 = vmatprep.mubr.f32.mxu0 %v514
    %1682 = vmatmul.mubr.f32.gmra.mrb[0].mxu0 %v513
    %v1683 = vpop.f32.mrb[0].mxu0
    %v1684 = vadd.f32 %v1379, %v1683
    %v1685 = vpop.f32.mrb[0].mxu0
    %1686 = vmatprep.mubr.f32.mxu0 %v532
    %1687 = vmatmul.mubr.f32.gmra.mrb[0].mxu0 %v531
    %v1688 = vpop.f32.mrb[0].mxu0
    %v1689 = vadd.f32 %v1384, %v1688
    %v1690 = vpop.f32.mrb[0].mxu0
    %1691 = vmatprep.mubr.f32.mxu0 %v550
    %1692 = vmatmul.mubr.f32.gmra.mrb[0].mxu0 %v549
    %v1693 = vpop.f32.mrb[0].mxu0
    %v1694 = vadd.f32 %v1389, %v1693
    %v1695 = vpop.f32.mrb[0].mxu0
    %1696 = vmatprep.mubr.f32.mxu0 %v568
    %1697 = vmatmul.mubr.f32.gmra.mrb[0].mxu0 %v567
    %v1698 = vpop.f32.mrb[0].mxu0
    %v1699 = vadd.f32 %v1394, %v1698
    %v1700 = vpop.f32.mrb[0].mxu0
    %1701 = vmatprep.mubr.f32.mxu0 %v586
    %1702 = vmatmul.mubr.f32.gmra.mrb[0].mxu0 %v585
    %v1703 = vpop.f32.mrb[0].mxu0
    %v1704 = vadd.f32 %v1399, %v1703
    %v1705 = vpop.f32.mrb[0].mxu0
    %1706 = vmatprep.mubr.f32.mxu0 %v604
    %1707 = vmatmul.mubr.f32.gmra.mrb[0].mxu0 %v603
    %v1708 = vpop.f32.mrb[0].mxu0
    %v1709 = vadd.f32 %v1404, %v1708
    %v1710 = vpop.f32.mrb[0].mxu0
    %1711 = vmatprep.mubr.f32.mxu0 %v622
    %1712 = vmatmul.mubr.f32.gmra.mrb[0].mxu0 %v621
    %v1713 = vpop.f32.mrb[0].mxu0
    %v1714 = vadd.f32 %v1409, %v1713
    %v1715 = vpop.f32.mrb[0].mxu0
    %1716 = vmatprep.mubr.f32.mxu0 %v640
    %1717 = vmatmul.mubr.f32.gmra.mrb[0].mxu0 %v639
    %v1718 = vpop.f32.mrb[0].mxu0
    %v1719 = vadd.f32 %v1414, %v1718
    %v1720 = vpop.f32.mrb[0].mxu0
    %1721 = vmatprep.mubr.f32.mxu0 %v658
    %1722 = vmatmul.mubr.f32.gmra.mrb[0].mxu0 %v657
    %v1723 = vpop.f32.mrb[0].mxu0
    %v1724 = vadd.f32 %v1419, %v1723
    %v1725 = vpop.f32.mrb[0].mxu0
    %1726 = vmatprep.mubr.f32.mxu0 %v676
    %1727 = vmatmul.mubr.f32.gmra.mrb[0].mxu0 %v675
    %v1728 = vpop.f32.mrb[0].mxu0
    %v1729 = vadd.f32 %v1424, %v1728
    %v1730 = vpop.f32.mrb[0].mxu0
    %1731 = vmatprep.mubr.f32.mxu0 %v694
    %1732 = vmatmul.mubr.f32.gmra.mrb[0].mxu0 %v693
    %v1733 = vpop.f32.mrb[0].mxu0
    %v1734 = vadd.f32 %v1429, %v1733
    %v1735 = vpop.f32.mrb[0].mxu0
    %1736 = vmatprep.mubr.f32.mxu0 %v712
    %1737 = vmatmul.mubr.f32.gmra.mrb[0].mxu0 %v711
    %v1738 = vpop.f32.mrb[0].mxu0
    %v1739 = vadd.f32 %v1434, %v1738
    %v1740 = vpop.f32.mrb[0].mxu0
    %1741 = vmatprep.mubr.f32.mxu0 %v730
    %1742 = vmatmul.mubr.f32.gmra.mrb[0].mxu0 %v729
    %v1743 = vpop.f32.mrb[0].mxu0
    %v1744 = vadd.f32 %v1439, %v1743
    %v1745 = vpop.f32.mrb[0].mxu0
    %1746 = vmatprep.mubr.f32.mxu0 %v748
    %1747 = vmatmul.mubr.f32.gmra.mrb[0].mxu0 %v747
    %v1748 = vpop.f32.mrb[0].mxu0
    %v1749 = vadd.f32 %v1444, %v1748
    %v1750 = vpop.f32.mrb[0].mxu0
    %1751 = vmatprep.mubr.f32.mxu0 %v766
    %1752 = vmatmul.mubr.f32.gmra.mrb[0].mxu0 %v765
    %v1753 = vpop.f32.mrb[0].mxu0
    %v1754 = vadd.f32 %v1449, %v1753
    %v1755 = vpop.f32.mrb[0].mxu0
    %1756 = vmatprep.mubr.f32.mxu0 %v784
    %1757 = vmatmul.mubr.f32.gmra.mrb[0].mxu0 %v783
    %v1758 = vpop.f32.mrb[0].mxu0
    %v1759 = vadd.f32 %v1454, %v1758
    %v1760 = vpop.f32.mrb[0].mxu0
    %1761 = vmatprep.mubr.f32.mxu0 %v802
    %1762 = vmatmul.mubr.f32.gmra.mrb[0].mxu0 %v801
    %v1763 = vpop.f32.mrb[0].mxu0
    %v1764 = vadd.f32 %v1459, %v1763
    %v1765 = vpop.f32.mrb[0].mxu0
    %1766 = vmatprep.mubr.f32.mxu0 %v820
    %1767 = vmatmul.mubr.f32.gmra.mrb[0].mxu0 %v819
    %v1768 = vpop.f32.mrb[0].mxu0
    %v1769 = vadd.f32 %v1464, %v1768
    %v1770 = vpop.f32.mrb[0].mxu0
    %1771 = vmatprep.mubr.f32.mxu0 %v838
    %1772 = vmatmul.mubr.f32.gmra.mrb[0].mxu0 %v837
    %v1773 = vpop.f32.mrb[0].mxu0
    %v1774 = vadd.f32 %v1469, %v1773
    %v1775 = vpop.f32.mrb[0].mxu0
    %1776 = vmatprep.mubr.f32.mxu0 %v856
    %1777 = vmatmul.mubr.f32.gmra.mrb[0].mxu0 %v855
    %v1778 = vpop.f32.mrb[0].mxu0
    %v1779 = vadd.f32 %v1474, %v1778
    %v1780 = vpop.f32.mrb[0].mxu0
    %1781 = vmatprep.mubr.f32.mxu0 %v874
    %1782 = vmatmul.mubr.f32.gmra.mrb[0].mxu0 %v873
    %v1783 = vpop.f32.mrb[0].mxu0
    %v1784 = vadd.f32 %v1479, %v1783
    %v1785 = vpop.f32.mrb[0].mxu0
    %1786 = vdwg.mxu0
    %1787 = vmatprep.subr.mxu0 0.0
    %1788 = vmatpush1.msra.mxu0 %v953
    %1789 = vmatprep.subr.mxu0 0.0
    %1790 = vmatpush1.msra.mxu0 %v954
    %1791 = vmatprep.subr.mxu0 0.0
    %1792 = vmatpush1.msra.mxu0 %v955
    %1793 = vmatprep.subr.mxu0 0.0
    %1794 = vmatpush1.msra.mxu0 %v956
    %1795 = vmatprep.subr.mxu0 0.0
    %1796 = vmatpush1.msra.mxu0 %v957
    %1797 = vmatprep.subr.mxu0 0.0
    %1798 = vmatpush1.msra.mxu0 %v958
    %1799 = vmatprep.subr.mxu0 0.0
    %1800 = vmatpush1.msra.mxu0 %v959
    %1801 = vmatprep.subr.mxu0 0.0
    %1802 = vmatpush1.msra.mxu0 %v960
    %1803 = vmatprep.subr.mxu0 0.0
    %1804 = vmatpush1.msra.mxu0 %v961
    %1805 = vmatprep.subr.mxu0 0.0
    %1806 = vmatpush1.msra.mxu0 %v962
    %1807 = vmatprep.subr.mxu0 0.0
    %1808 = vmatpush1.msra.mxu0 %v963
    %1809 = vmatprep.subr.mxu0 0.0
    %1810 = vmatpush1.msra.mxu0 %v964
    %1811 = vmatprep.subr.mxu0 0.0
    %1812 = vmatpush1.msra.mxu0 %v965
    %1813 = vmatprep.subr.mxu0 0.0
    %1814 = vmatpush1.msra.mxu0 %v966
    %1815 = vmatprep.subr.mxu0 0.0
    %1816 = vmatpush1.msra.mxu0 %v967
    %1817 = vmatprep.subr.mxu0 0.0
    %1818 = vmatpush1.msra.mxu0 %v968
    %1819 = vmatprep.subr.mxu0 0.0
    %1820 = vmatpush1.msra.mxu0 %v969
    %1821 = vmatprep.subr.mxu0 0.0
    %1822 = vmatpush1.msra.mxu0 %v970
    %1823 = vmatprep.subr.mxu0 0.0
    %1824 = vmatpush1.msra.mxu0 %v971
    %1825 = vmatprep.subr.mxu0 0.0
    %1826 = vmatpush1.msra.mxu0 %v972
    %1827 = vmatprep.subr.mxu0 0.0
    %1828 = vmatpush1.msra.mxu0 %v973
    %1829 = vmatprep.subr.mxu0 0.0
    %1830 = vmatpush1.msra.mxu0 %v974
    %1831 = vmatprep.subr.mxu0 0.0
    %1832 = vmatpush1.msra.mxu0 %v975
    %1833 = vmatprep.subr.mxu0 0.0
    %1834 = vmatpush1.msra.mxu0 %v976
    %1835 = vmatprep.subr.mxu0 0.0
    %1836 = vmatpush1.msra.mxu0 %v977
    %1837 = vmatprep.subr.mxu0 0.0
    %1838 = vmatpush1.msra.mxu0 %v978
    %1839 = vmatprep.subr.mxu0 0.0
    %1840 = vmatpush1.msra.mxu0 %v979
    %1841 = vmatprep.subr.mxu0 0.0
    %1842 = vmatpush1.msra.mxu0 %v980
    %1843 = vmatprep.subr.mxu0 0.0
    %1844 = vmatpush1.msra.mxu0 %v981
    %1845 = vmatprep.subr.mxu0 0.0
    %1846 = vmatpush1.msra.mxu0 %v982
    %1847 = vmatprep.subr.mxu0 0.0
    %1848 = vmatpush1.msra.mxu0 %v983
    %1849 = vmatprep.subr.mxu0 0.0
    %1850 = vmatpush1.msra.mxu0 %v984
    %1851 = vmatprep.mubr.f32.mxu0 %v30
    %1852 = vmatmul.mubr.f32.gmra.mrb[0].mxu0 %v29
    %v1853 = vpop.f32.mrb[0].mxu0
    %v1854 = vadd.f32 %v1549, %v1853
    %v1855 = vpop.f32.mrb[0].mxu0
    %1856 = vmatprep.mubr.f32.mxu0 %v48
    %1857 = vmatmul.mubr.f32.gmra.mrb[0].mxu0 %v47
    %v1858 = vpop.f32.mrb[0].mxu0
    %v1859 = vadd.f32 %v1554, %v1858
    %v1860 = vpop.f32.mrb[0].mxu0
    %1861 = vmatprep.mubr.f32.mxu0 %v66
    %1862 = vmatmul.mubr.f32.gmra.mrb[0].mxu0 %v65
    %v1863 = vpop.f32.mrb[0].mxu0
    %v1864 = vadd.f32 %v1559, %v1863
    %v1865 = vpop.f32.mrb[0].mxu0
    %1866 = vmatprep.mubr.f32.mxu0 %v84
    %1867 = vmatmul.mubr.f32.gmra.mrb[0].mxu0 %v83
    %v1868 = vpop.f32.mrb[0].mxu0
    %v1869 = vadd.f32 %v1564, %v1868
    %v1870 = vpop.f32.mrb[0].mxu0
    %1871 = vmatprep.mubr.f32.mxu0 %v102
    %1872 = vmatmul.mubr.f32.gmra.mrb[0].mxu0 %v101
    %v1873 = vpop.f32.mrb[0].mxu0
    %v1874 = vadd.f32 %v1569, %v1873
    %v1875 = vpop.f32.mrb[0].mxu0
    %1876 = vmatprep.mubr.f32.mxu0 %v120
    %1877 = vmatmul.mubr.f32.gmra.mrb[0].mxu0 %v119
    %v1878 = vpop.f32.mrb[0].mxu0
    %v1879 = vadd.f32 %v1574, %v1878
    %v1880 = vpop.f32.mrb[0].mxu0
    %1881 = vmatprep.mubr.f32.mxu0 %v138
    %1882 = vmatmul.mubr.f32.gmra.mrb[0].mxu0 %v137
    %v1883 = vpop.f32.mrb[0].mxu0
    %v1884 = vadd.f32 %v1579, %v1883
    %v1885 = vpop.f32.mrb[0].mxu0
    %1886 = vmatprep.mubr.f32.mxu0 %v156
    %1887 = vmatmul.mubr.f32.gmra.mrb[0].mxu0 %v155
    %v1888 = vpop.f32.mrb[0].mxu0
    %v1889 = vadd.f32 %v1584, %v1888
    %v1890 = vpop.f32.mrb[0].mxu0
    %1891 = vmatprep.mubr.f32.mxu0 %v174
    %1892 = vmatmul.mubr.f32.gmra.mrb[0].mxu0 %v173
    %v1893 = vpop.f32.mrb[0].mxu0
    %v1894 = vadd.f32 %v1589, %v1893
    %v1895 = vpop.f32.mrb[0].mxu0
    %1896 = vmatprep.mubr.f32.mxu0 %v192
    %1897 = vmatmul.mubr.f32.gmra.mrb[0].mxu0 %v191
    %v1898 = vpop.f32.mrb[0].mxu0
    %v1899 = vadd.f32 %v1594, %v1898
    %v1900 = vpop.f32.mrb[0].mxu0
    %1901 = vmatprep.mubr.f32.mxu0 %v210
    %1902 = vmatmul.mubr.f32.gmra.mrb[0].mxu0 %v209
    %v1903 = vpop.f32.mrb[0].mxu0
    %v1904 = vadd.f32 %v1599, %v1903
    %v1905 = vpop.f32.mrb[0].mxu0
    %1906 = vmatprep.mubr.f32.mxu0 %v228
    %1907 = vmatmul.mubr.f32.gmra.mrb[0].mxu0 %v227
    %v1908 = vpop.f32.mrb[0].mxu0
    %v1909 = vadd.f32 %v1604, %v1908
    %v1910 = vpop.f32.mrb[0].mxu0
    %1911 = vmatprep.mubr.f32.mxu0 %v246
    %1912 = vmatmul.mubr.f32.gmra.mrb[0].mxu0 %v245
    %v1913 = vpop.f32.mrb[0].mxu0
    %v1914 = vadd.f32 %v1609, %v1913
    %v1915 = vpop.f32.mrb[0].mxu0
    %1916 = vmatprep.mubr.f32.mxu0 %v264
    %1917 = vmatmul.mubr.f32.gmra.mrb[0].mxu0 %v263
    %v1918 = vpop.f32.mrb[0].mxu0
    %v1919 = vadd.f32 %v1614, %v1918
    %v1920 = vpop.f32.mrb[0].mxu0
    %1921 = vmatprep.mubr.f32.mxu0 %v282
    %1922 = vmatmul.mubr.f32.gmra.mrb[0].mxu0 %v281
    %v1923 = vpop.f32.mrb[0].mxu0
    %v1924 = vadd.f32 %v1619, %v1923
    %v1925 = vpop.f32.mrb[0].mxu0
    %1926 = vmatprep.mubr.f32.mxu0 %v300
    %1927 = vmatmul.mubr.f32.gmra.mrb[0].mxu0 %v299
    %v1928 = vpop.f32.mrb[0].mxu0
    %v1929 = vadd.f32 %v1624, %v1928
    %v1930 = vpop.f32.mrb[0].mxu0
    %1931 = vmatprep.mubr.f32.mxu0 %v318
    %1932 = vmatmul.mubr.f32.gmra.mrb[0].mxu0 %v317
    %v1933 = vpop.f32.mrb[0].mxu0
    %v1934 = vadd.f32 %v1629, %v1933
    %v1935 = vpop.f32.mrb[0].mxu0
    %1936 = vmatprep.mubr.f32.mxu0 %v336
    %1937 = vmatmul.mubr.f32.gmra.mrb[0].mxu0 %v335
    %v1938 = vpop.f32.mrb[0].mxu0
    %v1939 = vadd.f32 %v1634, %v1938
    %v1940 = vpop.f32.mrb[0].mxu0
    %1941 = vmatprep.mubr.f32.mxu0 %v354
    %1942 = vmatmul.mubr.f32.gmra.mrb[0].mxu0 %v353
    %v1943 = vpop.f32.mrb[0].mxu0
    %v1944 = vadd.f32 %v1639, %v1943
    %v1945 = vpop.f32.mrb[0].mxu0
    %1946 = vmatprep.mubr.f32.mxu0 %v372
    %1947 = vmatmul.mubr.f32.gmra.mrb[0].mxu0 %v371
    %v1948 = vpop.f32.mrb[0].mxu0
    %v1949 = vadd.f32 %v1644, %v1948
    %v1950 = vpop.f32.mrb[0].mxu0
    %1951 = vmatprep.mubr.f32.mxu0 %v390
    %1952 = vmatmul.mubr.f32.gmra.mrb[0].mxu0 %v389
    %v1953 = vpop.f32.mrb[0].mxu0
    %v1954 = vadd.f32 %v1649, %v1953
    %v1955 = vpop.f32.mrb[0].mxu0
    %1956 = vmatprep.mubr.f32.mxu0 %v408
    %1957 = vmatmul.mubr.f32.gmra.mrb[0].mxu0 %v407
    %v1958 = vpop.f32.mrb[0].mxu0
    %v1959 = vadd.f32 %v1654, %v1958
    %v1960 = vpop.f32.mrb[0].mxu0
    %1961 = vmatprep.mubr.f32.mxu0 %v426
    %1962 = vmatmul.mubr.f32.gmra.mrb[0].mxu0 %v425
    %v1963 = vpop.f32.mrb[0].mxu0
    %v1964 = vadd.f32 %v1659, %v1963
    %v1965 = vpop.f32.mrb[0].mxu0
    %1966 = vmatprep.mubr.f32.mxu0 %v444
    %1967 = vmatmul.mubr.f32.gmra.mrb[0].mxu0 %v443
    %v1968 = vpop.f32.mrb[0].mxu0
    %v1969 = vadd.f32 %v1664, %v1968
    %v1970 = vpop.f32.mrb[0].mxu0
    %1971 = vmatprep.mubr.f32.mxu0 %v462
    %1972 = vmatmul.mubr.f32.gmra.mrb[0].mxu0 %v461
    %v1973 = vpop.f32.mrb[0].mxu0
    %v1974 = vadd.f32 %v1669, %v1973
    %v1975 = vpop.f32.mrb[0].mxu0
    %1976 = vmatprep.mubr.f32.mxu0 %v480
    %1977 = vmatmul.mubr.f32.gmra.mrb[0].mxu0 %v479
    %v1978 = vpop.f32.mrb[0].mxu0
    %v1979 = vadd.f32 %v1674, %v1978
    %v1980 = vpop.f32.mrb[0].mxu0
    %1981 = vmatprep.mubr.f32.mxu0 %v498
    %1982 = vmatmul.mubr.f32.gmra.mrb[0].mxu0 %v497
    %v1983 = vpop.f32.mrb[0].mxu0
    %v1984 = vadd.f32 %v1679, %v1983
    %v1985 = vpop.f32.mrb[0].mxu0
    %1986 = vmatprep.mubr.f32.mxu0 %v516
    %1987 = vmatmul.mubr.f32.gmra.mrb[0].mxu0 %v515
    %v1988 = vpop.f32.mrb[0].mxu0
    %v1989 = vadd.f32 %v1684, %v1988
    %v1990 = vpop.f32.mrb[0].mxu0
    %1991 = vmatprep.mubr.f32.mxu0 %v534
    %1992 = vmatmul.mubr.f32.gmra.mrb[0].mxu0 %v533
    %v1993 = vpop.f32.mrb[0].mxu0
    %v1994 = vadd.f32 %v1689, %v1993
    %v1995 = vpop.f32.mrb[0].mxu0
    %1996 = vmatprep.mubr.f32.mxu0 %v552
    %1997 = vmatmul.mubr.f32.gmra.mrb[0].mxu0 %v551
    %v1998 = vpop.f32.mrb[0].mxu0
    %v1999 = vadd.f32 %v1694, %v1998
    %v2000 = vpop.f32.mrb[0].mxu0
    %2001 = vmatprep.mubr.f32.mxu0 %v570
    %2002 = vmatmul.mubr.f32.gmra.mrb[0].mxu0 %v569
    %v2003 = vpop.f32.mrb[0].mxu0
    %v2004 = vadd.f32 %v1699, %v2003
    %v2005 = vpop.f32.mrb[0].mxu0
    %2006 = vmatprep.mubr.f32.mxu0 %v588
    %2007 = vmatmul.mubr.f32.gmra.mrb[0].mxu0 %v587
    %v2008 = vpop.f32.mrb[0].mxu0
    %v2009 = vadd.f32 %v1704, %v2008
    %v2010 = vpop.f32.mrb[0].mxu0
    %2011 = vmatprep.mubr.f32.mxu0 %v606
    %2012 = vmatmul.mubr.f32.gmra.mrb[0].mxu0 %v605
    %v2013 = vpop.f32.mrb[0].mxu0
    %v2014 = vadd.f32 %v1709, %v2013
    %v2015 = vpop.f32.mrb[0].mxu0
    %2016 = vmatprep.mubr.f32.mxu0 %v624
    %2017 = vmatmul.mubr.f32.gmra.mrb[0].mxu0 %v623
    %v2018 = vpop.f32.mrb[0].mxu0
    %v2019 = vadd.f32 %v1714, %v2018
    %v2020 = vpop.f32.mrb[0].mxu0
    %2021 = vmatprep.mubr.f32.mxu0 %v642
    %2022 = vmatmul.mubr.f32.gmra.mrb[0].mxu0 %v641
    %v2023 = vpop.f32.mrb[0].mxu0
    %v2024 = vadd.f32 %v1719, %v2023
    %v2025 = vpop.f32.mrb[0].mxu0
    %2026 = vmatprep.mubr.f32.mxu0 %v660
    %2027 = vmatmul.mubr.f32.gmra.mrb[0].mxu0 %v659
    %v2028 = vpop.f32.mrb[0].mxu0
    %v2029 = vadd.f32 %v1724, %v2028
    %v2030 = vpop.f32.mrb[0].mxu0
    %2031 = vmatprep.mubr.f32.mxu0 %v678
    %2032 = vmatmul.mubr.f32.gmra.mrb[0].mxu0 %v677
    %v2033 = vpop.f32.mrb[0].mxu0
    %v2034 = vadd.f32 %v1729, %v2033
    %v2035 = vpop.f32.mrb[0].mxu0
    %2036 = vmatprep.mubr.f32.mxu0 %v696
    %2037 = vmatmul.mubr.f32.gmra.mrb[0].mxu0 %v695
    %v2038 = vpop.f32.mrb[0].mxu0
    %v2039 = vadd.f32 %v1734, %v2038
    %v2040 = vpop.f32.mrb[0].mxu0
    %2041 = vmatprep.mubr.f32.mxu0 %v714
    %2042 = vmatmul.mubr.f32.gmra.mrb[0].mxu0 %v713
    %v2043 = vpop.f32.mrb[0].mxu0
    %v2044 = vadd.f32 %v1739, %v2043
    %v2045 = vpop.f32.mrb[0].mxu0
    %2046 = vmatprep.mubr.f32.mxu0 %v732
    %2047 = vmatmul.mubr.f32.gmra.mrb[0].mxu0 %v731
    %v2048 = vpop.f32.mrb[0].mxu0
    %v2049 = vadd.f32 %v1744, %v2048
    %v2050 = vpop.f32.mrb[0].mxu0
    %2051 = vmatprep.mubr.f32.mxu0 %v750
    %2052 = vmatmul.mubr.f32.gmra.mrb[0].mxu0 %v749
    %v2053 = vpop.f32.mrb[0].mxu0
    %v2054 = vadd.f32 %v1749, %v2053
    %v2055 = vpop.f32.mrb[0].mxu0
    %2056 = vmatprep.mubr.f32.mxu0 %v768
    %2057 = vmatmul.mubr.f32.gmra.mrb[0].mxu0 %v767
    %v2058 = vpop.f32.mrb[0].mxu0
    %v2059 = vadd.f32 %v1754, %v2058
    %v2060 = vpop.f32.mrb[0].mxu0
    %2061 = vmatprep.mubr.f32.mxu0 %v786
    %2062 = vmatmul.mubr.f32.gmra.mrb[0].mxu0 %v785
    %v2063 = vpop.f32.mrb[0].mxu0
    %v2064 = vadd.f32 %v1759, %v2063
    %v2065 = vpop.f32.mrb[0].mxu0
    %2066 = vmatprep.mubr.f32.mxu0 %v804
    %2067 = vmatmul.mubr.f32.gmra.mrb[0].mxu0 %v803
    %v2068 = vpop.f32.mrb[0].mxu0
    %v2069 = vadd.f32 %v1764, %v2068
    %v2070 = vpop.f32.mrb[0].mxu0
    %2071 = vmatprep.mubr.f32.mxu0 %v822
    %2072 = vmatmul.mubr.f32.gmra.mrb[0].mxu0 %v821
    %v2073 = vpop.f32.mrb[0].mxu0
    %v2074 = vadd.f32 %v1769, %v2073
    %v2075 = vpop.f32.mrb[0].mxu0
    %2076 = vmatprep.mubr.f32.mxu0 %v840
    %2077 = vmatmul.mubr.f32.gmra.mrb[0].mxu0 %v839
    %v2078 = vpop.f32.mrb[0].mxu0
    %v2079 = vadd.f32 %v1774, %v2078
    %v2080 = vpop.f32.mrb[0].mxu0
    %2081 = vmatprep.mubr.f32.mxu0 %v858
    %2082 = vmatmul.mubr.f32.gmra.mrb[0].mxu0 %v857
    %v2083 = vpop.f32.mrb[0].mxu0
    %v2084 = vadd.f32 %v1779, %v2083
    %v2085 = vpop.f32.mrb[0].mxu0
    %2086 = vmatprep.mubr.f32.mxu0 %v876
    %2087 = vmatmul.mubr.f32.gmra.mrb[0].mxu0 %v875
    %v2088 = vpop.f32.mrb[0].mxu0
    %v2089 = vadd.f32 %v1784, %v2088
    %v2090 = vpop.f32.mrb[0].mxu0
    %2091 = vdwg.mxu0
    %2092 = vmatprep.subr.mxu0 0.0
    %2093 = vmatpush1.msra.mxu0 %v985
    %2094 = vmatprep.subr.mxu0 0.0
    %2095 = vmatpush1.msra.mxu0 %v986
    %2096 = vmatprep.subr.mxu0 0.0
    %2097 = vmatpush1.msra.mxu0 %v987
    %2098 = vmatprep.subr.mxu0 0.0
    %2099 = vmatpush1.msra.mxu0 %v988
    %2100 = vmatprep.subr.mxu0 0.0
    %2101 = vmatpush1.msra.mxu0 %v989
    %2102 = vmatprep.subr.mxu0 0.0
    %2103 = vmatpush1.msra.mxu0 %v990
    %2104 = vmatprep.subr.mxu0 0.0
    %2105 = vmatpush1.msra.mxu0 %v991
    %2106 = vmatprep.subr.mxu0 0.0
    %2107 = vmatpush1.msra.mxu0 %v992
    %2108 = vmatprep.subr.mxu0 0.0
    %2109 = vmatpush1.msra.mxu0 %v993
    %2110 = vmatprep.subr.mxu0 0.0
    %2111 = vmatpush1.msra.mxu0 %v994
    %2112 = vmatprep.subr.mxu0 0.0
    %2113 = vmatpush1.msra.mxu0 %v995
    %2114 = vmatprep.subr.mxu0 0.0
    %2115 = vmatpush1.msra.mxu0 %v996
    %2116 = vmatprep.subr.mxu0 0.0
    %2117 = vmatpush1.msra.mxu0 %v997
    %2118 = vmatprep.subr.mxu0 0.0
    %2119 = vmatpush1.msra.mxu0 %v998
    %2120 = vmatprep.subr.mxu0 0.0
    %2121 = vmatpush1.msra.mxu0 %v999
    %2122 = vmatprep.subr.mxu0 0.0
    %2123 = vmatpush1.msra.mxu0 %v1000
    %2124 = vmatprep.subr.mxu0 0.0
    %2125 = vmatpush1.msra.mxu0 %v1001
    %2126 = vmatprep.subr.mxu0 0.0
    %2127 = vmatpush1.msra.mxu0 %v1002
    %2128 = vmatprep.subr.mxu0 0.0
    %2129 = vmatpush1.msra.mxu0 %v1003
    %2130 = vmatprep.subr.mxu0 0.0
    %2131 = vmatpush1.msra.mxu0 %v1004
    %2132 = vmatprep.subr.mxu0 0.0
    %2133 = vmatpush1.msra.mxu0 %v1005
    %2134 = vmatprep.subr.mxu0 0.0
    %2135 = vmatpush1.msra.mxu0 %v1006
    %2136 = vmatprep.subr.mxu0 0.0
    %2137 = vmatpush1.msra.mxu0 %v1007
    %2138 = vmatprep.subr.mxu0 0.0
    %2139 = vmatpush1.msra.mxu0 %v1008
    %2140 = vmatprep.subr.mxu0 0.0
    %2141 = vmatpush1.msra.mxu0 %v1009
    %2142 = vmatprep.subr.mxu0 0.0
    %2143 = vmatpush1.msra.mxu0 %v1010
    %2144 = vmatprep.subr.mxu0 0.0
    %2145 = vmatpush1.msra.mxu0 %v1011
    %2146 = vmatprep.subr.mxu0 0.0
    %2147 = vmatpush1.msra.mxu0 %v1012
    %2148 = vmatprep.subr.mxu0 0.0
    %2149 = vmatpush1.msra.mxu0 %v1013
    %2150 = vmatprep.subr.mxu0 0.0
    %2151 = vmatpush1.msra.mxu0 %v1014
    %2152 = vmatprep.subr.mxu0 0.0
    %2153 = vmatpush1.msra.mxu0 %v1015
    %2154 = vmatprep.subr.mxu0 0.0
    %2155 = vmatpush1.msra.mxu0 %v1016
    %2156 = vmatprep.mubr.f32.mxu0 %v32
    %2157 = vmatmul.mubr.f32.gmra.mrb[0].mxu0 %v31
    %v2158 = vpop.f32.mrb[0].mxu0
    %v2159 = vadd.f32 %v1854, %v2158
    %v2160 = vpop.f32.mrb[0].mxu0
    %2161 = vmatprep.mubr.f32.mxu0 %v50
    %2162 = vmatmul.mubr.f32.gmra.mrb[0].mxu0 %v49
    %v2163 = vpop.f32.mrb[0].mxu0
    %v2164 = vadd.f32 %v1859, %v2163
    %v2165 = vpop.f32.mrb[0].mxu0
    %2166 = vmatprep.mubr.f32.mxu0 %v68
    %2167 = vmatmul.mubr.f32.gmra.mrb[0].mxu0 %v67
    %v2168 = vpop.f32.mrb[0].mxu0
    %v2169 = vadd.f32 %v1864, %v2168
    %v2170 = vpop.f32.mrb[0].mxu0
    %2171 = vmatprep.mubr.f32.mxu0 %v86
    %2172 = vmatmul.mubr.f32.gmra.mrb[0].mxu0 %v85
    %v2173 = vpop.f32.mrb[0].mxu0
    %v2174 = vadd.f32 %v1869, %v2173
    %v2175 = vpop.f32.mrb[0].mxu0
    %2176 = vmatprep.mubr.f32.mxu0 %v104
    %2177 = vmatmul.mubr.f32.gmra.mrb[0].mxu0 %v103
    %v2178 = vpop.f32.mrb[0].mxu0
    %v2179 = vadd.f32 %v1874, %v2178
    %v2180 = vpop.f32.mrb[0].mxu0
    %2181 = vmatprep.mubr.f32.mxu0 %v122
    %2182 = vmatmul.mubr.f32.gmra.mrb[0].mxu0 %v121
    %v2183 = vpop.f32.mrb[0].mxu0
    %v2184 = vadd.f32 %v1879, %v2183
    %v2185 = vpop.f32.mrb[0].mxu0
    %2186 = vmatprep.mubr.f32.mxu0 %v140
    %2187 = vmatmul.mubr.f32.gmra.mrb[0].mxu0 %v139
    %v2188 = vpop.f32.mrb[0].mxu0
    %v2189 = vadd.f32 %v1884, %v2188
    %v2190 = vpop.f32.mrb[0].mxu0
    %2191 = vmatprep.mubr.f32.mxu0 %v158
    %2192 = vmatmul.mubr.f32.gmra.mrb[0].mxu0 %v157
    %v2193 = vpop.f32.mrb[0].mxu0
    %v2194 = vadd.f32 %v1889, %v2193
    %v2195 = vpop.f32.mrb[0].mxu0
    %2196 = vmatprep.mubr.f32.mxu0 %v176
    %2197 = vmatmul.mubr.f32.gmra.mrb[0].mxu0 %v175
    %v2198 = vpop.f32.mrb[0].mxu0
    %v2199 = vadd.f32 %v1894, %v2198
    %v2200 = vpop.f32.mrb[0].mxu0
    %2201 = vmatprep.mubr.f32.mxu0 %v194
    %2202 = vmatmul.mubr.f32.gmra.mrb[0].mxu0 %v193
    %v2203 = vpop.f32.mrb[0].mxu0
    %v2204 = vadd.f32 %v1899, %v2203
    %v2205 = vpop.f32.mrb[0].mxu0
    %2206 = vmatprep.mubr.f32.mxu0 %v212
    %2207 = vmatmul.mubr.f32.gmra.mrb[0].mxu0 %v211
    %v2208 = vpop.f32.mrb[0].mxu0
    %v2209 = vadd.f32 %v1904, %v2208
    %v2210 = vpop.f32.mrb[0].mxu0
    %2211 = vmatprep.mubr.f32.mxu0 %v230
    %2212 = vmatmul.mubr.f32.gmra.mrb[0].mxu0 %v229
    %v2213 = vpop.f32.mrb[0].mxu0
    %v2214 = vadd.f32 %v1909, %v2213
    %v2215 = vpop.f32.mrb[0].mxu0
    %2216 = vmatprep.mubr.f32.mxu0 %v248
    %2217 = vmatmul.mubr.f32.gmra.mrb[0].mxu0 %v247
    %v2218 = vpop.f32.mrb[0].mxu0
    %v2219 = vadd.f32 %v1914, %v2218
    %v2220 = vpop.f32.mrb[0].mxu0
    %2221 = vmatprep.mubr.f32.mxu0 %v266
    %2222 = vmatmul.mubr.f32.gmra.mrb[0].mxu0 %v265
    %v2223 = vpop.f32.mrb[0].mxu0
    %v2224 = vadd.f32 %v1919, %v2223
    %v2225 = vpop.f32.mrb[0].mxu0
    %2226 = vmatprep.mubr.f32.mxu0 %v284
    %2227 = vmatmul.mubr.f32.gmra.mrb[0].mxu0 %v283
    %v2228 = vpop.f32.mrb[0].mxu0
    %v2229 = vadd.f32 %v1924, %v2228
    %v2230 = vpop.f32.mrb[0].mxu0
    %2231 = vmatprep.mubr.f32.mxu0 %v302
    %2232 = vmatmul.mubr.f32.gmra.mrb[0].mxu0 %v301
    %v2233 = vpop.f32.mrb[0].mxu0
    %v2234 = vadd.f32 %v1929, %v2233
    %v2235 = vpop.f32.mrb[0].mxu0
    %2236 = vmatprep.mubr.f32.mxu0 %v320
    %2237 = vmatmul.mubr.f32.gmra.mrb[0].mxu0 %v319
    %v2238 = vpop.f32.mrb[0].mxu0
    %v2239 = vadd.f32 %v1934, %v2238
    %v2240 = vpop.f32.mrb[0].mxu0
    %2241 = vmatprep.mubr.f32.mxu0 %v338
    %2242 = vmatmul.mubr.f32.gmra.mrb[0].mxu0 %v337
    %v2243 = vpop.f32.mrb[0].mxu0
    %v2244 = vadd.f32 %v1939, %v2243
    %v2245 = vpop.f32.mrb[0].mxu0
    %2246 = vmatprep.mubr.f32.mxu0 %v356
    %2247 = vmatmul.mubr.f32.gmra.mrb[0].mxu0 %v355
    %v2248 = vpop.f32.mrb[0].mxu0
    %v2249 = vadd.f32 %v1944, %v2248
    %v2250 = vpop.f32.mrb[0].mxu0
    %2251 = vmatprep.mubr.f32.mxu0 %v374
    %2252 = vmatmul.mubr.f32.gmra.mrb[0].mxu0 %v373
    %v2253 = vpop.f32.mrb[0].mxu0
    %v2254 = vadd.f32 %v1949, %v2253
    %v2255 = vpop.f32.mrb[0].mxu0
    %2256 = vmatprep.mubr.f32.mxu0 %v392
    %2257 = vmatmul.mubr.f32.gmra.mrb[0].mxu0 %v391
    %v2258 = vpop.f32.mrb[0].mxu0
    %v2259 = vadd.f32 %v1954, %v2258
    %v2260 = vpop.f32.mrb[0].mxu0
    %2261 = vmatprep.mubr.f32.mxu0 %v410
    %2262 = vmatmul.mubr.f32.gmra.mrb[0].mxu0 %v409
    %v2263 = vpop.f32.mrb[0].mxu0
    %v2264 = vadd.f32 %v1959, %v2263
    %v2265 = vpop.f32.mrb[0].mxu0
    %2266 = vmatprep.mubr.f32.mxu0 %v428
    %2267 = vmatmul.mubr.f32.gmra.mrb[0].mxu0 %v427
    %v2268 = vpop.f32.mrb[0].mxu0
    %v2269 = vadd.f32 %v1964, %v2268
    %v2270 = vpop.f32.mrb[0].mxu0
    %2271 = vmatprep.mubr.f32.mxu0 %v446
    %2272 = vmatmul.mubr.f32.gmra.mrb[0].mxu0 %v445
    %v2273 = vpop.f32.mrb[0].mxu0
    %v2274 = vadd.f32 %v1969, %v2273
    %v2275 = vpop.f32.mrb[0].mxu0
    %2276 = vmatprep.mubr.f32.mxu0 %v464
    %2277 = vmatmul.mubr.f32.gmra.mrb[0].mxu0 %v463
    %v2278 = vpop.f32.mrb[0].mxu0
    %v2279 = vadd.f32 %v1974, %v2278
    %v2280 = vpop.f32.mrb[0].mxu0
    %2281 = vmatprep.mubr.f32.mxu0 %v482
    %2282 = vmatmul.mubr.f32.gmra.mrb[0].mxu0 %v481
    %v2283 = vpop.f32.mrb[0].mxu0
    %v2284 = vadd.f32 %v1979, %v2283
    %v2285 = vpop.f32.mrb[0].mxu0
    %2286 = vmatprep.mubr.f32.mxu0 %v500
    %2287 = vmatmul.mubr.f32.gmra.mrb[0].mxu0 %v499
    %v2288 = vpop.f32.mrb[0].mxu0
    %v2289 = vadd.f32 %v1984, %v2288
    %v2290 = vpop.f32.mrb[0].mxu0
    %2291 = vmatprep.mubr.f32.mxu0 %v518
    %2292 = vmatmul.mubr.f32.gmra.mrb[0].mxu0 %v517
    %v2293 = vpop.f32.mrb[0].mxu0
    %v2294 = vadd.f32 %v1989, %v2293
    %v2295 = vpop.f32.mrb[0].mxu0
    %2296 = vmatprep.mubr.f32.mxu0 %v536
    %2297 = vmatmul.mubr.f32.gmra.mrb[0].mxu0 %v535
    %v2298 = vpop.f32.mrb[0].mxu0
    %v2299 = vadd.f32 %v1994, %v2298
    %v2300 = vpop.f32.mrb[0].mxu0
    %2301 = vmatprep.mubr.f32.mxu0 %v554
    %2302 = vmatmul.mubr.f32.gmra.mrb[0].mxu0 %v553
    %v2303 = vpop.f32.mrb[0].mxu0
    %v2304 = vadd.f32 %v1999, %v2303
    %v2305 = vpop.f32.mrb[0].mxu0
    %2306 = vmatprep.mubr.f32.mxu0 %v572
    %2307 = vmatmul.mubr.f32.gmra.mrb[0].mxu0 %v571
    %v2308 = vpop.f32.mrb[0].mxu0
    %v2309 = vadd.f32 %v2004, %v2308
    %v2310 = vpop.f32.mrb[0].mxu0
    %2311 = vmatprep.mubr.f32.mxu0 %v590
    %2312 = vmatmul.mubr.f32.gmra.mrb[0].mxu0 %v589
    %v2313 = vpop.f32.mrb[0].mxu0
    %v2314 = vadd.f32 %v2009, %v2313
    %v2315 = vpop.f32.mrb[0].mxu0
    %2316 = vmatprep.mubr.f32.mxu0 %v608
    %2317 = vmatmul.mubr.f32.gmra.mrb[0].mxu0 %v607
    %v2318 = vpop.f32.mrb[0].mxu0
    %v2319 = vadd.f32 %v2014, %v2318
    %v2320 = vpop.f32.mrb[0].mxu0
    %2321 = vmatprep.mubr.f32.mxu0 %v626
    %2322 = vmatmul.mubr.f32.gmra.mrb[0].mxu0 %v625
    %v2323 = vpop.f32.mrb[0].mxu0
    %v2324 = vadd.f32 %v2019, %v2323
    %v2325 = vpop.f32.mrb[0].mxu0
    %2326 = vmatprep.mubr.f32.mxu0 %v644
    %2327 = vmatmul.mubr.f32.gmra.mrb[0].mxu0 %v643
    %v2328 = vpop.f32.mrb[0].mxu0
    %v2329 = vadd.f32 %v2024, %v2328
    %v2330 = vpop.f32.mrb[0].mxu0
    %2331 = vmatprep.mubr.f32.mxu0 %v662
    %2332 = vmatmul.mubr.f32.gmra.mrb[0].mxu0 %v661
    %v2333 = vpop.f32.mrb[0].mxu0
    %v2334 = vadd.f32 %v2029, %v2333
    %v2335 = vpop.f32.mrb[0].mxu0
    %2336 = vmatprep.mubr.f32.mxu0 %v680
    %2337 = vmatmul.mubr.f32.gmra.mrb[0].mxu0 %v679
    %v2338 = vpop.f32.mrb[0].mxu0
    %v2339 = vadd.f32 %v2034, %v2338
    %v2340 = vpop.f32.mrb[0].mxu0
    %2341 = vmatprep.mubr.f32.mxu0 %v698
    %2342 = vmatmul.mubr.f32.gmra.mrb[0].mxu0 %v697
    %v2343 = vpop.f32.mrb[0].mxu0
    %v2344 = vadd.f32 %v2039, %v2343
    %v2345 = vpop.f32.mrb[0].mxu0
    %2346 = vmatprep.mubr.f32.mxu0 %v716
    %2347 = vmatmul.mubr.f32.gmra.mrb[0].mxu0 %v715
    %v2348 = vpop.f32.mrb[0].mxu0
    %v2349 = vadd.f32 %v2044, %v2348
    %v2350 = vpop.f32.mrb[0].mxu0
    %2351 = vmatprep.mubr.f32.mxu0 %v734
    %2352 = vmatmul.mubr.f32.gmra.mrb[0].mxu0 %v733
    %v2353 = vpop.f32.mrb[0].mxu0
    %v2354 = vadd.f32 %v2049, %v2353
    %v2355 = vpop.f32.mrb[0].mxu0
    %2356 = vmatprep.mubr.f32.mxu0 %v752
    %2357 = vmatmul.mubr.f32.gmra.mrb[0].mxu0 %v751
    %v2358 = vpop.f32.mrb[0].mxu0
    %v2359 = vadd.f32 %v2054, %v2358
    %v2360 = vpop.f32.mrb[0].mxu0
    %2361 = vmatprep.mubr.f32.mxu0 %v770
    %2362 = vmatmul.mubr.f32.gmra.mrb[0].mxu0 %v769
    %v2363 = vpop.f32.mrb[0].mxu0
    %v2364 = vadd.f32 %v2059, %v2363
    %v2365 = vpop.f32.mrb[0].mxu0
    %2366 = vmatprep.mubr.f32.mxu0 %v788
    %2367 = vmatmul.mubr.f32.gmra.mrb[0].mxu0 %v787
    %v2368 = vpop.f32.mrb[0].mxu0
    %v2369 = vadd.f32 %v2064, %v2368
    %v2370 = vpop.f32.mrb[0].mxu0
    %2371 = vmatprep.mubr.f32.mxu0 %v806
    %2372 = vmatmul.mubr.f32.gmra.mrb[0].mxu0 %v805
    %v2373 = vpop.f32.mrb[0].mxu0
    %v2374 = vadd.f32 %v2069, %v2373
    %v2375 = vpop.f32.mrb[0].mxu0
    %2376 = vmatprep.mubr.f32.mxu0 %v824
    %2377 = vmatmul.mubr.f32.gmra.mrb[0].mxu0 %v823
    %v2378 = vpop.f32.mrb[0].mxu0
    %v2379 = vadd.f32 %v2074, %v2378
    %v2380 = vpop.f32.mrb[0].mxu0
    %2381 = vmatprep.mubr.f32.mxu0 %v842
    %2382 = vmatmul.mubr.f32.gmra.mrb[0].mxu0 %v841
    %v2383 = vpop.f32.mrb[0].mxu0
    %v2384 = vadd.f32 %v2079, %v2383
    %v2385 = vpop.f32.mrb[0].mxu0
    %2386 = vmatprep.mubr.f32.mxu0 %v860
    %2387 = vmatmul.mubr.f32.gmra.mrb[0].mxu0 %v859
    %v2388 = vpop.f32.mrb[0].mxu0
    %v2389 = vadd.f32 %v2084, %v2388
    %v2390 = vpop.f32.mrb[0].mxu0
    %2391 = vmatprep.mubr.f32.mxu0 %v878
    %2392 = vmatmul.mubr.f32.gmra.mrb[0].mxu0 %v877
    %v2393 = vpop.f32.mrb[0].mxu0
    %v2394 = vadd.f32 %v2089, %v2393
    %v2395 = vpop.f32.mrb[0].mxu0
    %2396 = vdwg.mxu0
    %2397 = vmatprep.subr.mxu0 0.0
    %2398 = vmatpush1.msra.mxu0 %v1017
    %2399 = vmatprep.subr.mxu0 0.0
    %2400 = vmatpush1.msra.mxu0 %v1018
    %2401 = vmatprep.subr.mxu0 0.0
    %2402 = vmatpush1.msra.mxu0 %v1019
    %2403 = vmatprep.subr.mxu0 0.0
    %2404 = vmatpush1.msra.mxu0 %v1020
    %2405 = vmatprep.subr.mxu0 0.0
    %2406 = vmatpush1.msra.mxu0 %v1021
    %2407 = vmatprep.subr.mxu0 0.0
    %2408 = vmatpush1.msra.mxu0 %v1022
    %2409 = vmatprep.subr.mxu0 0.0
    %2410 = vmatpush1.msra.mxu0 %v1023
    %2411 = vmatprep.subr.mxu0 0.0
    %2412 = vmatpush1.msra.mxu0 %v1024
    %2413 = vmatprep.subr.mxu0 0.0
    %2414 = vmatpush1.msra.mxu0 %v1025
    %2415 = vmatprep.subr.mxu0 0.0
    %2416 = vmatpush1.msra.mxu0 %v1026
    %2417 = vmatprep.subr.mxu0 0.0
    %2418 = vmatpush1.msra.mxu0 %v1027
    %2419 = vmatprep.subr.mxu0 0.0
    %2420 = vmatpush1.msra.mxu0 %v1028
    %2421 = vmatprep.subr.mxu0 0.0
    %2422 = vmatpush1.msra.mxu0 %v1029
    %2423 = vmatprep.subr.mxu0 0.0
    %2424 = vmatpush1.msra.mxu0 %v1030
    %2425 = vmatprep.subr.mxu0 0.0
    %2426 = vmatpush1.msra.mxu0 %v1031
    %2427 = vmatprep.subr.mxu0 0.0
    %2428 = vmatpush1.msra.mxu0 %v1032
    %2429 = vmatprep.subr.mxu0 0.0
    %2430 = vmatpush1.msra.mxu0 %v1033
    %2431 = vmatprep.subr.mxu0 0.0
    %2432 = vmatpush1.msra.mxu0 %v1034
    %2433 = vmatprep.subr.mxu0 0.0
    %2434 = vmatpush1.msra.mxu0 %v1035
    %2435 = vmatprep.subr.mxu0 0.0
    %2436 = vmatpush1.msra.mxu0 %v1036
    %2437 = vmatprep.subr.mxu0 0.0
    %2438 = vmatpush1.msra.mxu0 %v1037
    %2439 = vmatprep.subr.mxu0 0.0
    %2440 = vmatpush1.msra.mxu0 %v1038
    %2441 = vmatprep.subr.mxu0 0.0
    %2442 = vmatpush1.msra.mxu0 %v1039
    %2443 = vmatprep.subr.mxu0 0.0
    %2444 = vmatpush1.msra.mxu0 %v1040
    %2445 = vmatprep.subr.mxu0 0.0
    %2446 = vmatpush1.msra.mxu0 %v1041
    %2447 = vmatprep.subr.mxu0 0.0
    %2448 = vmatpush1.msra.mxu0 %v1042
    %2449 = vmatprep.subr.mxu0 0.0
    %2450 = vmatpush1.msra.mxu0 %v1043
    %2451 = vmatprep.subr.mxu0 0.0
    %2452 = vmatpush1.msra.mxu0 %v1044
    %2453 = vmatprep.subr.mxu0 0.0
    %2454 = vmatpush1.msra.mxu0 %v1045
    %2455 = vmatprep.subr.mxu0 0.0
    %2456 = vmatpush1.msra.mxu0 %v1046
    %2457 = vmatprep.subr.mxu0 0.0
    %2458 = vmatpush1.msra.mxu0 %v1047
    %2459 = vmatprep.subr.mxu0 0.0
    %2460 = vmatpush1.msra.mxu0 %v1048
    %2461 = vmatprep.mubr.f32.mxu0 %v34
    %2462 = vmatmul.mubr.f32.gmra.mrb[0].mxu0 %v33
    %v2463 = vpop.f32.mrb[0].mxu0
    %v2464 = vadd.f32 %v2159, %v2463
    %v2465 = vpop.f32.mrb[0].mxu0
    %2466 = vmatprep.mubr.f32.mxu0 %v52
    %2467 = vmatmul.mubr.f32.gmra.mrb[0].mxu0 %v51
    %v2468 = vpop.f32.mrb[0].mxu0
    %v2469 = vadd.f32 %v2164, %v2468
    %v2470 = vpop.f32.mrb[0].mxu0
    %2471 = vmatprep.mubr.f32.mxu0 %v70
    %2472 = vmatmul.mubr.f32.gmra.mrb[0].mxu0 %v69
    %v2473 = vpop.f32.mrb[0].mxu0
    %v2474 = vadd.f32 %v2169, %v2473
    %v2475 = vpop.f32.mrb[0].mxu0
    %2476 = vmatprep.mubr.f32.mxu0 %v88
    %2477 = vmatmul.mubr.f32.gmra.mrb[0].mxu0 %v87
    %v2478 = vpop.f32.mrb[0].mxu0
    %v2479 = vadd.f32 %v2174, %v2478
    %v2480 = vpop.f32.mrb[0].mxu0
    %2481 = vmatprep.mubr.f32.mxu0 %v106
    %2482 = vmatmul.mubr.f32.gmra.mrb[0].mxu0 %v105
    %v2483 = vpop.f32.mrb[0].mxu0
    %v2484 = vadd.f32 %v2179, %v2483
    %v2485 = vpop.f32.mrb[0].mxu0
    %2486 = vmatprep.mubr.f32.mxu0 %v124
    %2487 = vmatmul.mubr.f32.gmra.mrb[0].mxu0 %v123
    %v2488 = vpop.f32.mrb[0].mxu0
    %v2489 = vadd.f32 %v2184, %v2488
    %v2490 = vpop.f32.mrb[0].mxu0
    %2491 = vmatprep.mubr.f32.mxu0 %v142
    %2492 = vmatmul.mubr.f32.gmra.mrb[0].mxu0 %v141
    %v2493 = vpop.f32.mrb[0].mxu0
    %v2494 = vadd.f32 %v2189, %v2493
    %v2495 = vpop.f32.mrb[0].mxu0
    %2496 = vmatprep.mubr.f32.mxu0 %v160
    %2497 = vmatmul.mubr.f32.gmra.mrb[0].mxu0 %v159
    %v2498 = vpop.f32.mrb[0].mxu0
    %v2499 = vadd.f32 %v2194, %v2498
    %v2500 = vpop.f32.mrb[0].mxu0
    %2501 = vmatprep.mubr.f32.mxu0 %v178
    %2502 = vmatmul.mubr.f32.gmra.mrb[0].mxu0 %v177
    %v2503 = vpop.f32.mrb[0].mxu0
    %v2504 = vadd.f32 %v2199, %v2503
    %v2505 = vpop.f32.mrb[0].mxu0
    %2506 = vmatprep.mubr.f32.mxu0 %v196
    %2507 = vmatmul.mubr.f32.gmra.mrb[0].mxu0 %v195
    %v2508 = vpop.f32.mrb[0].mxu0
    %v2509 = vadd.f32 %v2204, %v2508
    %v2510 = vpop.f32.mrb[0].mxu0
    %2511 = vmatprep.mubr.f32.mxu0 %v214
    %2512 = vmatmul.mubr.f32.gmra.mrb[0].mxu0 %v213
    %v2513 = vpop.f32.mrb[0].mxu0
    %v2514 = vadd.f32 %v2209, %v2513
    %v2515 = vpop.f32.mrb[0].mxu0
    %2516 = vmatprep.mubr.f32.mxu0 %v232
    %2517 = vmatmul.mubr.f32.gmra.mrb[0].mxu0 %v231
    %v2518 = vpop.f32.mrb[0].mxu0
    %v2519 = vadd.f32 %v2214, %v2518
    %v2520 = vpop.f32.mrb[0].mxu0
    %2521 = vmatprep.mubr.f32.mxu0 %v250
    %2522 = vmatmul.mubr.f32.gmra.mrb[0].mxu0 %v249
    %v2523 = vpop.f32.mrb[0].mxu0
    %v2524 = vadd.f32 %v2219, %v2523
    %v2525 = vpop.f32.mrb[0].mxu0
    %2526 = vmatprep.mubr.f32.mxu0 %v268
    %2527 = vmatmul.mubr.f32.gmra.mrb[0].mxu0 %v267
    %v2528 = vpop.f32.mrb[0].mxu0
    %v2529 = vadd.f32 %v2224, %v2528
    %v2530 = vpop.f32.mrb[0].mxu0
    %2531 = vmatprep.mubr.f32.mxu0 %v286
    %2532 = vmatmul.mubr.f32.gmra.mrb[0].mxu0 %v285
    %v2533 = vpop.f32.mrb[0].mxu0
    %v2534 = vadd.f32 %v2229, %v2533
    %v2535 = vpop.f32.mrb[0].mxu0
    %2536 = vmatprep.mubr.f32.mxu0 %v304
    %2537 = vmatmul.mubr.f32.gmra.mrb[0].mxu0 %v303
    %v2538 = vpop.f32.mrb[0].mxu0
    %v2539 = vadd.f32 %v2234, %v2538
    %v2540 = vpop.f32.mrb[0].mxu0
    %2541 = vmatprep.mubr.f32.mxu0 %v322
    %2542 = vmatmul.mubr.f32.gmra.mrb[0].mxu0 %v321
    %v2543 = vpop.f32.mrb[0].mxu0
    %v2544 = vadd.f32 %v2239, %v2543
    %v2545 = vpop.f32.mrb[0].mxu0
    %2546 = vmatprep.mubr.f32.mxu0 %v340
    %2547 = vmatmul.mubr.f32.gmra.mrb[0].mxu0 %v339
    %v2548 = vpop.f32.mrb[0].mxu0
    %v2549 = vadd.f32 %v2244, %v2548
    %v2550 = vpop.f32.mrb[0].mxu0
    %2551 = vmatprep.mubr.f32.mxu0 %v358
    %2552 = vmatmul.mubr.f32.gmra.mrb[0].mxu0 %v357
    %v2553 = vpop.f32.mrb[0].mxu0
    %v2554 = vadd.f32 %v2249, %v2553
    %v2555 = vpop.f32.mrb[0].mxu0
    %2556 = vmatprep.mubr.f32.mxu0 %v376
    %2557 = vmatmul.mubr.f32.gmra.mrb[0].mxu0 %v375
    %v2558 = vpop.f32.mrb[0].mxu0
    %v2559 = vadd.f32 %v2254, %v2558
    %v2560 = vpop.f32.mrb[0].mxu0
    %2561 = vmatprep.mubr.f32.mxu0 %v394
    %2562 = vmatmul.mubr.f32.gmra.mrb[0].mxu0 %v393
    %v2563 = vpop.f32.mrb[0].mxu0
    %v2564 = vadd.f32 %v2259, %v2563
    %v2565 = vpop.f32.mrb[0].mxu0
    %2566 = vmatprep.mubr.f32.mxu0 %v412
    %2567 = vmatmul.mubr.f32.gmra.mrb[0].mxu0 %v411
    %v2568 = vpop.f32.mrb[0].mxu0
    %v2569 = vadd.f32 %v2264, %v2568
    %v2570 = vpop.f32.mrb[0].mxu0
    %2571 = vmatprep.mubr.f32.mxu0 %v430
    %2572 = vmatmul.mubr.f32.gmra.mrb[0].mxu0 %v429
    %v2573 = vpop.f32.mrb[0].mxu0
    %v2574 = vadd.f32 %v2269, %v2573
    %v2575 = vpop.f32.mrb[0].mxu0
    %2576 = vmatprep.mubr.f32.mxu0 %v448
    %2577 = vmatmul.mubr.f32.gmra.mrb[0].mxu0 %v447
    %v2578 = vpop.f32.mrb[0].mxu0
    %v2579 = vadd.f32 %v2274, %v2578
    %v2580 = vpop.f32.mrb[0].mxu0
    %2581 = vmatprep.mubr.f32.mxu0 %v466
    %2582 = vmatmul.mubr.f32.gmra.mrb[0].mxu0 %v465
    %v2583 = vpop.f32.mrb[0].mxu0
    %v2584 = vadd.f32 %v2279, %v2583
    %v2585 = vpop.f32.mrb[0].mxu0
    %2586 = vmatprep.mubr.f32.mxu0 %v484
    %2587 = vmatmul.mubr.f32.gmra.mrb[0].mxu0 %v483
    %v2588 = vpop.f32.mrb[0].mxu0
    %v2589 = vadd.f32 %v2284, %v2588
    %v2590 = vpop.f32.mrb[0].mxu0
    %2591 = vmatprep.mubr.f32.mxu0 %v502
    %2592 = vmatmul.mubr.f32.gmra.mrb[0].mxu0 %v501
    %v2593 = vpop.f32.mrb[0].mxu0
    %v2594 = vadd.f32 %v2289, %v2593
    %v2595 = vpop.f32.mrb[0].mxu0
    %2596 = vmatprep.mubr.f32.mxu0 %v520
    %2597 = vmatmul.mubr.f32.gmra.mrb[0].mxu0 %v519
    %v2598 = vpop.f32.mrb[0].mxu0
    %v2599 = vadd.f32 %v2294, %v2598
    %v2600 = vpop.f32.mrb[0].mxu0
    %2601 = vmatprep.mubr.f32.mxu0 %v538
    %2602 = vmatmul.mubr.f32.gmra.mrb[0].mxu0 %v537
    %v2603 = vpop.f32.mrb[0].mxu0
    %v2604 = vadd.f32 %v2299, %v2603
    %v2605 = vpop.f32.mrb[0].mxu0
    %2606 = vmatprep.mubr.f32.mxu0 %v556
    %2607 = vmatmul.mubr.f32.gmra.mrb[0].mxu0 %v555
    %v2608 = vpop.f32.mrb[0].mxu0
    %v2609 = vadd.f32 %v2304, %v2608
    %v2610 = vpop.f32.mrb[0].mxu0
    %2611 = vmatprep.mubr.f32.mxu0 %v574
    %2612 = vmatmul.mubr.f32.gmra.mrb[0].mxu0 %v573
    %v2613 = vpop.f32.mrb[0].mxu0
    %v2614 = vadd.f32 %v2309, %v2613
    %v2615 = vpop.f32.mrb[0].mxu0
    %2616 = vmatprep.mubr.f32.mxu0 %v592
    %2617 = vmatmul.mubr.f32.gmra.mrb[0].mxu0 %v591
    %v2618 = vpop.f32.mrb[0].mxu0
    %v2619 = vadd.f32 %v2314, %v2618
    %v2620 = vpop.f32.mrb[0].mxu0
    %2621 = vmatprep.mubr.f32.mxu0 %v610
    %2622 = vmatmul.mubr.f32.gmra.mrb[0].mxu0 %v609
    %v2623 = vpop.f32.mrb[0].mxu0
    %v2624 = vadd.f32 %v2319, %v2623
    %v2625 = vpop.f32.mrb[0].mxu0
    %2626 = vmatprep.mubr.f32.mxu0 %v628
    %2627 = vmatmul.mubr.f32.gmra.mrb[0].mxu0 %v627
    %v2628 = vpop.f32.mrb[0].mxu0
    %v2629 = vadd.f32 %v2324, %v2628
    %v2630 = vpop.f32.mrb[0].mxu0
    %2631 = vmatprep.mubr.f32.mxu0 %v646
    %2632 = vmatmul.mubr.f32.gmra.mrb[0].mxu0 %v645
    %v2633 = vpop.f32.mrb[0].mxu0
    %v2634 = vadd.f32 %v2329, %v2633
    %v2635 = vpop.f32.mrb[0].mxu0
    %2636 = vmatprep.mubr.f32.mxu0 %v664
    %2637 = vmatmul.mubr.f32.gmra.mrb[0].mxu0 %v663
    %v2638 = vpop.f32.mrb[0].mxu0
    %v2639 = vadd.f32 %v2334, %v2638
    %v2640 = vpop.f32.mrb[0].mxu0
    %2641 = vmatprep.mubr.f32.mxu0 %v682
    %2642 = vmatmul.mubr.f32.gmra.mrb[0].mxu0 %v681
    %v2643 = vpop.f32.mrb[0].mxu0
    %v2644 = vadd.f32 %v2339, %v2643
    %v2645 = vpop.f32.mrb[0].mxu0
    %2646 = vmatprep.mubr.f32.mxu0 %v700
    %2647 = vmatmul.mubr.f32.gmra.mrb[0].mxu0 %v699
    %v2648 = vpop.f32.mrb[0].mxu0
    %v2649 = vadd.f32 %v2344, %v2648
    %v2650 = vpop.f32.mrb[0].mxu0
    %2651 = vmatprep.mubr.f32.mxu0 %v718
    %2652 = vmatmul.mubr.f32.gmra.mrb[0].mxu0 %v717
    %v2653 = vpop.f32.mrb[0].mxu0
    %v2654 = vadd.f32 %v2349, %v2653
    %v2655 = vpop.f32.mrb[0].mxu0
    %2656 = vmatprep.mubr.f32.mxu0 %v736
    %2657 = vmatmul.mubr.f32.gmra.mrb[0].mxu0 %v735
    %v2658 = vpop.f32.mrb[0].mxu0
    %v2659 = vadd.f32 %v2354, %v2658
    %v2660 = vpop.f32.mrb[0].mxu0
    %2661 = vmatprep.mubr.f32.mxu0 %v754
    %2662 = vmatmul.mubr.f32.gmra.mrb[0].mxu0 %v753
    %v2663 = vpop.f32.mrb[0].mxu0
    %v2664 = vadd.f32 %v2359, %v2663
    %v2665 = vpop.f32.mrb[0].mxu0
    %2666 = vmatprep.mubr.f32.mxu0 %v772
    %2667 = vmatmul.mubr.f32.gmra.mrb[0].mxu0 %v771
    %v2668 = vpop.f32.mrb[0].mxu0
    %v2669 = vadd.f32 %v2364, %v2668
    %v2670 = vpop.f32.mrb[0].mxu0
    %2671 = vmatprep.mubr.f32.mxu0 %v790
    %2672 = vmatmul.mubr.f32.gmra.mrb[0].mxu0 %v789
    %v2673 = vpop.f32.mrb[0].mxu0
    %v2674 = vadd.f32 %v2369, %v2673
    %v2675 = vpop.f32.mrb[0].mxu0
    %2676 = vmatprep.mubr.f32.mxu0 %v808
    %2677 = vmatmul.mubr.f32.gmra.mrb[0].mxu0 %v807
    %v2678 = vpop.f32.mrb[0].mxu0
    %v2679 = vadd.f32 %v2374, %v2678
    %v2680 = vpop.f32.mrb[0].mxu0
    %2681 = vmatprep.mubr.f32.mxu0 %v826
    %2682 = vmatmul.mubr.f32.gmra.mrb[0].mxu0 %v825
    %v2683 = vpop.f32.mrb[0].mxu0
    %v2684 = vadd.f32 %v2379, %v2683
    %v2685 = vpop.f32.mrb[0].mxu0
    %2686 = vmatprep.mubr.f32.mxu0 %v844
    %2687 = vmatmul.mubr.f32.gmra.mrb[0].mxu0 %v843
    %v2688 = vpop.f32.mrb[0].mxu0
    %v2689 = vadd.f32 %v2384, %v2688
    %v2690 = vpop.f32.mrb[0].mxu0
    %2691 = vmatprep.mubr.f32.mxu0 %v862
    %2692 = vmatmul.mubr.f32.gmra.mrb[0].mxu0 %v861
    %v2693 = vpop.f32.mrb[0].mxu0
    %v2694 = vadd.f32 %v2389, %v2693
    %v2695 = vpop.f32.mrb[0].mxu0
    %2696 = vmatprep.mubr.f32.mxu0 %v880
    %2697 = vmatmul.mubr.f32.gmra.mrb[0].mxu0 %v879
    %v2698 = vpop.f32.mrb[0].mxu0
    %v2699 = vadd.f32 %v2394, %v2698
    %v2700 = vpop.f32.mrb[0].mxu0
    %2701 = vdwg.mxu0
    %2702 = vmatprep.subr.mxu0 0.0
    %2703 = vmatpush1.msra.mxu0 %v1049
    %2704 = vmatprep.subr.mxu0 0.0
    %2705 = vmatpush1.msra.mxu0 %v1050
    %2706 = vmatprep.subr.mxu0 0.0
    %2707 = vmatpush1.msra.mxu0 %v1051
    %2708 = vmatprep.subr.mxu0 0.0
    %2709 = vmatpush1.msra.mxu0 %v1052
    %2710 = vmatprep.subr.mxu0 0.0
    %2711 = vmatpush1.msra.mxu0 %v1053
    %2712 = vmatprep.subr.mxu0 0.0
    %2713 = vmatpush1.msra.mxu0 %v1054
    %2714 = vmatprep.subr.mxu0 0.0
    %2715 = vmatpush1.msra.mxu0 %v1055
    %2716 = vmatprep.subr.mxu0 0.0
    %2717 = vmatpush1.msra.mxu0 %v1056
    %2718 = vmatprep.subr.mxu0 0.0
    %2719 = vmatpush1.msra.mxu0 %v1057
    %2720 = vmatprep.subr.mxu0 0.0
    %2721 = vmatpush1.msra.mxu0 %v1058
    %2722 = vmatprep.subr.mxu0 0.0
    %2723 = vmatpush1.msra.mxu0 %v1059
    %2724 = vmatprep.subr.mxu0 0.0
    %2725 = vmatpush1.msra.mxu0 %v1060
    %2726 = vmatprep.subr.mxu0 0.0
    %2727 = vmatpush1.msra.mxu0 %v1061
    %2728 = vmatprep.subr.mxu0 0.0
    %2729 = vmatpush1.msra.mxu0 %v1062
    %2730 = vmatprep.subr.mxu0 0.0
    %2731 = vmatpush1.msra.mxu0 %v1063
    %2732 = vmatprep.subr.mxu0 0.0
    %2733 = vmatpush1.msra.mxu0 %v1064
    %2734 = vmatprep.subr.mxu0 0.0
    %2735 = vmatpush1.msra.mxu0 %v1065
    %2736 = vmatprep.subr.mxu0 0.0
    %2737 = vmatpush1.msra.mxu0 %v1066
    %2738 = vmatprep.subr.mxu0 0.0
    %2739 = vmatpush1.msra.mxu0 %v1067
    %2740 = vmatprep.subr.mxu0 0.0
    %2741 = vmatpush1.msra.mxu0 %v1068
    %2742 = vmatprep.subr.mxu0 0.0
    %2743 = vmatpush1.msra.mxu0 %v1069
    %2744 = vmatprep.subr.mxu0 0.0
    %2745 = vmatpush1.msra.mxu0 %v1070
    %2746 = vmatprep.subr.mxu0 0.0
    %2747 = vmatpush1.msra.mxu0 %v1071
    %2748 = vmatprep.subr.mxu0 0.0
    %2749 = vmatpush1.msra.mxu0 %v1072
    %2750 = vmatprep.subr.mxu0 0.0
    %2751 = vmatpush1.msra.mxu0 %v1073
    %2752 = vmatprep.subr.mxu0 0.0
    %2753 = vmatpush1.msra.mxu0 %v1074
    %2754 = vmatprep.subr.mxu0 0.0
    %2755 = vmatpush1.msra.mxu0 %v1075
    %2756 = vmatprep.subr.mxu0 0.0
    %2757 = vmatpush1.msra.mxu0 %v1076
    %2758 = vmatprep.subr.mxu0 0.0
    %2759 = vmatpush1.msra.mxu0 %v1077
    %2760 = vmatprep.subr.mxu0 0.0
    %2761 = vmatpush1.msra.mxu0 %v1078
    %2762 = vmatprep.subr.mxu0 0.0
    %2763 = vmatpush1.msra.mxu0 %v1079
    %2764 = vmatprep.subr.mxu0 0.0
    %2765 = vmatpush1.msra.mxu0 %v1080
    %2766 = vmatprep.mubr.f32.mxu0 %v36
    %2767 = vmatmul.mubr.f32.gmra.mrb[0].mxu0 %v35
    %v2768 = vpop.f32.mrb[0].mxu0
    %v2769 = vadd.f32 %v2464, %v2768
    %v2770 = vpop.f32.mrb[0].mxu0
    %2771 = vmatprep.mubr.f32.mxu0 %v54
    %2772 = vmatmul.mubr.f32.gmra.mrb[0].mxu0 %v53
    %v2773 = vpop.f32.mrb[0].mxu0
    %v2774 = vadd.f32 %v2469, %v2773
    %v2775 = vpop.f32.mrb[0].mxu0
    %2776 = vmatprep.mubr.f32.mxu0 %v72
    %2777 = vmatmul.mubr.f32.gmra.mrb[0].mxu0 %v71
    %v2778 = vpop.f32.mrb[0].mxu0
    %v2779 = vadd.f32 %v2474, %v2778
    %v2780 = vpop.f32.mrb[0].mxu0
    %2781 = vmatprep.mubr.f32.mxu0 %v90
    %2782 = vmatmul.mubr.f32.gmra.mrb[0].mxu0 %v89
    %v2783 = vpop.f32.mrb[0].mxu0
    %v2784 = vadd.f32 %v2479, %v2783
    %v2785 = vpop.f32.mrb[0].mxu0
    %2786 = vmatprep.mubr.f32.mxu0 %v108
    %2787 = vmatmul.mubr.f32.gmra.mrb[0].mxu0 %v107
    %v2788 = vpop.f32.mrb[0].mxu0
    %v2789 = vadd.f32 %v2484, %v2788
    %v2790 = vpop.f32.mrb[0].mxu0
    %2791 = vmatprep.mubr.f32.mxu0 %v126
    %2792 = vmatmul.mubr.f32.gmra.mrb[0].mxu0 %v125
    %v2793 = vpop.f32.mrb[0].mxu0
    %v2794 = vadd.f32 %v2489, %v2793
    %v2795 = vpop.f32.mrb[0].mxu0
    %2796 = vmatprep.mubr.f32.mxu0 %v144
    %2797 = vmatmul.mubr.f32.gmra.mrb[0].mxu0 %v143
    %v2798 = vpop.f32.mrb[0].mxu0
    %v2799 = vadd.f32 %v2494, %v2798
    %v2800 = vpop.f32.mrb[0].mxu0
    %2801 = vmatprep.mubr.f32.mxu0 %v162
    %2802 = vmatmul.mubr.f32.gmra.mrb[0].mxu0 %v161
    %v2803 = vpop.f32.mrb[0].mxu0
    %v2804 = vadd.f32 %v2499, %v2803
    %v2805 = vpop.f32.mrb[0].mxu0
    %2806 = vmatprep.mubr.f32.mxu0 %v180
    %2807 = vmatmul.mubr.f32.gmra.mrb[0].mxu0 %v179
    %v2808 = vpop.f32.mrb[0].mxu0
    %v2809 = vadd.f32 %v2504, %v2808
    %v2810 = vpop.f32.mrb[0].mxu0
    %2811 = vmatprep.mubr.f32.mxu0 %v198
    %2812 = vmatmul.mubr.f32.gmra.mrb[0].mxu0 %v197
    %v2813 = vpop.f32.mrb[0].mxu0
    %v2814 = vadd.f32 %v2509, %v2813
    %v2815 = vpop.f32.mrb[0].mxu0
    %2816 = vmatprep.mubr.f32.mxu0 %v216
    %2817 = vmatmul.mubr.f32.gmra.mrb[0].mxu0 %v215
    %v2818 = vpop.f32.mrb[0].mxu0
    %v2819 = vadd.f32 %v2514, %v2818
    %v2820 = vpop.f32.mrb[0].mxu0
    %2821 = vmatprep.mubr.f32.mxu0 %v234
    %2822 = vmatmul.mubr.f32.gmra.mrb[0].mxu0 %v233
    %v2823 = vpop.f32.mrb[0].mxu0
    %v2824 = vadd.f32 %v2519, %v2823
    %v2825 = vpop.f32.mrb[0].mxu0
    %2826 = vmatprep.mubr.f32.mxu0 %v252
    %2827 = vmatmul.mubr.f32.gmra.mrb[0].mxu0 %v251
    %v2828 = vpop.f32.mrb[0].mxu0
    %v2829 = vadd.f32 %v2524, %v2828
    %v2830 = vpop.f32.mrb[0].mxu0
    %2831 = vmatprep.mubr.f32.mxu0 %v270
    %2832 = vmatmul.mubr.f32.gmra.mrb[0].mxu0 %v269
    %v2833 = vpop.f32.mrb[0].mxu0
    %v2834 = vadd.f32 %v2529, %v2833
    %v2835 = vpop.f32.mrb[0].mxu0
    %2836 = vmatprep.mubr.f32.mxu0 %v288
    %2837 = vmatmul.mubr.f32.gmra.mrb[0].mxu0 %v287
    %v2838 = vpop.f32.mrb[0].mxu0
    %v2839 = vadd.f32 %v2534, %v2838
    %v2840 = vpop.f32.mrb[0].mxu0
    %2841 = vmatprep.mubr.f32.mxu0 %v306
    %2842 = vmatmul.mubr.f32.gmra.mrb[0].mxu0 %v305
    %v2843 = vpop.f32.mrb[0].mxu0
    %v2844 = vadd.f32 %v2539, %v2843
    %v2845 = vpop.f32.mrb[0].mxu0
    %2846 = vmatprep.mubr.f32.mxu0 %v324
    %2847 = vmatmul.mubr.f32.gmra.mrb[0].mxu0 %v323
    %v2848 = vpop.f32.mrb[0].mxu0
    %v2849 = vadd.f32 %v2544, %v2848
    %v2850 = vpop.f32.mrb[0].mxu0
    %2851 = vmatprep.mubr.f32.mxu0 %v342
    %2852 = vmatmul.mubr.f32.gmra.mrb[0].mxu0 %v341
    %v2853 = vpop.f32.mrb[0].mxu0
    %v2854 = vadd.f32 %v2549, %v2853
    %v2855 = vpop.f32.mrb[0].mxu0
    %2856 = vmatprep.mubr.f32.mxu0 %v360
    %2857 = vmatmul.mubr.f32.gmra.mrb[0].mxu0 %v359
    %v2858 = vpop.f32.mrb[0].mxu0
    %v2859 = vadd.f32 %v2554, %v2858
    %v2860 = vpop.f32.mrb[0].mxu0
    %2861 = vmatprep.mubr.f32.mxu0 %v378
    %2862 = vmatmul.mubr.f32.gmra.mrb[0].mxu0 %v377
    %v2863 = vpop.f32.mrb[0].mxu0
    %v2864 = vadd.f32 %v2559, %v2863
    %v2865 = vpop.f32.mrb[0].mxu0
    %2866 = vmatprep.mubr.f32.mxu0 %v396
    %2867 = vmatmul.mubr.f32.gmra.mrb[0].mxu0 %v395
    %v2868 = vpop.f32.mrb[0].mxu0
    %v2869 = vadd.f32 %v2564, %v2868
    %v2870 = vpop.f32.mrb[0].mxu0
    %2871 = vmatprep.mubr.f32.mxu0 %v414
    %2872 = vmatmul.mubr.f32.gmra.mrb[0].mxu0 %v413
    %v2873 = vpop.f32.mrb[0].mxu0
    %v2874 = vadd.f32 %v2569, %v2873
    %v2875 = vpop.f32.mrb[0].mxu0
    %2876 = vmatprep.mubr.f32.mxu0 %v432
    %2877 = vmatmul.mubr.f32.gmra.mrb[0].mxu0 %v431
    %v2878 = vpop.f32.mrb[0].mxu0
    %v2879 = vadd.f32 %v2574, %v2878
    %v2880 = vpop.f32.mrb[0].mxu0
    %2881 = vmatprep.mubr.f32.mxu0 %v450
    %2882 = vmatmul.mubr.f32.gmra.mrb[0].mxu0 %v449
    %v2883 = vpop.f32.mrb[0].mxu0
    %v2884 = vadd.f32 %v2579, %v2883
    %v2885 = vpop.f32.mrb[0].mxu0
    %2886 = vmatprep.mubr.f32.mxu0 %v468
    %2887 = vmatmul.mubr.f32.gmra.mrb[0].mxu0 %v467
    %v2888 = vpop.f32.mrb[0].mxu0
    %v2889 = vadd.f32 %v2584, %v2888
    %v2890 = vpop.f32.mrb[0].mxu0
    %2891 = vmatprep.mubr.f32.mxu0 %v486
    %2892 = vmatmul.mubr.f32.gmra.mrb[0].mxu0 %v485
    %v2893 = vpop.f32.mrb[0].mxu0
    %v2894 = vadd.f32 %v2589, %v2893
    %v2895 = vpop.f32.mrb[0].mxu0
    %2896 = vmatprep.mubr.f32.mxu0 %v504
    %2897 = vmatmul.mubr.f32.gmra.mrb[0].mxu0 %v503
    %v2898 = vpop.f32.mrb[0].mxu0
    %v2899 = vadd.f32 %v2594, %v2898
    %v2900 = vpop.f32.mrb[0].mxu0
    %2901 = vmatprep.mubr.f32.mxu0 %v522
    %2902 = vmatmul.mubr.f32.gmra.mrb[0].mxu0 %v521
    %v2903 = vpop.f32.mrb[0].mxu0
    %v2904 = vadd.f32 %v2599, %v2903
    %v2905 = vpop.f32.mrb[0].mxu0
    %2906 = vmatprep.mubr.f32.mxu0 %v540
    %2907 = vmatmul.mubr.f32.gmra.mrb[0].mxu0 %v539
    %v2908 = vpop.f32.mrb[0].mxu0
    %v2909 = vadd.f32 %v2604, %v2908
    %v2910 = vpop.f32.mrb[0].mxu0
    %2911 = vmatprep.mubr.f32.mxu0 %v558
    %2912 = vmatmul.mubr.f32.gmra.mrb[0].mxu0 %v557
    %v2913 = vpop.f32.mrb[0].mxu0
    %v2914 = vadd.f32 %v2609, %v2913
    %v2915 = vpop.f32.mrb[0].mxu0
    %2916 = vmatprep.mubr.f32.mxu0 %v576
    %2917 = vmatmul.mubr.f32.gmra.mrb[0].mxu0 %v575
    %v2918 = vpop.f32.mrb[0].mxu0
    %v2919 = vadd.f32 %v2614, %v2918
    %v2920 = vpop.f32.mrb[0].mxu0
    %2921 = vmatprep.mubr.f32.mxu0 %v594
    %2922 = vmatmul.mubr.f32.gmra.mrb[0].mxu0 %v593
    %v2923 = vpop.f32.mrb[0].mxu0
    %v2924 = vadd.f32 %v2619, %v2923
    %v2925 = vpop.f32.mrb[0].mxu0
    %2926 = vmatprep.mubr.f32.mxu0 %v612
    %2927 = vmatmul.mubr.f32.gmra.mrb[0].mxu0 %v611
    %v2928 = vpop.f32.mrb[0].mxu0
    %v2929 = vadd.f32 %v2624, %v2928
    %v2930 = vpop.f32.mrb[0].mxu0
    %2931 = vmatprep.mubr.f32.mxu0 %v630
    %2932 = vmatmul.mubr.f32.gmra.mrb[0].mxu0 %v629
    %v2933 = vpop.f32.mrb[0].mxu0
    %v2934 = vadd.f32 %v2629, %v2933
    %v2935 = vpop.f32.mrb[0].mxu0
    %2936 = vmatprep.mubr.f32.mxu0 %v648
    %2937 = vmatmul.mubr.f32.gmra.mrb[0].mxu0 %v647
    %v2938 = vpop.f32.mrb[0].mxu0
    %v2939 = vadd.f32 %v2634, %v2938
    %v2940 = vpop.f32.mrb[0].mxu0
    %2941 = vmatprep.mubr.f32.mxu0 %v666
    %2942 = vmatmul.mubr.f32.gmra.mrb[0].mxu0 %v665
    %v2943 = vpop.f32.mrb[0].mxu0
    %v2944 = vadd.f32 %v2639, %v2943
    %v2945 = vpop.f32.mrb[0].mxu0
    %2946 = vmatprep.mubr.f32.mxu0 %v684
    %2947 = vmatmul.mubr.f32.gmra.mrb[0].mxu0 %v683
    %v2948 = vpop.f32.mrb[0].mxu0
    %v2949 = vadd.f32 %v2644, %v2948
    %v2950 = vpop.f32.mrb[0].mxu0
    %2951 = vmatprep.mubr.f32.mxu0 %v702
    %2952 = vmatmul.mubr.f32.gmra.mrb[0].mxu0 %v701
    %v2953 = vpop.f32.mrb[0].mxu0
    %v2954 = vadd.f32 %v2649, %v2953
    %v2955 = vpop.f32.mrb[0].mxu0
    %2956 = vmatprep.mubr.f32.mxu0 %v720
    %2957 = vmatmul.mubr.f32.gmra.mrb[0].mxu0 %v719
    %v2958 = vpop.f32.mrb[0].mxu0
    %v2959 = vadd.f32 %v2654, %v2958
    %v2960 = vpop.f32.mrb[0].mxu0
    %2961 = vmatprep.mubr.f32.mxu0 %v738
    %2962 = vmatmul.mubr.f32.gmra.mrb[0].mxu0 %v737
    %v2963 = vpop.f32.mrb[0].mxu0
    %v2964 = vadd.f32 %v2659, %v2963
    %v2965 = vpop.f32.mrb[0].mxu0
    %2966 = vmatprep.mubr.f32.mxu0 %v756
    %2967 = vmatmul.mubr.f32.gmra.mrb[0].mxu0 %v755
    %v2968 = vpop.f32.mrb[0].mxu0
    %v2969 = vadd.f32 %v2664, %v2968
    %v2970 = vpop.f32.mrb[0].mxu0
    %2971 = vmatprep.mubr.f32.mxu0 %v774
    %2972 = vmatmul.mubr.f32.gmra.mrb[0].mxu0 %v773
    %v2973 = vpop.f32.mrb[0].mxu0
    %v2974 = vadd.f32 %v2669, %v2973
    %v2975 = vpop.f32.mrb[0].mxu0
    %2976 = vmatprep.mubr.f32.mxu0 %v792
    %2977 = vmatmul.mubr.f32.gmra.mrb[0].mxu0 %v791
    %v2978 = vpop.f32.mrb[0].mxu0
    %v2979 = vadd.f32 %v2674, %v2978
    %v2980 = vpop.f32.mrb[0].mxu0
    %2981 = vmatprep.mubr.f32.mxu0 %v810
    %2982 = vmatmul.mubr.f32.gmra.mrb[0].mxu0 %v809
    %v2983 = vpop.f32.mrb[0].mxu0
    %v2984 = vadd.f32 %v2679, %v2983
    %v2985 = vpop.f32.mrb[0].mxu0
    %2986 = vmatprep.mubr.f32.mxu0 %v828
    %2987 = vmatmul.mubr.f32.gmra.mrb[0].mxu0 %v827
    %v2988 = vpop.f32.mrb[0].mxu0
    %v2989 = vadd.f32 %v2684, %v2988
    %v2990 = vpop.f32.mrb[0].mxu0
    %2991 = vmatprep.mubr.f32.mxu0 %v846
    %2992 = vmatmul.mubr.f32.gmra.mrb[0].mxu0 %v845
    %v2993 = vpop.f32.mrb[0].mxu0
    %v2994 = vadd.f32 %v2689, %v2993
    %v2995 = vpop.f32.mrb[0].mxu0
    %2996 = vmatprep.mubr.f32.mxu0 %v864
    %2997 = vmatmul.mubr.f32.gmra.mrb[0].mxu0 %v863
    %v2998 = vpop.f32.mrb[0].mxu0
    %v2999 = vadd.f32 %v2694, %v2998
    %v3000 = vpop.f32.mrb[0].mxu0
    %3001 = vmatprep.mubr.f32.mxu0 %v882
    %3002 = vmatmul.mubr.f32.gmra.mrb[0].mxu0 %v881
    %v3003 = vpop.f32.mrb[0].mxu0
    %v3004 = vadd.f32 %v2699, %v3003
    %v3005 = vpop.f32.mrb[0].mxu0
    %3006 = vdwg.mxu0
    %3007 = vmatprep.subr.mxu0 0.0
    %3008 = vmatpush1.msra.mxu0 %v1081
    %3009 = vmatprep.subr.mxu0 0.0
    %3010 = vmatpush1.msra.mxu0 %v1082
    %3011 = vmatprep.subr.mxu0 0.0
    %3012 = vmatpush1.msra.mxu0 %v1083
    %3013 = vmatprep.subr.mxu0 0.0
    %3014 = vmatpush1.msra.mxu0 %v1084
    %3015 = vmatprep.subr.mxu0 0.0
    %3016 = vmatpush1.msra.mxu0 %v1085
    %3017 = vmatprep.subr.mxu0 0.0
    %3018 = vmatpush1.msra.mxu0 %v1086
    %3019 = vmatprep.subr.mxu0 0.0
    %3020 = vmatpush1.msra.mxu0 %v1087
    %3021 = vmatprep.subr.mxu0 0.0
    %3022 = vmatpush1.msra.mxu0 %v1088
    %3023 = vmatprep.subr.mxu0 0.0
    %3024 = vmatpush1.msra.mxu0 %v1089
    %3025 = vmatprep.subr.mxu0 0.0
    %3026 = vmatpush1.msra.mxu0 %v1090
    %3027 = vmatprep.subr.mxu0 0.0
    %3028 = vmatpush1.msra.mxu0 %v1091
    %3029 = vmatprep.subr.mxu0 0.0
    %3030 = vmatpush1.msra.mxu0 %v1092
    %3031 = vmatprep.subr.mxu0 0.0
    %3032 = vmatpush1.msra.mxu0 %v1093
    %3033 = vmatprep.subr.mxu0 0.0
    %3034 = vmatpush1.msra.mxu0 %v1094
    %3035 = vmatprep.subr.mxu0 0.0
    %3036 = vmatpush1.msra.mxu0 %v1095
    %3037 = vmatprep.subr.mxu0 0.0
    %3038 = vmatpush1.msra.mxu0 %v1096
    %3039 = vmatprep.subr.mxu0 0.0
    %3040 = vmatpush1.msra.mxu0 %v1097
    %3041 = vmatprep.subr.mxu0 0.0
    %3042 = vmatpush1.msra.mxu0 %v1098
    %3043 = vmatprep.subr.mxu0 0.0
    %3044 = vmatpush1.msra.mxu0 %v1099
    %3045 = vmatprep.subr.mxu0 0.0
    %3046 = vmatpush1.msra.mxu0 %v1100
    %3047 = vmatprep.subr.mxu0 0.0
    %3048 = vmatpush1.msra.mxu0 %v1101
    %3049 = vmatprep.subr.mxu0 0.0
    %3050 = vmatpush1.msra.mxu0 %v1102
    %3051 = vmatprep.subr.mxu0 0.0
    %3052 = vmatpush1.msra.mxu0 %v1103
    %3053 = vmatprep.subr.mxu0 0.0
    %3054 = vmatpush1.msra.mxu0 %v1104
    %3055 = vmatprep.subr.mxu0 0.0
    %3056 = vmatpush1.msra.mxu0 %v1105
    %3057 = vmatprep.subr.mxu0 0.0
    %3058 = vmatpush1.msra.mxu0 %v1106
    %3059 = vmatprep.subr.mxu0 0.0
    %3060 = vmatpush1.msra.mxu0 %v1107
    %3061 = vmatprep.subr.mxu0 0.0
    %3062 = vmatpush1.msra.mxu0 %v1108
    %3063 = vmatprep.subr.mxu0 0.0
    %3064 = vmatpush1.msra.mxu0 %v1109
    %3065 = vmatprep.subr.mxu0 0.0
    %3066 = vmatpush1.msra.mxu0 %v1110
    %3067 = vmatprep.subr.mxu0 0.0
    %3068 = vmatpush1.msra.mxu0 %v1111
    %3069 = vmatprep.subr.mxu0 0.0
    %3070 = vmatpush1.msra.mxu0 %v1112
    %3071 = vmatprep.mubr.f32.mxu0 %v38
    %3072 = vmatmul.mubr.f32.gmra.mrb[0].mxu0 %v37
    %v3073 = vpop.f32.mrb[0].mxu0
    %v3074 = vadd.f32 %v2769, %v3073
    %v3075 = vpop.f32.mrb[0].mxu0
    %3076 = vmatprep.mubr.f32.mxu0 %v56
    %3077 = vmatmul.mubr.f32.gmra.mrb[0].mxu0 %v55
    %v3078 = vpop.f32.mrb[0].mxu0
    %v3079 = vadd.f32 %v2774, %v3078
    %v3080 = vpop.f32.mrb[0].mxu0
    %3081 = vmatprep.mubr.f32.mxu0 %v74
    %3082 = vmatmul.mubr.f32.gmra.mrb[0].mxu0 %v73
    %v3083 = vpop.f32.mrb[0].mxu0
    %v3084 = vadd.f32 %v2779, %v3083
    %v3085 = vpop.f32.mrb[0].mxu0
    %3086 = vmatprep.mubr.f32.mxu0 %v92
    %3087 = vmatmul.mubr.f32.gmra.mrb[0].mxu0 %v91
    %v3088 = vpop.f32.mrb[0].mxu0
    %v3089 = vadd.f32 %v2784, %v3088
    %v3090 = vpop.f32.mrb[0].mxu0
    %3091 = vmatprep.mubr.f32.mxu0 %v110
    %3092 = vmatmul.mubr.f32.gmra.mrb[0].mxu0 %v109
    %v3093 = vpop.f32.mrb[0].mxu0
    %v3094 = vadd.f32 %v2789, %v3093
    %v3095 = vpop.f32.mrb[0].mxu0
    %3096 = vmatprep.mubr.f32.mxu0 %v128
    %3097 = vmatmul.mubr.f32.gmra.mrb[0].mxu0 %v127
    %v3098 = vpop.f32.mrb[0].mxu0
    %v3099 = vadd.f32 %v2794, %v3098
    %v3100 = vpop.f32.mrb[0].mxu0
    %3101 = vmatprep.mubr.f32.mxu0 %v146
    %3102 = vmatmul.mubr.f32.gmra.mrb[0].mxu0 %v145
    %v3103 = vpop.f32.mrb[0].mxu0
    %v3104 = vadd.f32 %v2799, %v3103
    %v3105 = vpop.f32.mrb[0].mxu0
    %3106 = vmatprep.mubr.f32.mxu0 %v164
    %3107 = vmatmul.mubr.f32.gmra.mrb[0].mxu0 %v163
    %v3108 = vpop.f32.mrb[0].mxu0
    %v3109 = vadd.f32 %v2804, %v3108
    %v3110 = vpop.f32.mrb[0].mxu0
    %3111 = vmatprep.mubr.f32.mxu0 %v182
    %3112 = vmatmul.mubr.f32.gmra.mrb[0].mxu0 %v181
    %v3113 = vpop.f32.mrb[0].mxu0
    %v3114 = vadd.f32 %v2809, %v3113
    %v3115 = vpop.f32.mrb[0].mxu0
    %3116 = vmatprep.mubr.f32.mxu0 %v200
    %3117 = vmatmul.mubr.f32.gmra.mrb[0].mxu0 %v199
    %v3118 = vpop.f32.mrb[0].mxu0
    %v3119 = vadd.f32 %v2814, %v3118
    %v3120 = vpop.f32.mrb[0].mxu0
    %3121 = vmatprep.mubr.f32.mxu0 %v218
    %3122 = vmatmul.mubr.f32.gmra.mrb[0].mxu0 %v217
    %v3123 = vpop.f32.mrb[0].mxu0
    %v3124 = vadd.f32 %v2819, %v3123
    %v3125 = vpop.f32.mrb[0].mxu0
    %3126 = vmatprep.mubr.f32.mxu0 %v236
    %3127 = vmatmul.mubr.f32.gmra.mrb[0].mxu0 %v235
    %v3128 = vpop.f32.mrb[0].mxu0
    %v3129 = vadd.f32 %v2824, %v3128
    %v3130 = vpop.f32.mrb[0].mxu0
    %3131 = vmatprep.mubr.f32.mxu0 %v254
    %3132 = vmatmul.mubr.f32.gmra.mrb[0].mxu0 %v253
    %v3133 = vpop.f32.mrb[0].mxu0
    %v3134 = vadd.f32 %v2829, %v3133
    %v3135 = vpop.f32.mrb[0].mxu0
    %3136 = vmatprep.mubr.f32.mxu0 %v272
    %3137 = vmatmul.mubr.f32.gmra.mrb[0].mxu0 %v271
    %v3138 = vpop.f32.mrb[0].mxu0
    %v3139 = vadd.f32 %v2834, %v3138
    %v3140 = vpop.f32.mrb[0].mxu0
    %3141 = vmatprep.mubr.f32.mxu0 %v290
    %3142 = vmatmul.mubr.f32.gmra.mrb[0].mxu0 %v289
    %v3143 = vpop.f32.mrb[0].mxu0
    %v3144 = vadd.f32 %v2839, %v3143
    %v3145 = vpop.f32.mrb[0].mxu0
    %3146 = vmatprep.mubr.f32.mxu0 %v308
    %3147 = vmatmul.mubr.f32.gmra.mrb[0].mxu0 %v307
    %v3148 = vpop.f32.mrb[0].mxu0
    %v3149 = vadd.f32 %v2844, %v3148
    %v3150 = vpop.f32.mrb[0].mxu0
    %3151 = vmatprep.mubr.f32.mxu0 %v326
    %3152 = vmatmul.mubr.f32.gmra.mrb[0].mxu0 %v325
    %v3153 = vpop.f32.mrb[0].mxu0
    %v3154 = vadd.f32 %v2849, %v3153
    %v3155 = vpop.f32.mrb[0].mxu0
    %3156 = vmatprep.mubr.f32.mxu0 %v344
    %3157 = vmatmul.mubr.f32.gmra.mrb[0].mxu0 %v343
    %v3158 = vpop.f32.mrb[0].mxu0
    %v3159 = vadd.f32 %v2854, %v3158
    %v3160 = vpop.f32.mrb[0].mxu0
    %3161 = vmatprep.mubr.f32.mxu0 %v362
    %3162 = vmatmul.mubr.f32.gmra.mrb[0].mxu0 %v361
    %v3163 = vpop.f32.mrb[0].mxu0
    %v3164 = vadd.f32 %v2859, %v3163
    %v3165 = vpop.f32.mrb[0].mxu0
    %3166 = vmatprep.mubr.f32.mxu0 %v380
    %3167 = vmatmul.mubr.f32.gmra.mrb[0].mxu0 %v379
    %v3168 = vpop.f32.mrb[0].mxu0
    %v3169 = vadd.f32 %v2864, %v3168
    %v3170 = vpop.f32.mrb[0].mxu0
    %3171 = vmatprep.mubr.f32.mxu0 %v398
    %3172 = vmatmul.mubr.f32.gmra.mrb[0].mxu0 %v397
    %v3173 = vpop.f32.mrb[0].mxu0
    %v3174 = vadd.f32 %v2869, %v3173
    %v3175 = vpop.f32.mrb[0].mxu0
    %3176 = vmatprep.mubr.f32.mxu0 %v416
    %3177 = vmatmul.mubr.f32.gmra.mrb[0].mxu0 %v415
    %v3178 = vpop.f32.mrb[0].mxu0
    %v3179 = vadd.f32 %v2874, %v3178
    %v3180 = vpop.f32.mrb[0].mxu0
    %3181 = vmatprep.mubr.f32.mxu0 %v434
    %3182 = vmatmul.mubr.f32.gmra.mrb[0].mxu0 %v433
    %v3183 = vpop.f32.mrb[0].mxu0
    %v3184 = vadd.f32 %v2879, %v3183
    %v3185 = vpop.f32.mrb[0].mxu0
    %3186 = vmatprep.mubr.f32.mxu0 %v452
    %3187 = vmatmul.mubr.f32.gmra.mrb[0].mxu0 %v451
    %v3188 = vpop.f32.mrb[0].mxu0
    %v3189 = vadd.f32 %v2884, %v3188
    %v3190 = vpop.f32.mrb[0].mxu0
    %3191 = vmatprep.mubr.f32.mxu0 %v470
    %3192 = vmatmul.mubr.f32.gmra.mrb[0].mxu0 %v469
    %v3193 = vpop.f32.mrb[0].mxu0
    %v3194 = vadd.f32 %v2889, %v3193
    %v3195 = vpop.f32.mrb[0].mxu0
    %3196 = vmatprep.mubr.f32.mxu0 %v488
    %3197 = vmatmul.mubr.f32.gmra.mrb[0].mxu0 %v487
    %v3198 = vpop.f32.mrb[0].mxu0
    %v3199 = vadd.f32 %v2894, %v3198
    %v3200 = vpop.f32.mrb[0].mxu0
    %3201 = vmatprep.mubr.f32.mxu0 %v506
    %3202 = vmatmul.mubr.f32.gmra.mrb[0].mxu0 %v505
    %v3203 = vpop.f32.mrb[0].mxu0
    %v3204 = vadd.f32 %v2899, %v3203
    %v3205 = vpop.f32.mrb[0].mxu0
    %3206 = vmatprep.mubr.f32.mxu0 %v524
    %3207 = vmatmul.mubr.f32.gmra.mrb[0].mxu0 %v523
    %v3208 = vpop.f32.mrb[0].mxu0
    %v3209 = vadd.f32 %v2904, %v3208
    %v3210 = vpop.f32.mrb[0].mxu0
    %3211 = vmatprep.mubr.f32.mxu0 %v542
    %3212 = vmatmul.mubr.f32.gmra.mrb[0].mxu0 %v541
    %v3213 = vpop.f32.mrb[0].mxu0
    %v3214 = vadd.f32 %v2909, %v3213
    %v3215 = vpop.f32.mrb[0].mxu0
    %3216 = vmatprep.mubr.f32.mxu0 %v560
    %3217 = vmatmul.mubr.f32.gmra.mrb[0].mxu0 %v559
    %v3218 = vpop.f32.mrb[0].mxu0
    %v3219 = vadd.f32 %v2914, %v3218
    %v3220 = vpop.f32.mrb[0].mxu0
    %3221 = vmatprep.mubr.f32.mxu0 %v578
    %3222 = vmatmul.mubr.f32.gmra.mrb[0].mxu0 %v577
    %v3223 = vpop.f32.mrb[0].mxu0
    %v3224 = vadd.f32 %v2919, %v3223
    %v3225 = vpop.f32.mrb[0].mxu0
    %3226 = vmatprep.mubr.f32.mxu0 %v596
    %3227 = vmatmul.mubr.f32.gmra.mrb[0].mxu0 %v595
    %v3228 = vpop.f32.mrb[0].mxu0
    %v3229 = vadd.f32 %v2924, %v3228
    %v3230 = vpop.f32.mrb[0].mxu0
    %3231 = vmatprep.mubr.f32.mxu0 %v614
    %3232 = vmatmul.mubr.f32.gmra.mrb[0].mxu0 %v613
    %v3233 = vpop.f32.mrb[0].mxu0
    %v3234 = vadd.f32 %v2929, %v3233
    %v3235 = vpop.f32.mrb[0].mxu0
    %3236 = vmatprep.mubr.f32.mxu0 %v632
    %3237 = vmatmul.mubr.f32.gmra.mrb[0].mxu0 %v631
    %v3238 = vpop.f32.mrb[0].mxu0
    %v3239 = vadd.f32 %v2934, %v3238
    %v3240 = vpop.f32.mrb[0].mxu0
    %3241 = vmatprep.mubr.f32.mxu0 %v650
    %3242 = vmatmul.mubr.f32.gmra.mrb[0].mxu0 %v649
    %v3243 = vpop.f32.mrb[0].mxu0
    %v3244 = vadd.f32 %v2939, %v3243
    %v3245 = vpop.f32.mrb[0].mxu0
    %3246 = vmatprep.mubr.f32.mxu0 %v668
    %3247 = vmatmul.mubr.f32.gmra.mrb[0].mxu0 %v667
    %v3248 = vpop.f32.mrb[0].mxu0
    %v3249 = vadd.f32 %v2944, %v3248
    %v3250 = vpop.f32.mrb[0].mxu0
    %3251 = vmatprep.mubr.f32.mxu0 %v686
    %3252 = vmatmul.mubr.f32.gmra.mrb[0].mxu0 %v685
    %v3253 = vpop.f32.mrb[0].mxu0
    %v3254 = vadd.f32 %v2949, %v3253
    %v3255 = vpop.f32.mrb[0].mxu0
    %3256 = vmatprep.mubr.f32.mxu0 %v704
    %3257 = vmatmul.mubr.f32.gmra.mrb[0].mxu0 %v703
    %v3258 = vpop.f32.mrb[0].mxu0
    %v3259 = vadd.f32 %v2954, %v3258
    %v3260 = vpop.f32.mrb[0].mxu0
    %3261 = vmatprep.mubr.f32.mxu0 %v722
    %3262 = vmatmul.mubr.f32.gmra.mrb[0].mxu0 %v721
    %v3263 = vpop.f32.mrb[0].mxu0
    %v3264 = vadd.f32 %v2959, %v3263
    %v3265 = vpop.f32.mrb[0].mxu0
    %3266 = vmatprep.mubr.f32.mxu0 %v740
    %3267 = vmatmul.mubr.f32.gmra.mrb[0].mxu0 %v739
    %v3268 = vpop.f32.mrb[0].mxu0
    %v3269 = vadd.f32 %v2964, %v3268
    %v3270 = vpop.f32.mrb[0].mxu0
    %3271 = vmatprep.mubr.f32.mxu0 %v758
    %3272 = vmatmul.mubr.f32.gmra.mrb[0].mxu0 %v757
    %v3273 = vpop.f32.mrb[0].mxu0
    %v3274 = vadd.f32 %v2969, %v3273
    %v3275 = vpop.f32.mrb[0].mxu0
    %3276 = vmatprep.mubr.f32.mxu0 %v776
    %3277 = vmatmul.mubr.f32.gmra.mrb[0].mxu0 %v775
    %v3278 = vpop.f32.mrb[0].mxu0
    %v3279 = vadd.f32 %v2974, %v3278
    %v3280 = vpop.f32.mrb[0].mxu0
    %3281 = vmatprep.mubr.f32.mxu0 %v794
    %3282 = vmatmul.mubr.f32.gmra.mrb[0].mxu0 %v793
    %v3283 = vpop.f32.mrb[0].mxu0
    %v3284 = vadd.f32 %v2979, %v3283
    %v3285 = vpop.f32.mrb[0].mxu0
    %3286 = vmatprep.mubr.f32.mxu0 %v812
    %3287 = vmatmul.mubr.f32.gmra.mrb[0].mxu0 %v811
    %v3288 = vpop.f32.mrb[0].mxu0
    %v3289 = vadd.f32 %v2984, %v3288
    %v3290 = vpop.f32.mrb[0].mxu0
    %3291 = vmatprep.mubr.f32.mxu0 %v830
    %3292 = vmatmul.mubr.f32.gmra.mrb[0].mxu0 %v829
    %v3293 = vpop.f32.mrb[0].mxu0
    %v3294 = vadd.f32 %v2989, %v3293
    %v3295 = vpop.f32.mrb[0].mxu0
    %3296 = vmatprep.mubr.f32.mxu0 %v848
    %3297 = vmatmul.mubr.f32.gmra.mrb[0].mxu0 %v847
    %v3298 = vpop.f32.mrb[0].mxu0
    %v3299 = vadd.f32 %v2994, %v3298
    %v3300 = vpop.f32.mrb[0].mxu0
    %3301 = vmatprep.mubr.f32.mxu0 %v866
    %3302 = vmatmul.mubr.f32.gmra.mrb[0].mxu0 %v865
    %v3303 = vpop.f32.mrb[0].mxu0
    %v3304 = vadd.f32 %v2999, %v3303
    %v3305 = vpop.f32.mrb[0].mxu0
    %3306 = vmatprep.mubr.f32.mxu0 %v884
    %3307 = vmatmul.mubr.f32.gmra.mrb[0].mxu0 %v883
    %v3308 = vpop.f32.mrb[0].mxu0
    %v3309 = vadd.f32 %v3004, %v3308
    %v3310 = vpop.f32.mrb[0].mxu0
    %3311 = vdwg.mxu0
    %3312 = vmatprep.subr.mxu0 0.0
    %3313 = vmatpush1.msra.mxu0 %v1113
    %3314 = vmatprep.subr.mxu0 0.0
    %3315 = vmatpush1.msra.mxu0 %v1114
    %3316 = vmatprep.subr.mxu0 0.0
    %3317 = vmatpush1.msra.mxu0 %v1115
    %3318 = vmatprep.subr.mxu0 0.0
    %3319 = vmatpush1.msra.mxu0 %v1116
    %3320 = vmatprep.subr.mxu0 0.0
    %3321 = vmatpush1.msra.mxu0 %v1117
    %3322 = vmatprep.subr.mxu0 0.0
    %3323 = vmatpush1.msra.mxu0 %v1118
    %3324 = vmatprep.subr.mxu0 0.0
    %3325 = vmatpush1.msra.mxu0 %v1119
    %3326 = vmatprep.subr.mxu0 0.0
    %3327 = vmatpush1.msra.mxu0 %v1120
    %3328 = vmatprep.subr.mxu0 0.0
    %3329 = vmatpush1.msra.mxu0 %v1121
    %3330 = vmatprep.subr.mxu0 0.0
    %3331 = vmatpush1.msra.mxu0 %v1122
    %3332 = vmatprep.subr.mxu0 0.0
    %3333 = vmatpush1.msra.mxu0 %v1123
    %3334 = vmatprep.subr.mxu0 0.0
    %3335 = vmatpush1.msra.mxu0 %v1124
    %3336 = vmatprep.subr.mxu0 0.0
    %3337 = vmatpush1.msra.mxu0 %v1125
    %3338 = vmatprep.subr.mxu0 0.0
    %3339 = vmatpush1.msra.mxu0 %v1126
    %3340 = vmatprep.subr.mxu0 0.0
    %3341 = vmatpush1.msra.mxu0 %v1127
    %3342 = vmatprep.subr.mxu0 0.0
    %3343 = vmatpush1.msra.mxu0 %v1128
    %3344 = vmatprep.subr.mxu0 0.0
    %3345 = vmatpush1.msra.mxu0 %v1129
    %3346 = vmatprep.subr.mxu0 0.0
    %3347 = vmatpush1.msra.mxu0 %v1130
    %3348 = vmatprep.subr.mxu0 0.0
    %3349 = vmatpush1.msra.mxu0 %v1131
    %3350 = vmatprep.subr.mxu0 0.0
    %3351 = vmatpush1.msra.mxu0 %v1132
    %3352 = vmatprep.subr.mxu0 0.0
    %3353 = vmatpush1.msra.mxu0 %v1133
    %3354 = vmatprep.subr.mxu0 0.0
    %3355 = vmatpush1.msra.mxu0 %v1134
    %3356 = vmatprep.subr.mxu0 0.0
    %3357 = vmatpush1.msra.mxu0 %v1135
    %3358 = vmatprep.subr.mxu0 0.0
    %3359 = vmatpush1.msra.mxu0 %v1136
    %3360 = vmatprep.subr.mxu0 0.0
    %3361 = vmatpush1.msra.mxu0 %v1137
    %3362 = vmatprep.subr.mxu0 0.0
    %3363 = vmatpush1.msra.mxu0 %v1138
    %3364 = vmatprep.subr.mxu0 0.0
    %3365 = vmatpush1.msra.mxu0 %v1139
    %3366 = vmatprep.subr.mxu0 0.0
    %3367 = vmatpush1.msra.mxu0 %v1140
    %3368 = vmatprep.subr.mxu0 0.0
    %3369 = vmatpush1.msra.mxu0 %v1141
    %3370 = vmatprep.subr.mxu0 0.0
    %3371 = vmatpush1.msra.mxu0 %v1142
    %3372 = vmatprep.subr.mxu0 0.0
    %3373 = vmatpush1.msra.mxu0 %v1143
    %3374 = vmatprep.subr.mxu0 0.0
    %3375 = vmatpush1.msra.mxu0 %v1144
    %3376 = vmatprep.mubr.f32.mxu0 %v40
    %3377 = vmatmul.mubr.f32.gmra.mrb[0].mxu0 %v39
    %v3378 = vpop.f32.mrb[0].mxu0
    %v3379 = vadd.f32 %v3074, %v3378
    %v3380 = vpop.f32.mrb[0].mxu0
    %3381 = vmatprep.mubr.f32.mxu0 %v58
    %3382 = vmatmul.mubr.f32.gmra.mrb[0].mxu0 %v57
    %v3383 = vpop.f32.mrb[0].mxu0
    %v3384 = vadd.f32 %v3079, %v3383
    %v3385 = vpop.f32.mrb[0].mxu0
    %3386 = vmatprep.mubr.f32.mxu0 %v76
    %3387 = vmatmul.mubr.f32.gmra.mrb[0].mxu0 %v75
    %v3388 = vpop.f32.mrb[0].mxu0
    %v3389 = vadd.f32 %v3084, %v3388
    %v3390 = vpop.f32.mrb[0].mxu0
    %3391 = vmatprep.mubr.f32.mxu0 %v94
    %3392 = vmatmul.mubr.f32.gmra.mrb[0].mxu0 %v93
    %v3393 = vpop.f32.mrb[0].mxu0
    %v3394 = vadd.f32 %v3089, %v3393
    %v3395 = vpop.f32.mrb[0].mxu0
    %3396 = vmatprep.mubr.f32.mxu0 %v112
    %3397 = vmatmul.mubr.f32.gmra.mrb[0].mxu0 %v111
    %v3398 = vpop.f32.mrb[0].mxu0
    %v3399 = vadd.f32 %v3094, %v3398
    %v3400 = vpop.f32.mrb[0].mxu0
    %3401 = vmatprep.mubr.f32.mxu0 %v130
    %3402 = vmatmul.mubr.f32.gmra.mrb[0].mxu0 %v129
    %v3403 = vpop.f32.mrb[0].mxu0
    %v3404 = vadd.f32 %v3099, %v3403
    %v3405 = vpop.f32.mrb[0].mxu0
    %3406 = vmatprep.mubr.f32.mxu0 %v148
    %3407 = vmatmul.mubr.f32.gmra.mrb[0].mxu0 %v147
    %v3408 = vpop.f32.mrb[0].mxu0
    %v3409 = vadd.f32 %v3104, %v3408
    %v3410 = vpop.f32.mrb[0].mxu0
    %3411 = vmatprep.mubr.f32.mxu0 %v166
    %3412 = vmatmul.mubr.f32.gmra.mrb[0].mxu0 %v165
    %v3413 = vpop.f32.mrb[0].mxu0
    %v3414 = vadd.f32 %v3109, %v3413
    %v3415 = vpop.f32.mrb[0].mxu0
    %3416 = vmatprep.mubr.f32.mxu0 %v184
    %3417 = vmatmul.mubr.f32.gmra.mrb[0].mxu0 %v183
    %v3418 = vpop.f32.mrb[0].mxu0
    %v3419 = vadd.f32 %v3114, %v3418
    %v3420 = vpop.f32.mrb[0].mxu0
    %3421 = vmatprep.mubr.f32.mxu0 %v202
    %3422 = vmatmul.mubr.f32.gmra.mrb[0].mxu0 %v201
    %v3423 = vpop.f32.mrb[0].mxu0
    %v3424 = vadd.f32 %v3119, %v3423
    %v3425 = vpop.f32.mrb[0].mxu0
    %3426 = vmatprep.mubr.f32.mxu0 %v220
    %3427 = vmatmul.mubr.f32.gmra.mrb[0].mxu0 %v219
    %v3428 = vpop.f32.mrb[0].mxu0
    %v3429 = vadd.f32 %v3124, %v3428
    %v3430 = vpop.f32.mrb[0].mxu0
    %3431 = vmatprep.mubr.f32.mxu0 %v238
    %3432 = vmatmul.mubr.f32.gmra.mrb[0].mxu0 %v237
    %v3433 = vpop.f32.mrb[0].mxu0
    %v3434 = vadd.f32 %v3129, %v3433
    %v3435 = vpop.f32.mrb[0].mxu0
    %3436 = vmatprep.mubr.f32.mxu0 %v256
    %3437 = vmatmul.mubr.f32.gmra.mrb[0].mxu0 %v255
    %v3438 = vpop.f32.mrb[0].mxu0
    %v3439 = vadd.f32 %v3134, %v3438
    %v3440 = vpop.f32.mrb[0].mxu0
    %3441 = vmatprep.mubr.f32.mxu0 %v274
    %3442 = vmatmul.mubr.f32.gmra.mrb[0].mxu0 %v273
    %v3443 = vpop.f32.mrb[0].mxu0
    %v3444 = vadd.f32 %v3139, %v3443
    %v3445 = vpop.f32.mrb[0].mxu0
    %3446 = vmatprep.mubr.f32.mxu0 %v292
    %3447 = vmatmul.mubr.f32.gmra.mrb[0].mxu0 %v291
    %v3448 = vpop.f32.mrb[0].mxu0
    %v3449 = vadd.f32 %v3144, %v3448
    %v3450 = vpop.f32.mrb[0].mxu0
    %3451 = vmatprep.mubr.f32.mxu0 %v310
    %3452 = vmatmul.mubr.f32.gmra.mrb[0].mxu0 %v309
    %v3453 = vpop.f32.mrb[0].mxu0
    %v3454 = vadd.f32 %v3149, %v3453
    %v3455 = vpop.f32.mrb[0].mxu0
    %3456 = vmatprep.mubr.f32.mxu0 %v328
    %3457 = vmatmul.mubr.f32.gmra.mrb[0].mxu0 %v327
    %v3458 = vpop.f32.mrb[0].mxu0
    %v3459 = vadd.f32 %v3154, %v3458
    %v3460 = vpop.f32.mrb[0].mxu0
    %3461 = vmatprep.mubr.f32.mxu0 %v346
    %3462 = vmatmul.mubr.f32.gmra.mrb[0].mxu0 %v345
    %v3463 = vpop.f32.mrb[0].mxu0
    %v3464 = vadd.f32 %v3159, %v3463
    %v3465 = vpop.f32.mrb[0].mxu0
    %3466 = vmatprep.mubr.f32.mxu0 %v364
    %3467 = vmatmul.mubr.f32.gmra.mrb[0].mxu0 %v363
    %v3468 = vpop.f32.mrb[0].mxu0
    %v3469 = vadd.f32 %v3164, %v3468
    %v3470 = vpop.f32.mrb[0].mxu0
    %3471 = vmatprep.mubr.f32.mxu0 %v382
    %3472 = vmatmul.mubr.f32.gmra.mrb[0].mxu0 %v381
    %v3473 = vpop.f32.mrb[0].mxu0
    %v3474 = vadd.f32 %v3169, %v3473
    %v3475 = vpop.f32.mrb[0].mxu0
    %3476 = vmatprep.mubr.f32.mxu0 %v400
    %3477 = vmatmul.mubr.f32.gmra.mrb[0].mxu0 %v399
    %v3478 = vpop.f32.mrb[0].mxu0
    %v3479 = vadd.f32 %v3174, %v3478
    %v3480 = vpop.f32.mrb[0].mxu0
    %3481 = vmatprep.mubr.f32.mxu0 %v418
    %3482 = vmatmul.mubr.f32.gmra.mrb[0].mxu0 %v417
    %v3483 = vpop.f32.mrb[0].mxu0
    %v3484 = vadd.f32 %v3179, %v3483
    %v3485 = vpop.f32.mrb[0].mxu0
    %3486 = vmatprep.mubr.f32.mxu0 %v436
    %3487 = vmatmul.mubr.f32.gmra.mrb[0].mxu0 %v435
    %v3488 = vpop.f32.mrb[0].mxu0
    %v3489 = vadd.f32 %v3184, %v3488
    %v3490 = vpop.f32.mrb[0].mxu0
    %3491 = vmatprep.mubr.f32.mxu0 %v454
    %3492 = vmatmul.mubr.f32.gmra.mrb[0].mxu0 %v453
    %v3493 = vpop.f32.mrb[0].mxu0
    %v3494 = vadd.f32 %v3189, %v3493
    %v3495 = vpop.f32.mrb[0].mxu0
    %3496 = vmatprep.mubr.f32.mxu0 %v472
    %3497 = vmatmul.mubr.f32.gmra.mrb[0].mxu0 %v471
    %v3498 = vpop.f32.mrb[0].mxu0
    %v3499 = vadd.f32 %v3194, %v3498
    %v3500 = vpop.f32.mrb[0].mxu0
    %3501 = vmatprep.mubr.f32.mxu0 %v490
    %3502 = vmatmul.mubr.f32.gmra.mrb[0].mxu0 %v489
    %v3503 = vpop.f32.mrb[0].mxu0
    %v3504 = vadd.f32 %v3199, %v3503
    %v3505 = vpop.f32.mrb[0].mxu0
    %3506 = vmatprep.mubr.f32.mxu0 %v508
    %3507 = vmatmul.mubr.f32.gmra.mrb[0].mxu0 %v507
    %v3508 = vpop.f32.mrb[0].mxu0
    %v3509 = vadd.f32 %v3204, %v3508
    %v3510 = vpop.f32.mrb[0].mxu0
    %3511 = vmatprep.mubr.f32.mxu0 %v526
    %3512 = vmatmul.mubr.f32.gmra.mrb[0].mxu0 %v525
    %v3513 = vpop.f32.mrb[0].mxu0
    %v3514 = vadd.f32 %v3209, %v3513
    %v3515 = vpop.f32.mrb[0].mxu0
    %3516 = vmatprep.mubr.f32.mxu0 %v544
    %3517 = vmatmul.mubr.f32.gmra.mrb[0].mxu0 %v543
    %v3518 = vpop.f32.mrb[0].mxu0
    %v3519 = vadd.f32 %v3214, %v3518
    %v3520 = vpop.f32.mrb[0].mxu0
    %3521 = vmatprep.mubr.f32.mxu0 %v562
    %3522 = vmatmul.mubr.f32.gmra.mrb[0].mxu0 %v561
    %v3523 = vpop.f32.mrb[0].mxu0
    %v3524 = vadd.f32 %v3219, %v3523
    %v3525 = vpop.f32.mrb[0].mxu0
    %3526 = vmatprep.mubr.f32.mxu0 %v580
    %3527 = vmatmul.mubr.f32.gmra.mrb[0].mxu0 %v579
    %v3528 = vpop.f32.mrb[0].mxu0
    %v3529 = vadd.f32 %v3224, %v3528
    %v3530 = vpop.f32.mrb[0].mxu0
    %3531 = vmatprep.mubr.f32.mxu0 %v598
    %3532 = vmatmul.mubr.f32.gmra.mrb[0].mxu0 %v597
    %v3533 = vpop.f32.mrb[0].mxu0
    %v3534 = vadd.f32 %v3229, %v3533
    %v3535 = vpop.f32.mrb[0].mxu0
    %3536 = vmatprep.mubr.f32.mxu0 %v616
    %3537 = vmatmul.mubr.f32.gmra.mrb[0].mxu0 %v615
    %v3538 = vpop.f32.mrb[0].mxu0
    %v3539 = vadd.f32 %v3234, %v3538
    %v3540 = vpop.f32.mrb[0].mxu0
    %3541 = vmatprep.mubr.f32.mxu0 %v634
    %3542 = vmatmul.mubr.f32.gmra.mrb[0].mxu0 %v633
    %v3543 = vpop.f32.mrb[0].mxu0
    %v3544 = vadd.f32 %v3239, %v3543
    %v3545 = vpop.f32.mrb[0].mxu0
    %3546 = vmatprep.mubr.f32.mxu0 %v652
    %3547 = vmatmul.mubr.f32.gmra.mrb[0].mxu0 %v651
    %v3548 = vpop.f32.mrb[0].mxu0
    %v3549 = vadd.f32 %v3244, %v3548
    %v3550 = vpop.f32.mrb[0].mxu0
    %3551 = vmatprep.mubr.f32.mxu0 %v670
    %3552 = vmatmul.mubr.f32.gmra.mrb[0].mxu0 %v669
    %v3553 = vpop.f32.mrb[0].mxu0
    %v3554 = vadd.f32 %v3249, %v3553
    %v3555 = vpop.f32.mrb[0].mxu0
    %3556 = vmatprep.mubr.f32.mxu0 %v688
    %3557 = vmatmul.mubr.f32.gmra.mrb[0].mxu0 %v687
    %v3558 = vpop.f32.mrb[0].mxu0
    %v3559 = vadd.f32 %v3254, %v3558
    %v3560 = vpop.f32.mrb[0].mxu0
    %3561 = vmatprep.mubr.f32.mxu0 %v706
    %3562 = vmatmul.mubr.f32.gmra.mrb[0].mxu0 %v705
    %v3563 = vpop.f32.mrb[0].mxu0
    %v3564 = vadd.f32 %v3259, %v3563
    %v3565 = vpop.f32.mrb[0].mxu0
    %3566 = vmatprep.mubr.f32.mxu0 %v724
    %3567 = vmatmul.mubr.f32.gmra.mrb[0].mxu0 %v723
    %v3568 = vpop.f32.mrb[0].mxu0
    %v3569 = vadd.f32 %v3264, %v3568
    %v3570 = vpop.f32.mrb[0].mxu0
    %3571 = vmatprep.mubr.f32.mxu0 %v742
    %3572 = vmatmul.mubr.f32.gmra.mrb[0].mxu0 %v741
    %v3573 = vpop.f32.mrb[0].mxu0
    %v3574 = vadd.f32 %v3269, %v3573
    %v3575 = vpop.f32.mrb[0].mxu0
    %3576 = vmatprep.mubr.f32.mxu0 %v760
    %3577 = vmatmul.mubr.f32.gmra.mrb[0].mxu0 %v759
    %v3578 = vpop.f32.mrb[0].mxu0
    %v3579 = vadd.f32 %v3274, %v3578
    %v3580 = vpop.f32.mrb[0].mxu0
    %3581 = vmatprep.mubr.f32.mxu0 %v778
    %3582 = vmatmul.mubr.f32.gmra.mrb[0].mxu0 %v777
    %v3583 = vpop.f32.mrb[0].mxu0
    %v3584 = vadd.f32 %v3279, %v3583
    %v3585 = vpop.f32.mrb[0].mxu0
    %3586 = vmatprep.mubr.f32.mxu0 %v796
    %3587 = vmatmul.mubr.f32.gmra.mrb[0].mxu0 %v795
    %v3588 = vpop.f32.mrb[0].mxu0
    %v3589 = vadd.f32 %v3284, %v3588
    %v3590 = vpop.f32.mrb[0].mxu0
    %3591 = vmatprep.mubr.f32.mxu0 %v814
    %3592 = vmatmul.mubr.f32.gmra.mrb[0].mxu0 %v813
    %v3593 = vpop.f32.mrb[0].mxu0
    %v3594 = vadd.f32 %v3289, %v3593
    %v3595 = vpop.f32.mrb[0].mxu0
    %3596 = vmatprep.mubr.f32.mxu0 %v832
    %3597 = vmatmul.mubr.f32.gmra.mrb[0].mxu0 %v831
    %v3598 = vpop.f32.mrb[0].mxu0
    %v3599 = vadd.f32 %v3294, %v3598
    %v3600 = vpop.f32.mrb[0].mxu0
    %3601 = vmatprep.mubr.f32.mxu0 %v850
    %3602 = vmatmul.mubr.f32.gmra.mrb[0].mxu0 %v849
    %v3603 = vpop.f32.mrb[0].mxu0
    %v3604 = vadd.f32 %v3299, %v3603
    %v3605 = vpop.f32.mrb[0].mxu0
    %3606 = vmatprep.mubr.f32.mxu0 %v868
    %3607 = vmatmul.mubr.f32.gmra.mrb[0].mxu0 %v867
    %v3608 = vpop.f32.mrb[0].mxu0
    %v3609 = vadd.f32 %v3304, %v3608
    %v3610 = vpop.f32.mrb[0].mxu0
    %3611 = vmatprep.mubr.f32.mxu0 %v886
    %3612 = vmatmul.mubr.f32.gmra.mrb[0].mxu0 %v885
    %v3613 = vpop.f32.mrb[0].mxu0
    %v3614 = vadd.f32 %v3309, %v3613
    %v3615 = vpop.f32.mrb[0].mxu0
    %3616 = vdwg.mxu0
    %3617 = vmatprep.subr.mxu0 0.0
    %3618 = vmatpush1.msra.mxu0 %v1145
    %3619 = vmatprep.subr.mxu0 0.0
    %3620 = vmatpush1.msra.mxu0 %v1146
    %3621 = vmatprep.subr.mxu0 0.0
    %3622 = vmatpush1.msra.mxu0 %v1147
    %3623 = vmatprep.subr.mxu0 0.0
    %3624 = vmatpush1.msra.mxu0 %v1148
    %3625 = vmatprep.subr.mxu0 0.0
    %3626 = vmatpush1.msra.mxu0 %v1149
    %3627 = vmatprep.subr.mxu0 0.0
    %3628 = vmatpush1.msra.mxu0 %v1150
    %3629 = vmatprep.subr.mxu0 0.0
    %3630 = vmatpush1.msra.mxu0 %v1151
    %3631 = vmatprep.subr.mxu0 0.0
    %3632 = vmatpush1.msra.mxu0 %v1152
    %3633 = vmatprep.subr.mxu0 0.0
    %3634 = vmatpush1.msra.mxu0 %v1153
    %3635 = vmatprep.subr.mxu0 0.0
    %3636 = vmatpush1.msra.mxu0 %v1154
    %3637 = vmatprep.subr.mxu0 0.0
    %3638 = vmatpush1.msra.mxu0 %v1155
    %3639 = vmatprep.subr.mxu0 0.0
    %3640 = vmatpush1.msra.mxu0 %v1156
    %3641 = vmatprep.subr.mxu0 0.0
    %3642 = vmatpush1.msra.mxu0 %v1157
    %3643 = vmatprep.subr.mxu0 0.0
    %3644 = vmatpush1.msra.mxu0 %v1158
    %3645 = vmatprep.subr.mxu0 0.0
    %3646 = vmatpush1.msra.mxu0 %v1159
    %3647 = vmatprep.subr.mxu0 0.0
    %3648 = vmatpush1.msra.mxu0 %v1160
    %3649 = vmatprep.subr.mxu0 0.0
    %3650 = vmatpush1.msra.mxu0 %v1161
    %3651 = vmatprep.subr.mxu0 0.0
    %3652 = vmatpush1.msra.mxu0 %v1162
    %3653 = vmatprep.subr.mxu0 0.0
    %3654 = vmatpush1.msra.mxu0 %v1163
    %3655 = vmatprep.subr.mxu0 0.0
    %3656 = vmatpush1.msra.mxu0 %v1164
    %3657 = vmatprep.subr.mxu0 0.0
    %3658 = vmatpush1.msra.mxu0 %v1165
    %3659 = vmatprep.subr.mxu0 0.0
    %3660 = vmatpush1.msra.mxu0 %v1166
    %3661 = vmatprep.subr.mxu0 0.0
    %3662 = vmatpush1.msra.mxu0 %v1167
    %3663 = vmatprep.subr.mxu0 0.0
    %3664 = vmatpush1.msra.mxu0 %v1168
    %3665 = vmatprep.subr.mxu0 0.0
    %3666 = vmatpush1.msra.mxu0 %v1169
    %3667 = vmatprep.subr.mxu0 0.0
    %3668 = vmatpush1.msra.mxu0 %v1170
    %3669 = vmatprep.subr.mxu0 0.0
    %3670 = vmatpush1.msra.mxu0 %v1171
    %3671 = vmatprep.subr.mxu0 0.0
    %3672 = vmatpush1.msra.mxu0 %v1172
    %3673 = vmatprep.subr.mxu0 0.0
    %3674 = vmatpush1.msra.mxu0 %v1173
    %3675 = vmatprep.subr.mxu0 0.0
    %3676 = vmatpush1.msra.mxu0 %v1174
    %3677 = vmatprep.subr.mxu0 0.0
    %3678 = vmatpush1.msra.mxu0 %v1175
    %3679 = vmatprep.subr.mxu0 0.0
    %3680 = vmatpush1.msra.mxu0 %v1176
    %3681 = vmatprep.mubr.f32.mxu0 %v42
    %3682 = vmatmul.mubr.f32.gmra.mrb[0].mxu0 %v41
    %v3683 = vpop.f32.mrb[0].mxu0
    %v3684 = vadd.f32 %v3379, %v3683
    %v3685 = vpop.f32.mrb[0].mxu0
    %3686 = vmatprep.mubr.f32.mxu0 %v60
    %3687 = vmatmul.mubr.f32.gmra.mrb[0].mxu0 %v59
    %v3688 = vpop.f32.mrb[0].mxu0
    %v3689 = vadd.f32 %v3384, %v3688
    %v3690 = vpop.f32.mrb[0].mxu0
    %3691 = vmatprep.mubr.f32.mxu0 %v78
    %3692 = vmatmul.mubr.f32.gmra.mrb[0].mxu0 %v77
    %v3693 = vpop.f32.mrb[0].mxu0
    %v3694 = vadd.f32 %v3389, %v3693
    %v3695 = vpop.f32.mrb[0].mxu0
    %3696 = vmatprep.mubr.f32.mxu0 %v96
    %3697 = vmatmul.mubr.f32.gmra.mrb[0].mxu0 %v95
    %v3698 = vpop.f32.mrb[0].mxu0
    %v3699 = vadd.f32 %v3394, %v3698
    %v3700 = vpop.f32.mrb[0].mxu0
    %3701 = vmatprep.mubr.f32.mxu0 %v114
    %3702 = vmatmul.mubr.f32.gmra.mrb[0].mxu0 %v113
    %v3703 = vpop.f32.mrb[0].mxu0
    %v3704 = vadd.f32 %v3399, %v3703
    %v3705 = vpop.f32.mrb[0].mxu0
    %3706 = vmatprep.mubr.f32.mxu0 %v132
    %3707 = vmatmul.mubr.f32.gmra.mrb[0].mxu0 %v131
    %v3708 = vpop.f32.mrb[0].mxu0
    %v3709 = vadd.f32 %v3404, %v3708
    %v3710 = vpop.f32.mrb[0].mxu0
    %3711 = vmatprep.mubr.f32.mxu0 %v150
    %3712 = vmatmul.mubr.f32.gmra.mrb[0].mxu0 %v149
    %v3713 = vpop.f32.mrb[0].mxu0
    %v3714 = vadd.f32 %v3409, %v3713
    %v3715 = vpop.f32.mrb[0].mxu0
    %3716 = vmatprep.mubr.f32.mxu0 %v168
    %3717 = vmatmul.mubr.f32.gmra.mrb[0].mxu0 %v167
    %v3718 = vpop.f32.mrb[0].mxu0
    %v3719 = vadd.f32 %v3414, %v3718
    %v3720 = vpop.f32.mrb[0].mxu0
    %3721 = vmatprep.mubr.f32.mxu0 %v186
    %3722 = vmatmul.mubr.f32.gmra.mrb[0].mxu0 %v185
    %v3723 = vpop.f32.mrb[0].mxu0
    %v3724 = vadd.f32 %v3419, %v3723
    %v3725 = vpop.f32.mrb[0].mxu0
    %3726 = vmatprep.mubr.f32.mxu0 %v204
    %3727 = vmatmul.mubr.f32.gmra.mrb[0].mxu0 %v203
    %v3728 = vpop.f32.mrb[0].mxu0
    %v3729 = vadd.f32 %v3424, %v3728
    %v3730 = vpop.f32.mrb[0].mxu0
    %3731 = vmatprep.mubr.f32.mxu0 %v222
    %3732 = vmatmul.mubr.f32.gmra.mrb[0].mxu0 %v221
    %v3733 = vpop.f32.mrb[0].mxu0
    %v3734 = vadd.f32 %v3429, %v3733
    %v3735 = vpop.f32.mrb[0].mxu0
    %3736 = vmatprep.mubr.f32.mxu0 %v240
    %3737 = vmatmul.mubr.f32.gmra.mrb[0].mxu0 %v239
    %v3738 = vpop.f32.mrb[0].mxu0
    %v3739 = vadd.f32 %v3434, %v3738
    %v3740 = vpop.f32.mrb[0].mxu0
    %3741 = vmatprep.mubr.f32.mxu0 %v258
    %3742 = vmatmul.mubr.f32.gmra.mrb[0].mxu0 %v257
    %v3743 = vpop.f32.mrb[0].mxu0
    %v3744 = vadd.f32 %v3439, %v3743
    %v3745 = vpop.f32.mrb[0].mxu0
    %3746 = vmatprep.mubr.f32.mxu0 %v276
    %3747 = vmatmul.mubr.f32.gmra.mrb[0].mxu0 %v275
    %v3748 = vpop.f32.mrb[0].mxu0
    %v3749 = vadd.f32 %v3444, %v3748
    %v3750 = vpop.f32.mrb[0].mxu0
    %3751 = vmatprep.mubr.f32.mxu0 %v294
    %3752 = vmatmul.mubr.f32.gmra.mrb[0].mxu0 %v293
    %v3753 = vpop.f32.mrb[0].mxu0
    %v3754 = vadd.f32 %v3449, %v3753
    %v3755 = vpop.f32.mrb[0].mxu0
    %3756 = vmatprep.mubr.f32.mxu0 %v312
    %3757 = vmatmul.mubr.f32.gmra.mrb[0].mxu0 %v311
    %v3758 = vpop.f32.mrb[0].mxu0
    %v3759 = vadd.f32 %v3454, %v3758
    %v3760 = vpop.f32.mrb[0].mxu0
    %3761 = vmatprep.mubr.f32.mxu0 %v330
    %3762 = vmatmul.mubr.f32.gmra.mrb[0].mxu0 %v329
    %v3763 = vpop.f32.mrb[0].mxu0
    %v3764 = vadd.f32 %v3459, %v3763
    %v3765 = vpop.f32.mrb[0].mxu0
    %3766 = vmatprep.mubr.f32.mxu0 %v348
    %3767 = vmatmul.mubr.f32.gmra.mrb[0].mxu0 %v347
    %v3768 = vpop.f32.mrb[0].mxu0
    %v3769 = vadd.f32 %v3464, %v3768
    %v3770 = vpop.f32.mrb[0].mxu0
    %3771 = vmatprep.mubr.f32.mxu0 %v366
    %3772 = vmatmul.mubr.f32.gmra.mrb[0].mxu0 %v365
    %v3773 = vpop.f32.mrb[0].mxu0
    %v3774 = vadd.f32 %v3469, %v3773
    %v3775 = vpop.f32.mrb[0].mxu0
    %3776 = vmatprep.mubr.f32.mxu0 %v384
    %3777 = vmatmul.mubr.f32.gmra.mrb[0].mxu0 %v383
    %v3778 = vpop.f32.mrb[0].mxu0
    %v3779 = vadd.f32 %v3474, %v3778
    %v3780 = vpop.f32.mrb[0].mxu0
    %3781 = vmatprep.mubr.f32.mxu0 %v402
    %3782 = vmatmul.mubr.f32.gmra.mrb[0].mxu0 %v401
    %v3783 = vpop.f32.mrb[0].mxu0
    %v3784 = vadd.f32 %v3479, %v3783
    %v3785 = vpop.f32.mrb[0].mxu0
    %3786 = vmatprep.mubr.f32.mxu0 %v420
    %3787 = vmatmul.mubr.f32.gmra.mrb[0].mxu0 %v419
    %v3788 = vpop.f32.mrb[0].mxu0
    %v3789 = vadd.f32 %v3484, %v3788
    %v3790 = vpop.f32.mrb[0].mxu0
    %3791 = vmatprep.mubr.f32.mxu0 %v438
    %3792 = vmatmul.mubr.f32.gmra.mrb[0].mxu0 %v437
    %v3793 = vpop.f32.mrb[0].mxu0
    %v3794 = vadd.f32 %v3489, %v3793
    %v3795 = vpop.f32.mrb[0].mxu0
    %3796 = vmatprep.mubr.f32.mxu0 %v456
    %3797 = vmatmul.mubr.f32.gmra.mrb[0].mxu0 %v455
    %v3798 = vpop.f32.mrb[0].mxu0
    %v3799 = vadd.f32 %v3494, %v3798
    %v3800 = vpop.f32.mrb[0].mxu0
    %3801 = vmatprep.mubr.f32.mxu0 %v474
    %3802 = vmatmul.mubr.f32.gmra.mrb[0].mxu0 %v473
    %v3803 = vpop.f32.mrb[0].mxu0
    %v3804 = vadd.f32 %v3499, %v3803
    %v3805 = vpop.f32.mrb[0].mxu0
    %3806 = vmatprep.mubr.f32.mxu0 %v492
    %3807 = vmatmul.mubr.f32.gmra.mrb[0].mxu0 %v491
    %v3808 = vpop.f32.mrb[0].mxu0
    %v3809 = vadd.f32 %v3504, %v3808
    %v3810 = vpop.f32.mrb[0].mxu0
    %3811 = vmatprep.mubr.f32.mxu0 %v510
    %3812 = vmatmul.mubr.f32.gmra.mrb[0].mxu0 %v509
    %v3813 = vpop.f32.mrb[0].mxu0
    %v3814 = vadd.f32 %v3509, %v3813
    %v3815 = vpop.f32.mrb[0].mxu0
    %3816 = vmatprep.mubr.f32.mxu0 %v528
    %3817 = vmatmul.mubr.f32.gmra.mrb[0].mxu0 %v527
    %v3818 = vpop.f32.mrb[0].mxu0
    %v3819 = vadd.f32 %v3514, %v3818
    %v3820 = vpop.f32.mrb[0].mxu0
    %3821 = vmatprep.mubr.f32.mxu0 %v546
    %3822 = vmatmul.mubr.f32.gmra.mrb[0].mxu0 %v545
    %v3823 = vpop.f32.mrb[0].mxu0
    %v3824 = vadd.f32 %v3519, %v3823
    %v3825 = vpop.f32.mrb[0].mxu0
    %3826 = vmatprep.mubr.f32.mxu0 %v564
    %3827 = vmatmul.mubr.f32.gmra.mrb[0].mxu0 %v563
    %v3828 = vpop.f32.mrb[0].mxu0
    %v3829 = vadd.f32 %v3524, %v3828
    %v3830 = vpop.f32.mrb[0].mxu0
    %3831 = vmatprep.mubr.f32.mxu0 %v582
    %3832 = vmatmul.mubr.f32.gmra.mrb[0].mxu0 %v581
    %v3833 = vpop.f32.mrb[0].mxu0
    %v3834 = vadd.f32 %v3529, %v3833
    %v3835 = vpop.f32.mrb[0].mxu0
    %3836 = vmatprep.mubr.f32.mxu0 %v600
    %3837 = vmatmul.mubr.f32.gmra.mrb[0].mxu0 %v599
    %v3838 = vpop.f32.mrb[0].mxu0
    %v3839 = vadd.f32 %v3534, %v3838
    %v3840 = vpop.f32.mrb[0].mxu0
    %3841 = vmatprep.mubr.f32.mxu0 %v618
    %3842 = vmatmul.mubr.f32.gmra.mrb[0].mxu0 %v617
    %v3843 = vpop.f32.mrb[0].mxu0
    %v3844 = vadd.f32 %v3539, %v3843
    %v3845 = vpop.f32.mrb[0].mxu0
    %3846 = vmatprep.mubr.f32.mxu0 %v636
    %3847 = vmatmul.mubr.f32.gmra.mrb[0].mxu0 %v635
    %v3848 = vpop.f32.mrb[0].mxu0
    %v3849 = vadd.f32 %v3544, %v3848
    %v3850 = vpop.f32.mrb[0].mxu0
    %3851 = vmatprep.mubr.f32.mxu0 %v654
    %3852 = vmatmul.mubr.f32.gmra.mrb[0].mxu0 %v653
    %v3853 = vpop.f32.mrb[0].mxu0
    %v3854 = vadd.f32 %v3549, %v3853
    %v3855 = vpop.f32.mrb[0].mxu0
    %3856 = vmatprep.mubr.f32.mxu0 %v672
    %3857 = vmatmul.mubr.f32.gmra.mrb[0].mxu0 %v671
    %v3858 = vpop.f32.mrb[0].mxu0
    %v3859 = vadd.f32 %v3554, %v3858
    %v3860 = vpop.f32.mrb[0].mxu0
    %3861 = vmatprep.mubr.f32.mxu0 %v690
    %3862 = vmatmul.mubr.f32.gmra.mrb[0].mxu0 %v689
    %v3863 = vpop.f32.mrb[0].mxu0
    %v3864 = vadd.f32 %v3559, %v3863
    %v3865 = vpop.f32.mrb[0].mxu0
    %3866 = vmatprep.mubr.f32.mxu0 %v708
    %3867 = vmatmul.mubr.f32.gmra.mrb[0].mxu0 %v707
    %v3868 = vpop.f32.mrb[0].mxu0
    %v3869 = vadd.f32 %v3564, %v3868
    %v3870 = vpop.f32.mrb[0].mxu0
    %3871 = vmatprep.mubr.f32.mxu0 %v726
    %3872 = vmatmul.mubr.f32.gmra.mrb[0].mxu0 %v725
    %v3873 = vpop.f32.mrb[0].mxu0
    %v3874 = vadd.f32 %v3569, %v3873
    %v3875 = vpop.f32.mrb[0].mxu0
    %3876 = vmatprep.mubr.f32.mxu0 %v744
    %3877 = vmatmul.mubr.f32.gmra.mrb[0].mxu0 %v743
    %v3878 = vpop.f32.mrb[0].mxu0
    %v3879 = vadd.f32 %v3574, %v3878
    %v3880 = vpop.f32.mrb[0].mxu0
    %3881 = vmatprep.mubr.f32.mxu0 %v762
    %3882 = vmatmul.mubr.f32.gmra.mrb[0].mxu0 %v761
    %v3883 = vpop.f32.mrb[0].mxu0
    %v3884 = vadd.f32 %v3579, %v3883
    %v3885 = vpop.f32.mrb[0].mxu0
    %3886 = vmatprep.mubr.f32.mxu0 %v780
    %3887 = vmatmul.mubr.f32.gmra.mrb[0].mxu0 %v779
    %v3888 = vpop.f32.mrb[0].mxu0
    %v3889 = vadd.f32 %v3584, %v3888
    %v3890 = vpop.f32.mrb[0].mxu0
    %3891 = vmatprep.mubr.f32.mxu0 %v798
    %3892 = vmatmul.mubr.f32.gmra.mrb[0].mxu0 %v797
    %v3893 = vpop.f32.mrb[0].mxu0
    %v3894 = vadd.f32 %v3589, %v3893
    %v3895 = vpop.f32.mrb[0].mxu0
    %3896 = vmatprep.mubr.f32.mxu0 %v816
    %3897 = vmatmul.mubr.f32.gmra.mrb[0].mxu0 %v815
    %v3898 = vpop.f32.mrb[0].mxu0
    %v3899 = vadd.f32 %v3594, %v3898
    %v3900 = vpop.f32.mrb[0].mxu0
    %3901 = vmatprep.mubr.f32.mxu0 %v834
    %3902 = vmatmul.mubr.f32.gmra.mrb[0].mxu0 %v833
    %v3903 = vpop.f32.mrb[0].mxu0
    %v3904 = vadd.f32 %v3599, %v3903
    %v3905 = vpop.f32.mrb[0].mxu0
    %3906 = vmatprep.mubr.f32.mxu0 %v852
    %3907 = vmatmul.mubr.f32.gmra.mrb[0].mxu0 %v851
    %v3908 = vpop.f32.mrb[0].mxu0
    %v3909 = vadd.f32 %v3604, %v3908
    %v3910 = vpop.f32.mrb[0].mxu0
    %3911 = vmatprep.mubr.f32.mxu0 %v870
    %3912 = vmatmul.mubr.f32.gmra.mrb[0].mxu0 %v869
    %v3913 = vpop.f32.mrb[0].mxu0
    %v3914 = vadd.f32 %v3609, %v3913
    %v3915 = vpop.f32.mrb[0].mxu0
    %3916 = vmatprep.mubr.f32.mxu0 %v888
    %3917 = vmatmul.mubr.f32.gmra.mrb[0].mxu0 %v887
    %v3918 = vpop.f32.mrb[0].mxu0
    %v3919 = vadd.f32 %v3614, %v3918
    %v3920 = vpop.f32.mrb[0].mxu0
    %3921 = vdwg.mxu0
    %vm3922 = vcmask 400384
    %3923 = vst.msk [vmem:[%s2] sm:$0xff] %vm3922, %v3684
    %3924 = vst.msk [vmem:[%s2 + $0x8] sm:$0xff] %vm3922, %v3689
    %3925 = vst.msk [vmem:[%s2 + $0x10] sm:$0xff] %vm3922, %v3694
    %3926 = vst.msk [vmem:[%s2 + $0x18] sm:$0xff] %vm3922, %v3699
    %3927 = vst.msk [vmem:[%s2 + $0x20] sm:$0xff] %vm3922, %v3704
    %3928 = vst.msk [vmem:[%s2 + $0x28] sm:$0xff] %vm3922, %v3709
    %3929 = vst.msk [vmem:[%s2 + $0x30] sm:$0xff] %vm3922, %v3714
    %3930 = vst.msk [vmem:[%s2 + $0x38] sm:$0xff] %vm3922, %v3719
    %3931 = vst.msk [vmem:[%s2 + $0x40] sm:$0xff] %vm3922, %v3724
    %3932 = vst.msk [vmem:[%s2 + $0x48] sm:$0xff] %vm3922, %v3729
    %3933 = vst.msk [vmem:[%s2 + $0x50] sm:$0xff] %vm3922, %v3734
    %3934 = vst.msk [vmem:[%s2 + $0x58] sm:$0xff] %vm3922, %v3739
    %3935 = vst.msk [vmem:[%s2 + $0x60] sm:$0xff] %vm3922, %v3744
    %3936 = vst.msk [vmem:[%s2 + $0x68] sm:$0xff] %vm3922, %v3749
    %3937 = vst.msk [vmem:[%s2 + $0x70] sm:$0xff] %vm3922, %v3754
    %3938 = vst.msk [vmem:[%s2 + $0x78] sm:$0xff] %vm3922, %v3759
    %3939 = vst.msk [vmem:[%s2 + $0x80] sm:$0xff] %vm3922, %v3764
    %3940 = vst.msk [vmem:[%s2 + $0x88] sm:$0xff] %vm3922, %v3769
    %3941 = vst.msk [vmem:[%s2 + $0x90] sm:$0xff] %vm3922, %v3774
    %3942 = vst.msk [vmem:[%s2 + $0x98] sm:$0xff] %vm3922, %v3779
    %3943 = vst.msk [vmem:[%s2 + $0xa0] sm:$0xff] %vm3922, %v3784
    %3944 = vst.msk [vmem:[%s2 + $0xa8] sm:$0xff] %vm3922, %v3789
    %3945 = vst.msk [vmem:[%s2 + $0xb0] sm:$0xff] %vm3922, %v3794
    %3946 = vst.msk [vmem:[%s2 + $0xb8] sm:$0xff] %vm3922, %v3799
    %3947 = vst.msk [vmem:[%s2 + $0xc0] sm:$0xff] %vm3922, %v3804
    %3948 = vst.msk [vmem:[%s2 + $0xc8] sm:$0xff] %vm3922, %v3809
    %3949 = vst.msk [vmem:[%s2 + $0xd0] sm:$0xff] %vm3922, %v3814
    %3950 = vst.msk [vmem:[%s2 + $0xd8] sm:$0xff] %vm3922, %v3819
    %3951 = vst.msk [vmem:[%s2 + $0xe0] sm:$0xff] %vm3922, %v3824
    %3952 = vst.msk [vmem:[%s2 + $0xe8] sm:$0xff] %vm3922, %v3829
    %3953 = vst.msk [vmem:[%s2 + $0xf0] sm:$0xff] %vm3922, %v3834
    %3954 = vst.msk [vmem:[%s2 + $0xf8] sm:$0xff] %vm3922, %v3839
    %3955 = vst.msk [vmem:[%s2 + $0x100] sm:$0xff] %vm3922, %v3844
    %3956 = vst.msk [vmem:[%s2 + $0x108] sm:$0xff] %vm3922, %v3849
    %3957 = vst.msk [vmem:[%s2 + $0x110] sm:$0xff] %vm3922, %v3854
    %3958 = vst.msk [vmem:[%s2 + $0x118] sm:$0xff] %vm3922, %v3859
    %3959 = vst.msk [vmem:[%s2 + $0x120] sm:$0xff] %vm3922, %v3864
    %3960 = vst.msk [vmem:[%s2 + $0x128] sm:$0xff] %vm3922, %v3869
    %3961 = vst.msk [vmem:[%s2 + $0x130] sm:$0xff] %vm3922, %v3874
    %3962 = vst.msk [vmem:[%s2 + $0x138] sm:$0xff] %vm3922, %v3879
    %3963 = vst.msk [vmem:[%s2 + $0x140] sm:$0xff] %vm3922, %v3884
    %3964 = vst.msk [vmem:[%s2 + $0x148] sm:$0xff] %vm3922, %v3889
    %3965 = vst.msk [vmem:[%s2 + $0x150] sm:$0xff] %vm3922, %v3894
    %3966 = vst.msk [vmem:[%s2 + $0x158] sm:$0xff] %vm3922, %v3899
    %3967 = vst.msk [vmem:[%s2 + $0x160] sm:$0xff] %vm3922, %v3904
    %3968 = vst.msk [vmem:[%s2 + $0x168] sm:$0xff] %vm3922, %v3909
    %3969 = vst.msk [vmem:[%s2 + $0x170] sm:$0xff] %vm3922, %v3914
    %3970 = vst.msk [vmem:[%s2 + $0x178] sm:$0xff] %vm3922, %v3919
    // Predicated region
    $region14: #{tpu_custom_call.1} parent=1 // pred_check
      _
    $region15: #{tpu_custom_call.1} parent=1 // pred_check_branch
      %3972 = sbr.rel (0) target = $region17
    $region16: #{tpu_custom_call.1} parent=1 // pred_region
      _
    $region17: #{tpu_custom_call.1} parent=1 // pred_fallthru
      _
    // Predicated region
    $region18: #{tpu_custom_call.1} parent=1 // pred_check
      _
    $region19: #{tpu_custom_call.1} parent=1 // pred_check_branch
      %3974 = sbr.rel (0) target = $region21
    $region20: #{tpu_custom_call.1} parent=1 // pred_region
      _
    $region21: #{tpu_custom_call.1} parent=1 // pred_fallthru
      _
    %3975 = vsyncpa [#allocation3], 1

</llo_original>
